<compile_context>
chip_gen: v6e
topology: v6e:2x2x1
jax: 0.10.0
libtpu: 0.0.40
codegen_flags: <defaults>
</compile_context>

<pallas_src>
import functools
import math

import jax
import jax.numpy as jnp
import numpy as np
from jax.experimental import pallas as pl
from jax.experimental.pallas import tpu as pltpu


# Assemble the whole output block and store it once per grid step as long as
# the number of (channel, kh) pieces stays modest; beyond that, one lane-dense
# store per channel.
_SINGLE_STORE_MAX_PIECES = 32


def _unfold_kernel(x_ref, r_ref, cm_ref, o_ref, *, C, K, H, W, L_w, row_tile,
                   compute_dtype, batch_first_matmul, single_store):
    """One (batch, row-tile) grid step.

    x_ref : (1, C, H, W)          raw (unpadded) image for this batch element
    r_ref : (1, K*row_tile, H)    one-hot row selection for this row tile:
                                  row (kh*row_tile + il) selects image row
                                  (t*row_tile + il)*S + kh - pad_h  (all-zero if OOR)
    cm_ref: (W, K*L_w)            one-hot column selection:
                                  col (j*K + kw) selects image col j*S + kw - pad_w
    o_ref : (1, row_tile, L_w, C*K*K)   output block in the module's final layout
    """
    cm = cm_ref[...]                       # (W, K*L_w)
    r_blk = r_ref[0]                       # (K*row_tile, H)

    if batch_first_matmul:
        # All channels, all kw taps in one MXU pass: (C*H, W) @ (W, K*L_w).
        xflat = x_ref[0].astype(compute_dtype).reshape(C * H, W)
        cols_all = jnp.dot(xflat, cm, preferred_element_type=compute_dtype)

        def cols_of(c):
            return cols_all[c * H:(c + 1) * H, :]          # (H, K*L_w), H-aligned
    else:
        def cols_of(c):
            xc = x_ref[0, c].astype(compute_dtype)         # (H, W)
            return jnp.dot(xc, cm, preferred_element_type=compute_dtype)

    def channel_pieces(c):
        # All kh taps for every output row of this tile: one MXU pass.
        sub = jnp.dot(r_blk, cols_of(c),
                      preferred_element_type=compute_dtype)  # (K*row_tile, K*L_w)
        # Lane split (j*K+kw) -> (j, kw); rows stay (kh*row_tile + il).
        sub3 = sub.reshape(K * row_tile, L_w, K)
        # Leading-dim slices: one (row_tile, L_w, K) piece per kh.
        return [sub3[kh * row_tile:(kh + 1) * row_tile] for kh in range(K)]

    if single_store:
        # Concatenating pieces in (c, kh) order puts lane kw innermost ->
        # exact (c*K*K + kh*K + kw) ordering; one dense store per grid step.
        pieces = []
        for c in range(C):
            pieces.extend(channel_pieces(c))
        o_ref[0] = jnp.concatenate(pieces, axis=-1).astype(o_ref.dtype)
    else:
        for c in range(C):
            chan = jnp.concatenate(channel_pieces(c), axis=-1)   # (row_tile, L_w, K*K)
            o_ref[0, :, :, c * K * K:(c + 1) * K * K] = chan.astype(o_ref.dtype)


def _geometry(H, W, K, overlapping):
    """Same padding rule as the PyTorch module (static host-side arithmetic)."""
    S = K - overlapping
    rem_h, rem_w = H % S, W % S
    pad_h = math.ceil(((K - S) if rem_h == 0 else (K - rem_h)) / 2)
    pad_w = math.ceil(((K - S) if rem_w == 0 else (K - rem_w)) / 2)
    Hp, Wp = H + 2 * pad_h, W + 2 * pad_w
    L_h = (Hp - K) // S + 1
    L_w = (Wp - K) // S + 1
    return S, pad_h, pad_w, L_h, L_w


def _vmem_limit_bytes():
    """Generation-aware VMEM limit: headroom under v7x's 64 MiB, most of the
    128 MiB on v5e/v6e."""
    try:
        cap = int(pltpu.get_tpu_info().vmem_capacity_bytes)
    except Exception:
        cap = 64 * 1024 * 1024                       # conservative (v7x-sized) fallback
    if cap >= 96 * 1024 * 1024:
        return cap - 16 * 1024 * 1024                # 128 MiB parts -> 112 MiB
    return max(cap - 12 * 1024 * 1024, 32 * 1024 * 1024)   # 64 MiB parts -> 52 MiB


def _pick_row_tile(L_h, L_w, lanes, C, H, W, K, itemsize, budget_bytes,
                   force_split):
    """Largest divisor of L_h whose full per-step footprint (double-buffered
    blocks + live lane-padded intermediates) fits the budget.  If force_split,
    cap at L_h//2 so the grid has >= 2 steps (two v7x TensorCores)."""
    single_store = (C * K <= _SINGLE_STORE_MAX_PIECES)

    def footprint(t):
        out_blk = 2 * t * L_w * lanes * itemsize          # double-buffered output block
        x_blk = 2 * C * H * W * itemsize                  # double-buffered input block
        r_blk = 2 * K * t * H * itemsize
        cm_blk = 2 * W * K * L_w * itemsize
        cols = C * H * K * L_w * itemsize                 # batched first-matmul result
        sub = K * t * K * L_w * itemsize                  # one channel's second matmul
        n_pieces = C * K if single_store else K
        pieces = n_pieces * t * L_w * 128 * itemsize      # lane-padded (kw -> 128 lanes)
        assembled = t * L_w * lanes * itemsize
        return out_blk + x_blk + r_blk + cm_blk + cols + sub + pieces + assembled

    max_tile = L_h // 2 if (force_split and L_h > 1) else L_h
    best = 1
    for d in range(1, L_h + 1):
        if L_h % d == 0 and d <= max_tile and footprint(d) <= budget_bytes:
            best = max(best, d)
    return best


def _selection_matrices(H, W, K, S, pad_h, pad_w, L_h, L_w, row_tile):
    """Exact one-hot selection matrices with the zero padding folded in:
    out-of-range source rows/cols become all-zero selection rows -> exact 0."""
    n_tiles = L_h // row_tile
    R = np.zeros((n_tiles, K * row_tile, H), dtype=np.float32)
    for i in range(L_h):
        t, il = divmod(i, row_tile)
        for kh in range(K):
            h = i * S + kh - pad_h
            if 0 <= h < H:
                R[t, kh * row_tile + il, h] = 1.0
    Cm = np.zeros((W, K * L_w), dtype=np.float32)
    for j in range(L_w):
        for kw in range(K):
            w = j * S + kw - pad_w
            if 0 <= w < W:
                Cm[w, j * K + kw] = 1.0
    return R, Cm


@functools.partial(jax.jit, static_argnames=("kernel_size", "overlapping"))
def split_with_overlapping(x, *, kernel_size, overlapping):
    K = kernel_size
    B, C, H, W = x.shape
    S, pad_h, pad_w, L_h, L_w = _geometry(H, W, K, overlapping)
    lanes = C * K * K

    # One-hot gather is exact in any float dtype -> accumulate in the input dtype.
    compute_dtype = x.dtype if jnp.issubdtype(x.dtype, jnp.floating) else jnp.float32
    itemsize = jnp.dtype(compute_dtype).itemsize

    vmem_limit = _vmem_limit_bytes()
    row_tile = _pick_row_tile(L_h, L_w, lanes, C, H, W, K, itemsize,
                              budget_bytes=int(vmem_limit * 0.7),
                              force_split=(B == 1))
    n_tiles = L_h // row_tile
    single_store = (C * K <= _SINGLE_STORE_MAX_PIECES)

    # Batch the first matmul over channels only when each (H, W) plane stays
    # sublane-tile aligned after collapsing (C, H) -> C*H.
    sublane = 8 * max(1, 4 // itemsize)
    batch_first_matmul = (H % sublane == 0) and C > 1

    R_np, Cm_np = _selection_matrices(H, W, K, S, pad_h, pad_w, L_h, L_w,
                                      row_tile)
    R = jnp.asarray(R_np, dtype=compute_dtype)
    Cm = jnp.asarray(Cm_np, dtype=compute_dtype)

    kern = functools.partial(
        _unfold_kernel, C=C, K=K, H=H, W=W, L_w=L_w, row_tile=row_tile,
        compute_dtype=compute_dtype, batch_first_matmul=batch_first_matmul,
        single_store=single_store)

    out = pl.pallas_call(
        kern,
        out_shape=jax.ShapeDtypeStruct((B, L_h, L_w, lanes), x.dtype),
        grid=(B, n_tiles),
        in_specs=[
            # Raw (unpadded) image; constant in t so it is fetched once per b.
            pl.BlockSpec((1, C, H, W), lambda b, t: (b, 0, 0, 0)),
            # Row-selection rows for this row tile only; block's last two dims
            # equal the full array dims -> no sublane-tile divisibility hazard.
            pl.BlockSpec((1, K * row_tile, H), lambda b, t: (t, 0, 0)),
            # Column-selection matrix, shared by every grid step.
            pl.BlockSpec((W, K * L_w), lambda b, t: (0, 0)),
        ],
        out_specs=pl.BlockSpec((1, row_tile, L_w, lanes),
                               lambda b, t: (b, t, 0, 0)),
        compiler_params=pltpu.CompilerParams(
            dimension_semantics=("parallel", "parallel"),
            vmem_limit_bytes=vmem_limit),
    )(x, R, Cm)

    # (B, L_h, L_w, C*K*K) -> (B, L, C*K*K) is a contiguous (free) reshape;
    # no transpose, matching F.unfold(...).transpose(1, 2) exactly.
    return out.reshape(B, L_h * L_w, lanes)


def _reference_unfold(x, kernel_size, overlapping):
    """Pure-numpy reference reproducing the PyTorch forward."""
    K = kernel_size
    S = K - overlapping
    x = np.asarray(x)
    B, C, H, W = x.shape
    rem_h, rem_w = H % S, W % S
    pad_h = math.ceil(((K - S) if rem_h == 0 else (K - rem_h)) / 2)
    pad_w = math.ceil(((K - S) if rem_w == 0 else (K - rem_w)) / 2)
    xp = np.pad(x, ((0, 0), (0, 0), (pad_h, pad_h), (pad_w, pad_w)))
    Hp, Wp = H + 2 * pad_h, W + 2 * pad_w
    L_h = (Hp - K) // S + 1
    L_w = (Wp - K) // S + 1
    out = np.zeros((B, L_h * L_w, C * K * K), dtype=x.dtype)
    for b in range(B):
        for i in range(L_h):
            for j in range(L_w):
                patch = xp[b, :, i * S:i * S + K, j * S:j * S + K]
                out[b, i * L_w + j] = patch.reshape(-1)   # (c, kh, kw) order
    return out


if __name__ == "__main__":
    kernel_size = 4
    overlapping = 2
    B, C, H, W = 2, 4, 16, 16

    key = jax.random.PRNGKey(0)
    x = jax.random.normal(key, (B, C, H, W), dtype=jnp.float32)

    y = split_with_overlapping(x, kernel_size=kernel_size,
                               overlapping=overlapping)
    y = jax.block_until_ready(y)

    ref = _reference_unfold(x, kernel_size, overlapping)
    assert y.shape == ref.shape, (y.shape, ref.shape)
    np.testing.assert_allclose(np.asarray(y), ref, rtol=1e-6, atol=1e-6)

    print("KERNEL_OK")
</pallas_src>

<mosaic_0001>
module attributes {stable_mosaic.version = 11 : i64} {
  func.func @_unfold_kernel(%arg0: i32, %arg1: i32, %arg2: memref<1x4x16x16xf32, #tpu.memory_space<vmem>>, %arg3: memref<1x32x16xf32, #tpu.memory_space<vmem>>, %arg4: memref<16x32xf32, #tpu.memory_space<vmem>>, %arg5: memref<1x8x8x64xf32, #tpu.memory_space<vmem>>) attributes {dimension_semantics = [#tpu.dimension_semantics<parallel>, #tpu.dimension_semantics<parallel>], iteration_bounds = array<i64: 2, 1>, scalar_prefetch = 0 : i64, scratch_operands = 0 : i64, tpu.core_type = #tpu.core_type<tc>, window_params = [{transform_indices = @transform_0, window_bounds = array<i64: 1, 4, 16, 16>}, {transform_indices = @transform_1, window_bounds = array<i64: 1, 32, 16>}, {pipeline_mode = #tpu.pipeline_mode<synchronous>, transform_indices = @transform_2, window_bounds = array<i64: 16, 32>}, {transform_indices = @transform_3, window_bounds = array<i64: 1, 8, 8, 64>}]} {
    %c0 = arith.constant 0 : index
    %c0_0 = arith.constant 0 : index
    %0 = vector.load %arg4[%c0, %c0_0] : memref<16x32xf32, #tpu.memory_space<vmem>>, vector<16x32xf32>
    %c0_1 = arith.constant 0 : index
    %c0_2 = arith.constant 0 : index
    %c0_3 = arith.constant 0 : index
    %1 = vector.load %arg3[%c0_1, %c0_2, %c0_3] : memref<1x32x16xf32, #tpu.memory_space<vmem>>, vector<1x32x16xf32>
    %2 = vector.shape_cast %1 : vector<1x32x16xf32> to vector<32x16xf32>
    %c0_4 = arith.constant 0 : index
    %c0_5 = arith.constant 0 : index
    %c0_6 = arith.constant 0 : index
    %c0_7 = arith.constant 0 : index
    %3 = vector.load %arg2[%c0_4, %c0_5, %c0_6, %c0_7] : memref<1x4x16x16xf32, #tpu.memory_space<vmem>>, vector<1x4x16x16xf32>
    %4 = vector.shape_cast %3 : vector<1x4x16x16xf32> to vector<4x16x16xf32>
    %5 = vector.shape_cast %4 : vector<4x16x16xf32> to vector<64x16xf32>
    %cst = arith.constant dense<0.000000e+00> : vector<64x32xf32>
    %6 = tpu.matmul %5, %0, %cst {dimension_numbers = #tpu.dot_dimension_numbers<[1], [0], [0], [1], [0, 0, 1, 1], [], []>} : vector<64x16xf32>, vector<16x32xf32>, vector<64x32xf32> -> vector<64x32xf32>
    %7 = vector.extract_strided_slice %6 {offsets = [0, 0], sizes = [16, 32], strides = [1, 1]} : vector<64x32xf32> to vector<16x32xf32>
    %cst_8 = arith.constant dense<0.000000e+00> : vector<32x32xf32>
    %8 = tpu.matmul %2, %7, %cst_8 {dimension_numbers = #tpu.dot_dimension_numbers<[1], [0], [0], [1], [0, 0, 1, 1], [], []>} : vector<32x16xf32>, vector<16x32xf32>, vector<32x32xf32> -> vector<32x32xf32>
    %9 = vector.shape_cast %8 : vector<32x32xf32> to vector<32x8x4xf32>
    %10 = vector.extract_strided_slice %9 {offsets = [0, 0, 0], sizes = [8, 8, 4], strides = [1, 1, 1]} : vector<32x8x4xf32> to vector<8x8x4xf32>
    %11 = vector.extract_strided_slice %9 {offsets = [8, 0, 0], sizes = [8, 8, 4], strides = [1, 1, 1]} : vector<32x8x4xf32> to vector<8x8x4xf32>
    %12 = vector.extract_strided_slice %9 {offsets = [16, 0, 0], sizes = [8, 8, 4], strides = [1, 1, 1]} : vector<32x8x4xf32> to vector<8x8x4xf32>
    %13 = vector.extract_strided_slice %9 {offsets = [24, 0, 0], sizes = [8, 8, 4], strides = [1, 1, 1]} : vector<32x8x4xf32> to vector<8x8x4xf32>
    %14 = vector.extract_strided_slice %6 {offsets = [16, 0], sizes = [16, 32], strides = [1, 1]} : vector<64x32xf32> to vector<16x32xf32>
    %cst_9 = arith.constant dense<0.000000e+00> : vector<32x32xf32>
    %15 = tpu.matmul %2, %14, %cst_9 {dimension_numbers = #tpu.dot_dimension_numbers<[1], [0], [0], [1], [0, 0, 1, 1], [], []>} : vector<32x16xf32>, vector<16x32xf32>, vector<32x32xf32> -> vector<32x32xf32>
    %16 = vector.shape_cast %15 : vector<32x32xf32> to vector<32x8x4xf32>
    %17 = vector.extract_strided_slice %16 {offsets = [0, 0, 0], sizes = [8, 8, 4], strides = [1, 1, 1]} : vector<32x8x4xf32> to vector<8x8x4xf32>
    %18 = vector.extract_strided_slice %16 {offsets = [8, 0, 0], sizes = [8, 8, 4], strides = [1, 1, 1]} : vector<32x8x4xf32> to vector<8x8x4xf32>
    %19 = vector.extract_strided_slice %16 {offsets = [16, 0, 0], sizes = [8, 8, 4], strides = [1, 1, 1]} : vector<32x8x4xf32> to vector<8x8x4xf32>
    %20 = vector.extract_strided_slice %16 {offsets = [24, 0, 0], sizes = [8, 8, 4], strides = [1, 1, 1]} : vector<32x8x4xf32> to vector<8x8x4xf32>
    %21 = vector.extract_strided_slice %6 {offsets = [32, 0], sizes = [16, 32], strides = [1, 1]} : vector<64x32xf32> to vector<16x32xf32>
    %cst_10 = arith.constant dense<0.000000e+00> : vector<32x32xf32>
    %22 = tpu.matmul %2, %21, %cst_10 {dimension_numbers = #tpu.dot_dimension_numbers<[1], [0], [0], [1], [0, 0, 1, 1], [], []>} : vector<32x16xf32>, vector<16x32xf32>, vector<32x32xf32> -> vector<32x32xf32>
    %23 = vector.shape_cast %22 : vector<32x32xf32> to vector<32x8x4xf32>
    %24 = vector.extract_strided_slice %23 {offsets = [0, 0, 0], sizes = [8, 8, 4], strides = [1, 1, 1]} : vector<32x8x4xf32> to vector<8x8x4xf32>
    %25 = vector.extract_strided_slice %23 {offsets = [8, 0, 0], sizes = [8, 8, 4], strides = [1, 1, 1]} : vector<32x8x4xf32> to vector<8x8x4xf32>
    %26 = vector.extract_strided_slice %23 {offsets = [16, 0, 0], sizes = [8, 8, 4], strides = [1, 1, 1]} : vector<32x8x4xf32> to vector<8x8x4xf32>
    %27 = vector.extract_strided_slice %23 {offsets = [24, 0, 0], sizes = [8, 8, 4], strides = [1, 1, 1]} : vector<32x8x4xf32> to vector<8x8x4xf32>
    %28 = vector.extract_strided_slice %6 {offsets = [48, 0], sizes = [16, 32], strides = [1, 1]} : vector<64x32xf32> to vector<16x32xf32>
    %cst_11 = arith.constant dense<0.000000e+00> : vector<32x32xf32>
    %29 = tpu.matmul %2, %28, %cst_11 {dimension_numbers = #tpu.dot_dimension_numbers<[1], [0], [0], [1], [0, 0, 1, 1], [], []>} : vector<32x16xf32>, vector<16x32xf32>, vector<32x32xf32> -> vector<32x32xf32>
    %30 = vector.shape_cast %29 : vector<32x32xf32> to vector<32x8x4xf32>
    %31 = vector.extract_strided_slice %30 {offsets = [0, 0, 0], sizes = [8, 8, 4], strides = [1, 1, 1]} : vector<32x8x4xf32> to vector<8x8x4xf32>
    %32 = vector.extract_strided_slice %30 {offsets = [8, 0, 0], sizes = [8, 8, 4], strides = [1, 1, 1]} : vector<32x8x4xf32> to vector<8x8x4xf32>
    %33 = vector.extract_strided_slice %30 {offsets = [16, 0, 0], sizes = [8, 8, 4], strides = [1, 1, 1]} : vector<32x8x4xf32> to vector<8x8x4xf32>
    %34 = vector.extract_strided_slice %30 {offsets = [24, 0, 0], sizes = [8, 8, 4], strides = [1, 1, 1]} : vector<32x8x4xf32> to vector<8x8x4xf32>
    %35 = tpu.concatenate %10, %11, %12, %13, %17, %18, %19, %20, %24, %25, %26, %27, %31, %32, %33, %34 in 2 : vector<8x8x4xf32>, vector<8x8x4xf32>, vector<8x8x4xf32>, vector<8x8x4xf32>, vector<8x8x4xf32>, vector<8x8x4xf32>, vector<8x8x4xf32>, vector<8x8x4xf32>, vector<8x8x4xf32>, vector<8x8x4xf32>, vector<8x8x4xf32>, vector<8x8x4xf32>, vector<8x8x4xf32>, vector<8x8x4xf32>, vector<8x8x4xf32>, vector<8x8x4xf32> -> vector<8x8x64xf32>
    %c0_12 = arith.constant 0 : index
    %c0_13 = arith.constant 0 : index
    %c0_14 = arith.constant 0 : index
    %c0_15 = arith.constant 0 : index
    %36 = vector.load %arg5[%c0_12, %c0_13, %c0_14, %c0_15] : memref<1x8x8x64xf32, #tpu.memory_space<vmem>>, vector<1x8x8x64xf32>
    %37 = vector.shape_cast %36 : vector<1x8x8x64xf32> to vector<8x8x64xf32>
    %38 = vector.shape_cast %35 : vector<8x8x64xf32> to vector<1x8x8x64xf32>
    tpu.vector_store %arg5[%c0_12, %c0_13, %c0_14, %c0_15], %38 {strides = array<i32>} : memref<1x8x8x64xf32, #tpu.memory_space<vmem>>, vector<1x8x8x64xf32>,
    return
  }
  func.func @transform_0(%arg0: i32, %arg1: i32) -> (i32, i32, i32, i32) {
    %c0_i32 = arith.constant 0 : i32
    %c0_i32_0 = arith.constant 0 : i32
    %c0_i32_1 = arith.constant 0 : i32
    %c0_i32_2 = arith.constant 0 : i32
    return %arg0, %c0_i32, %c0_i32_0, %c0_i32_1 : i32, i32, i32, i32
  }
  func.func @transform_1(%arg0: i32, %arg1: i32) -> (i32, i32, i32) {
    %c0_i32 = arith.constant 0 : i32
    %c0_i32_0 = arith.constant 0 : i32
    %c0_i32_1 = arith.constant 0 : i32
    return %arg1, %c0_i32, %c0_i32_0 : i32, i32, i32
  }
  func.func @transform_2(%arg0: i32, %arg1: i32) -> (i32, i32) {
    %c0_i32 = arith.constant 0 : i32
    %c0_i32_0 = arith.constant 0 : i32
    %c0_i32_1 = arith.constant 0 : i32
    return %c0_i32, %c0_i32_0 : i32, i32
  }
  func.func @transform_3(%arg0: i32, %arg1: i32) -> (i32, i32, i32, i32) {
    %c0_i32 = arith.constant 0 : i32
    %c0_i32_0 = arith.constant 0 : i32
    %c0_i32_1 = arith.constant 0 : i32
    return %arg0, %arg1, %c0_i32, %c0_i32_0 : i32, i32, i32, i32
  }
}

</mosaic_0001>

<llo_original>
// kernel: split_with_overlapping.1
$region0: #{split_with_overlapping.1}
  #allocation0 [shape = 'u32[]', space=smem, size = 0x4, offset = 0x4, fixed_abs, tag = 'smem constant byte address 0x4 - core index']
  #allocation1 [shape = 'u32[144,128]{1,0:T(1,128)}', space=vmem, size = 0x12000, scoped, tag = 'internal scratch']
  %s0 = inlined_call_operand.hbm [shape: f32[2,4,16,16], index: 0, kind: input, shape index: {}]
  %s1 = inlined_call_operand.hbm [shape: f32[1,32,16], index: 1, kind: input, shape index: {}]
  %s2 = inlined_call_operand.hbm [shape: f32[16,32], index: 2, kind: input, shape index: {}]
  %s3 = inlined_call_operand.hbm [shape: f32[2,8,8,64], index: 3, kind: output, shape index: {}]
  %s4 = sld [smem:[#allocation0]]
  $region57: #{split_with_overlapping.1} parent=0
    _
  %s6 = ssub.s32 1, %s4
  %s7 = scalar_select 0, %s6, %s4
  $region1: #{split_with_overlapping.1} parent=0
    #allocation2 [shape = 'u8[65536]{0}', space=vmem, size = 0x10000, scoped, tag = 'input window, operand 0']
    #allocation3 [shape = 's32[2]{0}', space=sflag, size = 0x8, scoped, tag = 'scoped memory for split_with_overlapping.1']
    #allocation4 [shape = 's32[2]{0}', space=sflag, size = 0x8, scoped, tag = 'scoped memory for split_with_overlapping.1']
    #allocation5 [shape = 'u8[16384]{0}', space=vmem, size = 0x4000, scoped, tag = 'input window, operand 1, single buffered']
    #allocation6 [shape = 's32[1]{0}', space=sflag, size = 0x4, scoped, tag = 'scoped memory for split_with_overlapping.1']
    #allocation7 [shape = 'u8[8192]{0}', space=vmem, size = 0x2000, scoped, tag = 'input window, operand 2, single buffered']
    #allocation8 [shape = 'u8[65536]{0}', space=vmem, size = 0x10000, scoped, tag = 'output window, operand 0']
    %8 = vsyncpa [#allocation3], 0
    %s9 = scalar_lea.sflag [#allocation3], 1
    %10 = vsyncpa %s9, 0
    %11 = vsyncpa [#allocation6], 0
    %12 = vsyncpa [#allocation4], 0
    %s13 = scalar_lea.sflag [#allocation4], 1
    %14 = vsyncpa %s13, 0
    loop: start=0, step=1, limit=4
    $region2: #{split_with_overlapping.1} parent=1 // loop_pre_header
      _
    $region3: #{split_with_overlapping.1} parent=1 // loop_header
      %s16 = sphi 0, %s20
      %p17 = scmp.ge.s32.totalorder %s16, 4
      %s23 = sphi 0, %s35
      %s24 = sphi 0, %s31
      %s25 = sphi 0, %s23
      %s26 = sphi 0, %s24
      %s27 = sphi 0, %s25
      %s28 = sphi 0, %s26
      %s38 = sphi 0, %s40
      %s41 = sphi 0, %s38
      %s42 = sphi 0, %s41
      %s58 = sphi 0, %s42
      %s64 = sphi 0, %s66
      %s67 = sphi 0, %s64
      %s68 = sphi 0, %s67
      %s84 = sphi 0, %s68
      %s88 = sphi 0, %s88
      %s90 = sphi 0, %s88
      %s91 = sphi 0, %s90
      %s105 = sphi 0, %s91
      %s113 = sphi 0, %s115
      %s116 = sphi 0, %s113
      %s117 = sphi 0, %s116
      %s133 = sphi 0, %s117
    $region4: #{split_with_overlapping.1} parent=1 // loop_header_branch
      %19 = sbr.rel (%p17) target = $region8
    $region5: #{split_with_overlapping.1} parent=1 // loop_body
      %s21 = ssub.s32 %s16, 1
      %s22 = ssub.s32 %s16, 2
      %s29 = sadd.s32 1, %s24
      %p30 = scmp.ge.s32.totalorder %s29, 1
      %s31 = scalar_select %p30, 0, %s29
      %s32 = sadd.s32 1, %s23
      %s33 = scalar_select %p30, %s32, %s23
      %p34 = scmp.ge.s32.totalorder %s33, 2
      %s35 = scalar_select %p34, 0, %s33
      %s36 = ssub.s32 %s23, %s35
      %p37 = scmp.eq.s32.totalorder %s36, 0
      %s39 = sadd.s32 %s38, 1
      %s40 = scalar_select %p37, %s38, %s39
      %p43 = pneg %p37
      %p44 = scmp.eq.s32.totalorder %s16, 1
      %p45 = por %p43, %p44
      %p46 = scmp.ne.s32.totalorder %s38, %s41
      %p47 = scmp.eq.s32.totalorder %s16, 0
      %p48 = por %p46, %p47
      %p49 = scmp.ne.s32.totalorder %s38, %s41
      %p50 = scmp.eq.s32.totalorder %s21, 1
      %p51 = por %p49, %p50
      %p52 = scmp.ne.s32.totalorder %s41, %s42
      %p53 = scmp.eq.s32.totalorder %s21, 0
      %p54 = por %p52, %p53
      %p55 = scmp.ne.s32.totalorder %s41, %s42
      %p56 = scmp.eq.s32.totalorder %s22, 1
      %p57 = por %p55, %p56
      %p59 = scmp.ne.s32.totalorder %s42, %s58
      %p60 = scmp.eq.s32.totalorder %s22, 0
      %p61 = por %p59, %p60
      %s62 = ssub.s32 %s24, %s31
      %p63 = scmp.eq.s32.totalorder %s62, 0
      %s65 = sadd.s32 %s64, 1
      %s66 = scalar_select %p63, %s64, %s65
      %p69 = pneg %p63
      %p70 = scmp.eq.s32.totalorder %s16, 1
      %p71 = por %p69, %p70
      %p72 = scmp.ne.s32.totalorder %s64, %s67
      %p73 = scmp.eq.s32.totalorder %s16, 0
      %p74 = por %p72, %p73
      %p75 = scmp.ne.s32.totalorder %s64, %s67
      %p76 = scmp.eq.s32.totalorder %s21, 1
      %p77 = por %p75, %p76
      %p78 = scmp.ne.s32.totalorder %s67, %s68
      %p79 = scmp.eq.s32.totalorder %s21, 0
      %p80 = por %p78, %p79
      %p81 = scmp.ne.s32.totalorder %s67, %s68
      %p82 = scmp.eq.s32.totalorder %s22, 1
      %p83 = por %p81, %p82
      %p85 = scmp.ne.s32.totalorder %s68, %s84
      %p86 = scmp.eq.s32.totalorder %s22, 0
      %p87 = por %p85, %p86
      %s89 = sadd.s32 %s88, 1
      %p92 = scmp.eq.s32.totalorder %s16, 1
      %p93 = scmp.ne.s32.totalorder %s88, %s90
      %p94 = scmp.eq.s32.totalorder %s16, 0
      %p95 = por %p93, %p94
      %p96 = scmp.ne.s32.totalorder %s88, %s90
      %p97 = scmp.eq.s32.totalorder %s21, 1
      %p98 = por %p96, %p97
      %p99 = scmp.ne.s32.totalorder %s90, %s91
      %p100 = scmp.eq.s32.totalorder %s21, 0
      %p101 = por %p99, %p100
      %p102 = scmp.ne.s32.totalorder %s90, %s91
      %p103 = scmp.eq.s32.totalorder %s22, 1
      %p104 = por %p102, %p103
      %p106 = scmp.ne.s32.totalorder %s91, %s105
      %p107 = scmp.eq.s32.totalorder %s22, 0
      %p108 = por %p106, %p107
      %s109 = ssub.s32 %s23, %s35
      %s110 = ssub.s32 %s24, %s31
      %s111 = sor.u32 %s109, %s110
      %p112 = scmp.eq.s32.totalorder %s111, 0
      %s114 = sadd.s32 %s113, 1
      %s115 = scalar_select %p112, %s113, %s114
      %p118 = pneg %p112
      %p119 = scmp.eq.s32.totalorder %s16, 1
      %p120 = por %p118, %p119
      %p121 = scmp.ne.s32.totalorder %s113, %s116
      %p122 = scmp.eq.s32.totalorder %s16, 0
      %p123 = por %p121, %p122
      %p124 = scmp.ne.s32.totalorder %s113, %s116
      %p125 = scmp.eq.s32.totalorder %s21, 1
      %p126 = por %p124, %p125
      %p127 = scmp.ne.s32.totalorder %s116, %s117
      %p128 = scmp.eq.s32.totalorder %s21, 0
      %p129 = por %p127, %p128
      %p130 = scmp.ne.s32.totalorder %s116, %s117
      %p131 = scmp.eq.s32.totalorder %s22, 1
      %p132 = por %p130, %p131
      %p134 = scmp.ne.s32.totalorder %s117, %s133
      %p135 = scmp.eq.s32.totalorder %s22, 0
      %p136 = por %p134, %p135
      %p137 = scmp.le.s32.totalorder 1, %s16
      %p138 = scmp.lt.s32.totalorder %s16, 3
      %p139 = pnand %p137, %p138
      %p140 = pneg %p139
      // Predicated region
      $region9: #{split_with_overlapping.1} parent=5 // pred_check
        _
      $region10: #{split_with_overlapping.1} parent=5 // pred_check_branch
        %142 = sbr.rel (%p139) target = $region12
      $region11: #{split_with_overlapping.1} parent=5 // pred_region
        %s143 = ssub.s32 %s16, 1
        // Predicated region
        $region13: #{split_with_overlapping.1} parent=11 // pred_check
          %p144 = pneg %p80
        $region14: #{split_with_overlapping.1} parent=11 // pred_check_branch
          %146 = sbr.rel (%p144) target = $region16
        $region15: #{split_with_overlapping.1} parent=11 // pred_region
          %s148 = ssub.s32 512, 512
          %149 = vsyncadd [#allocation6], %s148
          %s150 = smul.addr %s26, 4
          %s151 = smul.addr %s150, 128
          %s152 = scalar_lea.hbm %s1, %s151
          %s153 = sshll.u32 [#allocation5], 4
          %s154 = int_to_ptr.vmem [resolvable:$true] %s153
          %159 = dma.hbm_to_vmem [thread:$0]  %s152, 512, %s154, [#allocation6], 128, 128, 8
        $region16: #{split_with_overlapping.1} parent=11 // pred_fallthru
          _
        // Predicated region
        $region17: #{split_with_overlapping.1} parent=11 // pred_check
          %p160 = pneg %p101
        $region18: #{split_with_overlapping.1} parent=11 // pred_check_branch
          %162 = sbr.rel (%p160) target = $region20
        $region19: #{split_with_overlapping.1} parent=11 // pred_region
          %s164 = ssub.s32 256, 256
          %165 = vsyncadd [#allocation6], %s164
          %s166 = sshll.u32 [#allocation7], 4
          %s167 = int_to_ptr.vmem [resolvable:$true] %s166
          %172 = dma.hbm_to_vmem [thread:$0]  %s2, 256, %s167, [#allocation6], 128, 128, 8
        $region20: #{split_with_overlapping.1} parent=11 // pred_fallthru
          _
      $region12: #{split_with_overlapping.1} parent=5 // pred_fallthru
        _
      %p173 = scmp.lt.s32.totalorder %s16, 2
      // Predicated region
      $region21: #{split_with_overlapping.1} parent=5 // pred_check
        %p174 = pneg %p173
      $region22: #{split_with_overlapping.1} parent=5 // pred_check_branch
        %176 = sbr.rel (%p174) target = $region24
      $region23: #{split_with_overlapping.1} parent=5 // pred_region
        // Predicated region
        $region25: #{split_with_overlapping.1} parent=23 // pred_check
          %p177 = pneg %p48
        $region26: #{split_with_overlapping.1} parent=23 // pred_check_branch
          %179 = sbr.rel (%p177) target = $region28
        $region27: #{split_with_overlapping.1} parent=23 // pred_region
          %s180 = sand.u32 %s38, 1
          %s181 = scalar_lea.sflag [#allocation3], %s180
          %s182 = sand.u32 %s38, 1
          %s183 = smul.addr %s182, 64
          %s184 = scalar_lea.vmem [#allocation2], %s183
          %s186 = ssub.s32 1024, 1024
          %187 = vsyncadd %s181, %s186
          %s188 = smul.addr %s23, 8
          %s189 = smul.addr %s188, 128
          %s190 = scalar_lea.hbm %s0, %s189
          %s191 = sshll.u32 %s184, 4
          %s192 = int_to_ptr.vmem [resolvable:$true] %s191
          %197 = dma.hbm_to_vmem [thread:$0]  %s190, 1024, %s192, %s181, 128, 128, 8
        $region28: #{split_with_overlapping.1} parent=23 // pred_fallthru
          _
      $region24: #{split_with_overlapping.1} parent=5 // pred_fallthru
        _
      %p198 = scmp.le.s32.totalorder 1, %s16
      %p199 = scmp.lt.s32.totalorder %s16, 3
      %p200 = pnand %p198, %p199
      %p201 = pneg %p200
      // Predicated region
      $region29: #{split_with_overlapping.1} parent=5 // pred_check
        _
      $region30: #{split_with_overlapping.1} parent=5 // pred_check_branch
        %203 = sbr.rel (%p200) target = $region32
      $region31: #{split_with_overlapping.1} parent=5 // pred_region
        %s204 = ssub.s32 %s16, 1
        %s205 = sand.u32 %s41, 1
        %s206 = scalar_lea.sflag [#allocation3], %s205
        %s207 = sand.u32 %s41, 1
        %s208 = smul.addr %s207, 64
        %s209 = scalar_lea.vmem [#allocation2], %s208
        // Predicated region
        $region33: #{split_with_overlapping.1} parent=31 // pred_check
          %p210 = pneg %p54
        $region34: #{split_with_overlapping.1} parent=31 // pred_check_branch
          %212 = sbr.rel (%p210) target = $region36
        $region35: #{split_with_overlapping.1} parent=31 // pred_region
          %213 = dma.done %s206, 1024
        $region36: #{split_with_overlapping.1} parent=31 // pred_fallthru
          _
        // Predicated region
        $region37: #{split_with_overlapping.1} parent=31 // pred_check
          %p214 = pneg %p80
        $region38: #{split_with_overlapping.1} parent=31 // pred_check_branch
          %216 = sbr.rel (%p214) target = $region40
        $region39: #{split_with_overlapping.1} parent=31 // pred_region
          %217 = dma.done [#allocation6], 512
        $region40: #{split_with_overlapping.1} parent=31 // pred_fallthru
          _
        // Predicated region
        $region41: #{split_with_overlapping.1} parent=31 // pred_check
          %p218 = pneg %p101
        $region42: #{split_with_overlapping.1} parent=31 // pred_check_branch
          %220 = sbr.rel (%p218) target = $region44
        $region43: #{split_with_overlapping.1} parent=31 // pred_region
          %221 = dma.done [#allocation6], 256
        $region44: #{split_with_overlapping.1} parent=31 // pred_fallthru
          _
        %s222 = sand.u32 %s41, 1
        %s223 = scalar_lea.sflag [#allocation3], %s222
        %s224 = sand.u32 %s41, 1
        %s225 = smul.addr %s224, 64
        %s226 = scalar_lea.vmem [#allocation2], %s225
        %p227 = pneg %p54
        %p228 = pneg %p51
        %p229 = pneg %p80
        %p230 = pneg %p77
        %p231 = pneg %p101
        %p232 = pneg %p98
        %p233 = pneg %p129
        %p234 = pneg %p126
        %s235 = sand.u32 %s116, 1
        %s236 = scalar_lea.sflag [#allocation4], %s235
        %s237 = sand.u32 %s116, 1
        %s238 = smul.addr %s237, 64
        %s239 = scalar_lea.vmem [#allocation8], %s238
        %s240 = smul.u32 8, %s26
        %v241 = vld [vmem:[#allocation7] sm:$0xff]
        %v242 = vld [vmem:[#allocation7 + $0x8] sm:$0xff]
        %v243 = vld [vmem:[#allocation5] sm:$0xff]
        %v244 = vld [vmem:[#allocation5 + $0x8] sm:$0xff]
        %v245 = vld [vmem:[#allocation5 + $0x10] sm:$0xff]
        %v246 = vld [vmem:[#allocation5 + $0x18] sm:$0xff]
        %v247 = vld [vmem:[%s209] sm:$0xff]
        %v248 = vld [vmem:[%s209 + $0x8] sm:$0xff]
        %v249 = vld [vmem:[%s209 + $0x10] sm:$0xff]
        %v250 = vld [vmem:[%s209 + $0x18] sm:$0xff]
        %v251 = vld [vmem:[%s209 + $0x20] sm:$0xff]
        %v252 = vld [vmem:[%s209 + $0x28] sm:$0xff]
        %v253 = vld [vmem:[%s209 + $0x30] sm:$0xff]
        %v254 = vld [vmem:[%s209 + $0x38] sm:$0xff]
        %vm255 = vcmask 130048
        %v257 = vsel %vm255, %v247, 0
        %v260 = vsel %vm255, %v248, 0
        %v263 = vsel %vm255, %v249, 0
        %v266 = vsel %vm255, %v250, 0
        %v269 = vsel %vm255, %v251, 0
        %v272 = vsel %vm255, %v252, 0
        %v275 = vsel %vm255, %v253, 0
        %v278 = vsel %vm255, %v254, 0
        %280 = vmatprep.subr.mxu0 0.0
        %281 = vmatpush1.msra.mxu0 0.0
        %282 = vmatprep.subr.mxu0 0.0
        %283 = vmatpush1.msra.mxu0 0.0
        %284 = vmatprep.subr.mxu0 0.0
        %285 = vmatpush1.msra.mxu0 0.0
        %286 = vmatprep.subr.mxu0 0.0
        %287 = vmatpush1.msra.mxu0 0.0
        %288 = vmatprep.subr.mxu0 0.0
        %289 = vmatpush1.msra.mxu0 0.0
        %290 = vmatprep.subr.mxu0 0.0
        %291 = vmatpush1.msra.mxu0 0.0
        %292 = vmatprep.subr.mxu0 0.0
        %293 = vmatpush1.msra.mxu0 0.0
        %294 = vmatprep.subr.mxu0 0.0
        %295 = vmatpush1.msra.mxu0 0.0
        %296 = vmatprep.subr.mxu0 0.0
        %297 = vmatpush1.msra.mxu0 0.0
        %298 = vmatprep.subr.mxu0 0.0
        %299 = vmatpush1.msra.mxu0 0.0
        %300 = vmatprep.subr.mxu0 0.0
        %301 = vmatpush1.msra.mxu0 0.0
        %302 = vmatprep.subr.mxu0 0.0
        %303 = vmatpush1.msra.mxu0 0.0
        %304 = vmatprep.subr.mxu0 0.0
        %305 = vmatpush1.msra.mxu0 0.0
        %306 = vmatprep.subr.mxu0 0.0
        %307 = vmatpush1.msra.mxu0 0.0
        %308 = vmatprep.subr.mxu0 0.0
        %309 = vmatpush1.msra.mxu0 %v242
        %310 = vmatprep.subr.mxu0 0.0
        %311 = vmatpush1.msra.mxu0 %v241
        %312 = vmatprep.subr.mxu0 0.0
        %313 = vmatpush2.msra.mxu0 0.0
        %314 = vmatprep.subr.mxu0 0.0
        %315 = vmatpush2.msra.mxu0 0.0
        %316 = vmatprep.subr.mxu0 0.0
        %317 = vmatpush2.msra.mxu0 0.0
        %318 = vmatprep.subr.mxu0 0.0
        %319 = vmatpush2.msra.mxu0 0.0
        %320 = vmatprep.subr.mxu0 0.0
        %321 = vmatpush2.msra.mxu0 0.0
        %322 = vmatprep.subr.mxu0 0.0
        %323 = vmatpush2.msra.mxu0 0.0
        %324 = vmatprep.subr.mxu0 0.0
        %325 = vmatpush2.msra.mxu0 0.0
        %326 = vmatprep.subr.mxu0 0.0
        %327 = vmatpush2.msra.mxu0 0.0
        %328 = vmatprep.subr.mxu0 0.0
        %329 = vmatpush2.msra.mxu0 0.0
        %330 = vmatprep.subr.mxu0 0.0
        %331 = vmatpush2.msra.mxu0 0.0
        %332 = vmatprep.subr.mxu0 0.0
        %333 = vmatpush2.msra.mxu0 0.0
        %334 = vmatprep.subr.mxu0 0.0
        %335 = vmatpush2.msra.mxu0 0.0
        %336 = vmatprep.subr.mxu0 0.0
        %337 = vmatpush2.msra.mxu0 0.0
        %338 = vmatprep.subr.mxu0 0.0
        %339 = vmatpush2.msra.mxu0 0.0
        %340 = vmatprep.subr.mxu0 0.0
        %341 = vmatpush2.msra.mxu0 0.0
        %342 = vmatprep.subr.mxu0 0.0
        %343 = vmatpush2.msra.mxu0 0.0
        %344 = vmatprep.mubr.f32.mxu0 0.0
        %345 = vmatmul.mubr.f32.gmra.mxu0 %v257
        %v346 = vpop.f32.mrf.mxu0
        %v347 = vadd.f32 0.0, %v346
        %v348 = vpop.f32.mrf.mxu0
        %349 = vmatprep.mubr.f32.mxu0 0.0
        %350 = vmatmul.mubr.f32.gmra.mxu0 %v260
        %v351 = vpop.f32.mrf.mxu0
        %v352 = vadd.f32 0.0, %v351
        %v353 = vpop.f32.mrf.mxu0
        %354 = vmatprep.mubr.f32.mxu0 0.0
        %355 = vmatmul.mubr.f32.gmra.mxu0 %v263
        %v356 = vpop.f32.mrf.mxu0
        %v357 = vadd.f32 0.0, %v356
        %v358 = vpop.f32.mrf.mxu0
        %359 = vmatprep.mubr.f32.mxu0 0.0
        %360 = vmatmul.mubr.f32.gmra.mxu0 %v266
        %v361 = vpop.f32.mrf.mxu0
        %v362 = vadd.f32 0.0, %v361
        %v363 = vpop.f32.mrf.mxu0
        %364 = vmatprep.mubr.f32.mxu0 0.0
        %365 = vmatmul.mubr.f32.gmra.mxu0 %v269
        %v366 = vpop.f32.mrf.mxu0
        %v367 = vadd.f32 0.0, %v366
        %v368 = vpop.f32.mrf.mxu0
        %369 = vmatprep.mubr.f32.mxu0 0.0
        %370 = vmatmul.mubr.f32.gmra.mxu0 %v272
        %v371 = vpop.f32.mrf.mxu0
        %v372 = vadd.f32 0.0, %v371
        %v373 = vpop.f32.mrf.mxu0
        %374 = vmatprep.mubr.f32.mxu0 0.0
        %375 = vmatmul.mubr.f32.gmra.mxu0 %v275
        %v376 = vpop.f32.mrf.mxu0
        %v377 = vadd.f32 0.0, %v376
        %v378 = vpop.f32.mrf.mxu0
        %379 = vmatprep.mubr.f32.mxu0 0.0
        %380 = vmatmul.mubr.f32.gmra.mxu0 %v278
        %v381 = vpop.f32.mrf.mxu0
        %v382 = vadd.f32 0.0, %v381
        %v383 = vpop.f32.mrf.mxu0
        %384 = vdwg.mxu0
        %v386 = vsel %vm255, %v243, 0
        %v389 = vsel %vm255, %v244, 0
        %v392 = vsel %vm255, %v245, 0
        %v395 = vsel %vm255, %v246, 0
        %397 = vmatprep.subr.mxu0 0.0
        %398 = vmatpush1.msra.mxu0 0.0
        %399 = vmatprep.subr.mxu0 0.0
        %400 = vmatpush1.msra.mxu0 0.0
        %401 = vmatprep.subr.mxu0 0.0
        %402 = vmatpush1.msra.mxu0 0.0
        %403 = vmatprep.subr.mxu0 0.0
        %404 = vmatpush1.msra.mxu0 0.0
        %405 = vmatprep.subr.mxu0 0.0
        %406 = vmatpush1.msra.mxu0 0.0
        %407 = vmatprep.subr.mxu0 0.0
        %408 = vmatpush1.msra.mxu0 0.0
        %409 = vmatprep.subr.mxu0 0.0
        %410 = vmatpush1.msra.mxu0 0.0
        %411 = vmatprep.subr.mxu0 0.0
        %412 = vmatpush1.msra.mxu0 0.0
        %413 = vmatprep.subr.mxu0 0.0
        %414 = vmatpush1.msra.mxu0 0.0
        %415 = vmatprep.subr.mxu0 0.0
        %416 = vmatpush1.msra.mxu0 0.0
        %417 = vmatprep.subr.mxu0 0.0
        %418 = vmatpush1.msra.mxu0 0.0
        %419 = vmatprep.subr.mxu0 0.0
        %420 = vmatpush1.msra.mxu0 0.0
        %421 = vmatprep.subr.mxu0 0.0
        %422 = vmatpush1.msra.mxu0 0.0
        %423 = vmatprep.subr.mxu0 0.0
        %424 = vmatpush1.msra.mxu0 0.0
        %425 = vmatprep.subr.mxu0 0.0
        %426 = vmatpush1.msra.mxu0 %v352
        %427 = vmatprep.subr.mxu0 0.0
        %428 = vmatpush1.msra.mxu0 %v347
        %429 = vmatprep.subr.mxu0 0.0
        %430 = vmatpush2.msra.mxu0 0.0
        %431 = vmatprep.subr.mxu0 0.0
        %432 = vmatpush2.msra.mxu0 0.0
        %433 = vmatprep.subr.mxu0 0.0
        %434 = vmatpush2.msra.mxu0 0.0
        %435 = vmatprep.subr.mxu0 0.0
        %436 = vmatpush2.msra.mxu0 0.0
        %437 = vmatprep.subr.mxu0 0.0
        %438 = vmatpush2.msra.mxu0 0.0
        %439 = vmatprep.subr.mxu0 0.0
        %440 = vmatpush2.msra.mxu0 0.0
        %441 = vmatprep.subr.mxu0 0.0
        %442 = vmatpush2.msra.mxu0 0.0
        %443 = vmatprep.subr.mxu0 0.0
        %444 = vmatpush2.msra.mxu0 0.0
        %445 = vmatprep.subr.mxu0 0.0
        %446 = vmatpush2.msra.mxu0 0.0
        %447 = vmatprep.subr.mxu0 0.0
        %448 = vmatpush2.msra.mxu0 0.0
        %449 = vmatprep.subr.mxu0 0.0
        %450 = vmatpush2.msra.mxu0 0.0
        %451 = vmatprep.subr.mxu0 0.0
        %452 = vmatpush2.msra.mxu0 0.0
        %453 = vmatprep.subr.mxu0 0.0
        %454 = vmatpush2.msra.mxu0 0.0
        %455 = vmatprep.subr.mxu0 0.0
        %456 = vmatpush2.msra.mxu0 0.0
        %457 = vmatprep.subr.mxu0 0.0
        %458 = vmatpush2.msra.mxu0 0.0
        %459 = vmatprep.subr.mxu0 0.0
        %460 = vmatpush2.msra.mxu0 0.0
        %461 = vmatprep.mubr.f32.mxu0 0.0
        %462 = vmatmul.mubr.f32.gmra.mxu0 %v386
        %v463 = vpop.f32.mrf.mxu0
        %v464 = vadd.f32 0.0, %v463
        %v465 = vpop.f32.mrf.mxu0
        %466 = vmatprep.mubr.f32.mxu0 0.0
        %467 = vmatmul.mubr.f32.gmra.mxu0 %v389
        %v468 = vpop.f32.mrf.mxu0
        %v469 = vadd.f32 0.0, %v468
        %v470 = vpop.f32.mrf.mxu0
        %471 = vmatprep.mubr.f32.mxu0 0.0
        %472 = vmatmul.mubr.f32.gmra.mxu0 %v392
        %v473 = vpop.f32.mrf.mxu0
        %v474 = vadd.f32 0.0, %v473
        %v475 = vpop.f32.mrf.mxu0
        %476 = vmatprep.mubr.f32.mxu0 0.0
        %477 = vmatmul.mubr.f32.gmra.mxu0 %v395
        %v478 = vpop.f32.mrf.mxu0
        %v479 = vadd.f32 0.0, %v478
        %v480 = vpop.f32.mrf.mxu0
        %481 = vdwg.mxu0
        %486 = vrot.lane.b32.xlu0 %v464, 124
        %v487 = vpop.permute.xlu0 %486
        %488 = vrot.lane.b32.xlu0 %v469, 124
        %v489 = vpop.permute.xlu0 %488
        %490 = vrot.lane.b32.xlu0 %v474, 124
        %v491 = vpop.permute.xlu0 %490
        %492 = vrot.lane.b32.xlu0 %v479, 124
        %v493 = vpop.permute.xlu0 %492
        %498 = vrot.lane.b32.xlu0 %v464, 120
        %v499 = vpop.permute.xlu0 %498
        %500 = vrot.lane.b32.xlu0 %v469, 120
        %v501 = vpop.permute.xlu0 %500
        %502 = vrot.lane.b32.xlu0 %v474, 120
        %v503 = vpop.permute.xlu0 %502
        %504 = vrot.lane.b32.xlu0 %v479, 120
        %v505 = vpop.permute.xlu0 %504
        %510 = vrot.lane.b32.xlu0 %v464, 116
        %v511 = vpop.permute.xlu0 %510
        %512 = vrot.lane.b32.xlu0 %v469, 116
        %v513 = vpop.permute.xlu0 %512
        %514 = vrot.lane.b32.xlu0 %v474, 116
        %v515 = vpop.permute.xlu0 %514
        %516 = vrot.lane.b32.xlu0 %v479, 116
        %v517 = vpop.permute.xlu0 %516
        %522 = vrot.lane.b32.xlu0 %v464, 112
        %v523 = vpop.permute.xlu0 %522
        %524 = vrot.lane.b32.xlu0 %v469, 112
        %v525 = vpop.permute.xlu0 %524
        %526 = vrot.lane.b32.xlu0 %v474, 112
        %v527 = vpop.permute.xlu0 %526
        %528 = vrot.lane.b32.xlu0 %v479, 112
        %v529 = vpop.permute.xlu0 %528
        %534 = vrot.lane.b32.xlu0 %v464, 108
        %v535 = vpop.permute.xlu0 %534
        %536 = vrot.lane.b32.xlu0 %v469, 108
        %v537 = vpop.permute.xlu0 %536
        %538 = vrot.lane.b32.xlu0 %v474, 108
        %v539 = vpop.permute.xlu0 %538
        %540 = vrot.lane.b32.xlu0 %v479, 108
        %v541 = vpop.permute.xlu0 %540
        %546 = vrot.lane.b32.xlu0 %v464, 104
        %v547 = vpop.permute.xlu0 %546
        %548 = vrot.lane.b32.xlu0 %v469, 104
        %v549 = vpop.permute.xlu0 %548
        %550 = vrot.lane.b32.xlu0 %v474, 104
        %v551 = vpop.permute.xlu0 %550
        %552 = vrot.lane.b32.xlu0 %v479, 104
        %v553 = vpop.permute.xlu0 %552
        %558 = vrot.lane.b32.xlu0 %v464, 100
        %v559 = vpop.permute.xlu0 %558
        %560 = vrot.lane.b32.xlu0 %v469, 100
        %v561 = vpop.permute.xlu0 %560
        %562 = vrot.lane.b32.xlu0 %v474, 100
        %v563 = vpop.permute.xlu0 %562
        %564 = vrot.lane.b32.xlu0 %v479, 100
        %v565 = vpop.permute.xlu0 %564
        %v570 = vcombine.low %v464, %v499
        %v571 = vcombine.high %v464, %v499
        %v573 = vunpack.c.l.s4 1983009808
        %v574 = vunpack.c.0.s8 %v573
        %v575 = vlaneseq
        %v576 = vshrl.u32 %v575, 7
        %v577 = vsub.s32 %v574, %v576
        %v578 = vrot.slane %v570, %v577
        %v580 = vunpack.c.l.s4 1983009808
        %v581 = vunpack.c.0.s8 %v580
        %v582 = vlaneseq
        %v583 = vshrl.u32 %v582, 7
        %v584 = vsub.s32 %v581, %v583
        %v585 = vrot.slane %v571, %v584
        %v586 = vcombine.low %v487, %v511
        %v587 = vcombine.high %v487, %v511
        %v589 = vunpack.c.l.s4 1983009808
        %v590 = vunpack.c.0.s8 %v589
        %v591 = vlaneseq
        %v592 = vshrl.u32 %v591, 7
        %v593 = vsub.s32 %v590, %v592
        %v594 = vrot.slane %v586, %v593
        %v596 = vunpack.c.l.s4 1983009808
        %v597 = vunpack.c.0.s8 %v596
        %v598 = vlaneseq
        %v599 = vshrl.u32 %v598, 7
        %v600 = vsub.s32 %v597, %v599
        %v601 = vrot.slane %v587, %v600
        %v602 = vcombine.low %v523, %v547
        %v603 = vcombine.high %v523, %v547
        %v605 = vunpack.c.l.s4 1983009808
        %v606 = vunpack.c.0.s8 %v605
        %v607 = vlaneseq
        %v608 = vshrl.u32 %v607, 7
        %v609 = vsub.s32 %v606, %v608
        %v610 = vrot.slane %v602, %v609
        %v612 = vunpack.c.l.s4 1983009808
        %v613 = vunpack.c.0.s8 %v612
        %v614 = vlaneseq
        %v615 = vshrl.u32 %v614, 7
        %v616 = vsub.s32 %v613, %v615
        %v617 = vrot.slane %v603, %v616
        %v618 = vcombine.low %v535, %v559
        %v619 = vcombine.high %v535, %v559
        %v621 = vunpack.c.l.s4 1983009808
        %v622 = vunpack.c.0.s8 %v621
        %v623 = vlaneseq
        %v624 = vshrl.u32 %v623, 7
        %v625 = vsub.s32 %v622, %v624
        %v626 = vrot.slane %v618, %v625
        %v628 = vunpack.c.l.s4 1983009808
        %v629 = vunpack.c.0.s8 %v628
        %v630 = vlaneseq
        %v631 = vshrl.u32 %v630, 7
        %v632 = vsub.s32 %v629, %v631
        %v633 = vrot.slane %v619, %v632
        %v634 = vcombine.low %v578, %v594
        %v635 = vcombine.high %v578, %v594
        %v637 = vunpack.c.l.s4 1934713408
        %v638 = vunpack.c.0.s8 %v637
        %v639 = vlaneseq
        %v640 = vshrl.u32 %v639, 7
        %v641 = vsub.s32 %v638, %v640
        %v642 = vrot.slane %v634, %v641
        %v644 = vunpack.c.l.s4 1934713408
        %v645 = vunpack.c.0.s8 %v644
        %v646 = vlaneseq
        %v647 = vshrl.u32 %v646, 7
        %v648 = vsub.s32 %v645, %v647
        %v649 = vrot.slane %v635, %v648
        %v650 = vcombine.low %v585, %v601
        %v651 = vcombine.high %v585, %v601
        %v653 = vunpack.c.l.s4 1934713408
        %v654 = vunpack.c.0.s8 %v653
        %v655 = vlaneseq
        %v656 = vshrl.u32 %v655, 7
        %v657 = vsub.s32 %v654, %v656
        %v658 = vrot.slane %v650, %v657
        %v660 = vunpack.c.l.s4 1934713408
        %v661 = vunpack.c.0.s8 %v660
        %v662 = vlaneseq
        %v663 = vshrl.u32 %v662, 7
        %v664 = vsub.s32 %v661, %v663
        %v665 = vrot.slane %v651, %v664
        %v666 = vcombine.low %v610, %v626
        %v667 = vcombine.high %v610, %v626
        %v669 = vunpack.c.l.s4 1934713408
        %v670 = vunpack.c.0.s8 %v669
        %v671 = vlaneseq
        %v672 = vshrl.u32 %v671, 7
        %v673 = vsub.s32 %v670, %v672
        %v674 = vrot.slane %v666, %v673
        %v676 = vunpack.c.l.s4 1934713408
        %v677 = vunpack.c.0.s8 %v676
        %v678 = vlaneseq
        %v679 = vshrl.u32 %v678, 7
        %v680 = vsub.s32 %v677, %v679
        %v681 = vrot.slane %v667, %v680
        %v682 = vcombine.low %v617, %v633
        %v683 = vcombine.high %v617, %v633
        %v685 = vunpack.c.l.s4 1934713408
        %v686 = vunpack.c.0.s8 %v685
        %v687 = vlaneseq
        %v688 = vshrl.u32 %v687, 7
        %v689 = vsub.s32 %v686, %v688
        %v690 = vrot.slane %v682, %v689
        %v692 = vunpack.c.l.s4 1934713408
        %v693 = vunpack.c.0.s8 %v692
        %v694 = vlaneseq
        %v695 = vshrl.u32 %v694, 7
        %v696 = vsub.s32 %v693, %v695
        %v697 = vrot.slane %v683, %v696
        %v698 = vcombine.low %v642, %v674
        %v699 = vcombine.high %v642, %v674
        %v700 = vcombine.low %v649, %v681
        %v701 = vcombine.high %v649, %v681
        %v702 = vcombine.low %v658, %v690
        %v703 = vcombine.high %v658, %v690
        %v704 = vcombine.low %v665, %v697
        %v705 = vcombine.high %v665, %v697
        %v706 = vcombine.low %v469, %v501
        %v707 = vcombine.high %v469, %v501
        %v709 = vunpack.c.l.s4 1983009808
        %v710 = vunpack.c.0.s8 %v709
        %v711 = vlaneseq
        %v712 = vshrl.u32 %v711, 7
        %v713 = vsub.s32 %v710, %v712
        %v714 = vrot.slane %v706, %v713
        %v716 = vunpack.c.l.s4 1983009808
        %v717 = vunpack.c.0.s8 %v716
        %v718 = vlaneseq
        %v719 = vshrl.u32 %v718, 7
        %v720 = vsub.s32 %v717, %v719
        %v721 = vrot.slane %v707, %v720
        %v722 = vcombine.low %v489, %v513
        %v723 = vcombine.high %v489, %v513
        %v725 = vunpack.c.l.s4 1983009808
        %v726 = vunpack.c.0.s8 %v725
        %v727 = vlaneseq
        %v728 = vshrl.u32 %v727, 7
        %v729 = vsub.s32 %v726, %v728
        %v730 = vrot.slane %v722, %v729
        %v732 = vunpack.c.l.s4 1983009808
        %v733 = vunpack.c.0.s8 %v732
        %v734 = vlaneseq
        %v735 = vshrl.u32 %v734, 7
        %v736 = vsub.s32 %v733, %v735
        %v737 = vrot.slane %v723, %v736
        %v738 = vcombine.low %v525, %v549
        %v739 = vcombine.high %v525, %v549
        %v741 = vunpack.c.l.s4 1983009808
        %v742 = vunpack.c.0.s8 %v741
        %v743 = vlaneseq
        %v744 = vshrl.u32 %v743, 7
        %v745 = vsub.s32 %v742, %v744
        %v746 = vrot.slane %v738, %v745
        %v748 = vunpack.c.l.s4 1983009808
        %v749 = vunpack.c.0.s8 %v748
        %v750 = vlaneseq
        %v751 = vshrl.u32 %v750, 7
        %v752 = vsub.s32 %v749, %v751
        %v753 = vrot.slane %v739, %v752
        %v754 = vcombine.low %v537, %v561
        %v755 = vcombine.high %v537, %v561
        %v757 = vunpack.c.l.s4 1983009808
        %v758 = vunpack.c.0.s8 %v757
        %v759 = vlaneseq
        %v760 = vshrl.u32 %v759, 7
        %v761 = vsub.s32 %v758, %v760
        %v762 = vrot.slane %v754, %v761
        %v764 = vunpack.c.l.s4 1983009808
        %v765 = vunpack.c.0.s8 %v764
        %v766 = vlaneseq
        %v767 = vshrl.u32 %v766, 7
        %v768 = vsub.s32 %v765, %v767
        %v769 = vrot.slane %v755, %v768
        %v770 = vcombine.low %v714, %v730
        %v771 = vcombine.high %v714, %v730
        %v773 = vunpack.c.l.s4 1934713408
        %v774 = vunpack.c.0.s8 %v773
        %v775 = vlaneseq
        %v776 = vshrl.u32 %v775, 7
        %v777 = vsub.s32 %v774, %v776
        %v778 = vrot.slane %v770, %v777
        %v780 = vunpack.c.l.s4 1934713408
        %v781 = vunpack.c.0.s8 %v780
        %v782 = vlaneseq
        %v783 = vshrl.u32 %v782, 7
        %v784 = vsub.s32 %v781, %v783
        %v785 = vrot.slane %v771, %v784
        %v786 = vcombine.low %v721, %v737
        %v787 = vcombine.high %v721, %v737
        %v789 = vunpack.c.l.s4 1934713408
        %v790 = vunpack.c.0.s8 %v789
        %v791 = vlaneseq
        %v792 = vshrl.u32 %v791, 7
        %v793 = vsub.s32 %v790, %v792
        %v794 = vrot.slane %v786, %v793
        %v796 = vunpack.c.l.s4 1934713408
        %v797 = vunpack.c.0.s8 %v796
        %v798 = vlaneseq
        %v799 = vshrl.u32 %v798, 7
        %v800 = vsub.s32 %v797, %v799
        %v801 = vrot.slane %v787, %v800
        %v802 = vcombine.low %v746, %v762
        %v803 = vcombine.high %v746, %v762
        %v805 = vunpack.c.l.s4 1934713408
        %v806 = vunpack.c.0.s8 %v805
        %v807 = vlaneseq
        %v808 = vshrl.u32 %v807, 7
        %v809 = vsub.s32 %v806, %v808
        %v810 = vrot.slane %v802, %v809
        %v812 = vunpack.c.l.s4 1934713408
        %v813 = vunpack.c.0.s8 %v812
        %v814 = vlaneseq
        %v815 = vshrl.u32 %v814, 7
        %v816 = vsub.s32 %v813, %v815
        %v817 = vrot.slane %v803, %v816
        %v818 = vcombine.low %v753, %v769
        %v819 = vcombine.high %v753, %v769
        %v821 = vunpack.c.l.s4 1934713408
        %v822 = vunpack.c.0.s8 %v821
        %v823 = vlaneseq
        %v824 = vshrl.u32 %v823, 7
        %v825 = vsub.s32 %v822, %v824
        %v826 = vrot.slane %v818, %v825
        %v828 = vunpack.c.l.s4 1934713408
        %v829 = vunpack.c.0.s8 %v828
        %v830 = vlaneseq
        %v831 = vshrl.u32 %v830, 7
        %v832 = vsub.s32 %v829, %v831
        %v833 = vrot.slane %v819, %v832
        %v834 = vcombine.low %v778, %v810
        %v835 = vcombine.high %v778, %v810
        %v836 = vcombine.low %v785, %v817
        %v837 = vcombine.high %v785, %v817
        %v838 = vcombine.low %v794, %v826
        %v839 = vcombine.high %v794, %v826
        %v840 = vcombine.low %v801, %v833
        %v841 = vcombine.high %v801, %v833
        %v842 = vcombine.low %v474, %v503
        %v843 = vcombine.high %v474, %v503
        %v845 = vunpack.c.l.s4 1983009808
        %v846 = vunpack.c.0.s8 %v845
        %v847 = vlaneseq
        %v848 = vshrl.u32 %v847, 7
        %v849 = vsub.s32 %v846, %v848
        %v850 = vrot.slane %v842, %v849
        %v852 = vunpack.c.l.s4 1983009808
        %v853 = vunpack.c.0.s8 %v852
        %v854 = vlaneseq
        %v855 = vshrl.u32 %v854, 7
        %v856 = vsub.s32 %v853, %v855
        %v857 = vrot.slane %v843, %v856
        %v858 = vcombine.low %v491, %v515
        %v859 = vcombine.high %v491, %v515
        %v861 = vunpack.c.l.s4 1983009808
        %v862 = vunpack.c.0.s8 %v861
        %v863 = vlaneseq
        %v864 = vshrl.u32 %v863, 7
        %v865 = vsub.s32 %v862, %v864
        %v866 = vrot.slane %v858, %v865
        %v868 = vunpack.c.l.s4 1983009808
        %v869 = vunpack.c.0.s8 %v868
        %v870 = vlaneseq
        %v871 = vshrl.u32 %v870, 7
        %v872 = vsub.s32 %v869, %v871
        %v873 = vrot.slane %v859, %v872
        %v874 = vcombine.low %v527, %v551
        %v875 = vcombine.high %v527, %v551
        %v877 = vunpack.c.l.s4 1983009808
        %v878 = vunpack.c.0.s8 %v877
        %v879 = vlaneseq
        %v880 = vshrl.u32 %v879, 7
        %v881 = vsub.s32 %v878, %v880
        %v882 = vrot.slane %v874, %v881
        %v884 = vunpack.c.l.s4 1983009808
        %v885 = vunpack.c.0.s8 %v884
        %v886 = vlaneseq
        %v887 = vshrl.u32 %v886, 7
        %v888 = vsub.s32 %v885, %v887
        %v889 = vrot.slane %v875, %v888
        %v890 = vcombine.low %v539, %v563
        %v891 = vcombine.high %v539, %v563
        %v893 = vunpack.c.l.s4 1983009808
        %v894 = vunpack.c.0.s8 %v893
        %v895 = vlaneseq
        %v896 = vshrl.u32 %v895, 7
        %v897 = vsub.s32 %v894, %v896
        %v898 = vrot.slane %v890, %v897
        %v900 = vunpack.c.l.s4 1983009808
        %v901 = vunpack.c.0.s8 %v900
        %v902 = vlaneseq
        %v903 = vshrl.u32 %v902, 7
        %v904 = vsub.s32 %v901, %v903
        %v905 = vrot.slane %v891, %v904
        %v906 = vcombine.low %v850, %v866
        %v907 = vcombine.high %v850, %v866
        %v909 = vunpack.c.l.s4 1934713408
        %v910 = vunpack.c.0.s8 %v909
        %v911 = vlaneseq
        %v912 = vshrl.u32 %v911, 7
        %v913 = vsub.s32 %v910, %v912
        %v914 = vrot.slane %v906, %v913
        %v916 = vunpack.c.l.s4 1934713408
        %v917 = vunpack.c.0.s8 %v916
        %v918 = vlaneseq
        %v919 = vshrl.u32 %v918, 7
        %v920 = vsub.s32 %v917, %v919
        %v921 = vrot.slane %v907, %v920
        %v922 = vcombine.low %v857, %v873
        %v923 = vcombine.high %v857, %v873
        %v925 = vunpack.c.l.s4 1934713408
        %v926 = vunpack.c.0.s8 %v925
        %v927 = vlaneseq
        %v928 = vshrl.u32 %v927, 7
        %v929 = vsub.s32 %v926, %v928
        %v930 = vrot.slane %v922, %v929
        %v932 = vunpack.c.l.s4 1934713408
        %v933 = vunpack.c.0.s8 %v932
        %v934 = vlaneseq
        %v935 = vshrl.u32 %v934, 7
        %v936 = vsub.s32 %v933, %v935
        %v937 = vrot.slane %v923, %v936
        %v938 = vcombine.low %v882, %v898
        %v939 = vcombine.high %v882, %v898
        %v941 = vunpack.c.l.s4 1934713408
        %v942 = vunpack.c.0.s8 %v941
        %v943 = vlaneseq
        %v944 = vshrl.u32 %v943, 7
        %v945 = vsub.s32 %v942, %v944
        %v946 = vrot.slane %v938, %v945
        %v948 = vunpack.c.l.s4 1934713408
        %v949 = vunpack.c.0.s8 %v948
        %v950 = vlaneseq
        %v951 = vshrl.u32 %v950, 7
        %v952 = vsub.s32 %v949, %v951
        %v953 = vrot.slane %v939, %v952
        %v954 = vcombine.low %v889, %v905
        %v955 = vcombine.high %v889, %v905
        %v957 = vunpack.c.l.s4 1934713408
        %v958 = vunpack.c.0.s8 %v957
        %v959 = vlaneseq
        %v960 = vshrl.u32 %v959, 7
        %v961 = vsub.s32 %v958, %v960
        %v962 = vrot.slane %v954, %v961
        %v964 = vunpack.c.l.s4 1934713408
        %v965 = vunpack.c.0.s8 %v964
        %v966 = vlaneseq
        %v967 = vshrl.u32 %v966, 7
        %v968 = vsub.s32 %v965, %v967
        %v969 = vrot.slane %v955, %v968
        %v970 = vcombine.low %v914, %v946
        %v971 = vcombine.high %v914, %v946
        %v972 = vcombine.low %v921, %v953
        %v973 = vcombine.high %v921, %v953
        %v974 = vcombine.low %v930, %v962
        %v975 = vcombine.high %v930, %v962
        %v976 = vcombine.low %v937, %v969
        %v977 = vcombine.high %v937, %v969
        %v978 = vcombine.low %v479, %v505
        %v979 = vcombine.high %v479, %v505
        %v981 = vunpack.c.l.s4 1983009808
        %v982 = vunpack.c.0.s8 %v981
        %v983 = vlaneseq
        %v984 = vshrl.u32 %v983, 7
        %v985 = vsub.s32 %v982, %v984
        %v986 = vrot.slane %v978, %v985
        %v988 = vunpack.c.l.s4 1983009808
        %v989 = vunpack.c.0.s8 %v988
        %v990 = vlaneseq
        %v991 = vshrl.u32 %v990, 7
        %v992 = vsub.s32 %v989, %v991
        %v993 = vrot.slane %v979, %v992
        %v994 = vcombine.low %v493, %v517
        %v995 = vcombine.high %v493, %v517
        %v997 = vunpack.c.l.s4 1983009808
        %v998 = vunpack.c.0.s8 %v997
        %v999 = vlaneseq
        %v1000 = vshrl.u32 %v999, 7
        %v1001 = vsub.s32 %v998, %v1000
        %v1002 = vrot.slane %v994, %v1001
        %v1004 = vunpack.c.l.s4 1983009808
        %v1005 = vunpack.c.0.s8 %v1004
        %v1006 = vlaneseq
        %v1007 = vshrl.u32 %v1006, 7
        %v1008 = vsub.s32 %v1005, %v1007
        %v1009 = vrot.slane %v995, %v1008
        %v1010 = vcombine.low %v529, %v553
        %v1011 = vcombine.high %v529, %v553
        %v1013 = vunpack.c.l.s4 1983009808
        %v1014 = vunpack.c.0.s8 %v1013
        %v1015 = vlaneseq
        %v1016 = vshrl.u32 %v1015, 7
        %v1017 = vsub.s32 %v1014, %v1016
        %v1018 = vrot.slane %v1010, %v1017
        %v1020 = vunpack.c.l.s4 1983009808
        %v1021 = vunpack.c.0.s8 %v1020
        %v1022 = vlaneseq
        %v1023 = vshrl.u32 %v1022, 7
        %v1024 = vsub.s32 %v1021, %v1023
        %v1025 = vrot.slane %v1011, %v1024
        %v1026 = vcombine.low %v541, %v565
        %v1027 = vcombine.high %v541, %v565
        %v1029 = vunpack.c.l.s4 1983009808
        %v1030 = vunpack.c.0.s8 %v1029
        %v1031 = vlaneseq
        %v1032 = vshrl.u32 %v1031, 7
        %v1033 = vsub.s32 %v1030, %v1032
        %v1034 = vrot.slane %v1026, %v1033
        %v1036 = vunpack.c.l.s4 1983009808
        %v1037 = vunpack.c.0.s8 %v1036
        %v1038 = vlaneseq
        %v1039 = vshrl.u32 %v1038, 7
        %v1040 = vsub.s32 %v1037, %v1039
        %v1041 = vrot.slane %v1027, %v1040
        %v1042 = vcombine.low %v986, %v1002
        %v1043 = vcombine.high %v986, %v1002
        %v1045 = vunpack.c.l.s4 1934713408
        %v1046 = vunpack.c.0.s8 %v1045
        %v1047 = vlaneseq
        %v1048 = vshrl.u32 %v1047, 7
        %v1049 = vsub.s32 %v1046, %v1048
        %v1050 = vrot.slane %v1042, %v1049
        %v1052 = vunpack.c.l.s4 1934713408
        %v1053 = vunpack.c.0.s8 %v1052
        %v1054 = vlaneseq
        %v1055 = vshrl.u32 %v1054, 7
        %v1056 = vsub.s32 %v1053, %v1055
        %v1057 = vrot.slane %v1043, %v1056
        %v1058 = vcombine.low %v993, %v1009
        %v1059 = vcombine.high %v993, %v1009
        %v1061 = vunpack.c.l.s4 1934713408
        %v1062 = vunpack.c.0.s8 %v1061
        %v1063 = vlaneseq
        %v1064 = vshrl.u32 %v1063, 7
        %v1065 = vsub.s32 %v1062, %v1064
        %v1066 = vrot.slane %v1058, %v1065
        %v1068 = vunpack.c.l.s4 1934713408
        %v1069 = vunpack.c.0.s8 %v1068
        %v1070 = vlaneseq
        %v1071 = vshrl.u32 %v1070, 7
        %v1072 = vsub.s32 %v1069, %v1071
        %v1073 = vrot.slane %v1059, %v1072
        %v1074 = vcombine.low %v1018, %v1034
        %v1075 = vcombine.high %v1018, %v1034
        %v1077 = vunpack.c.l.s4 1934713408
        %v1078 = vunpack.c.0.s8 %v1077
        %v1079 = vlaneseq
        %v1080 = vshrl.u32 %v1079, 7
        %v1081 = vsub.s32 %v1078, %v1080
        %v1082 = vrot.slane %v1074, %v1081
        %v1084 = vunpack.c.l.s4 1934713408
        %v1085 = vunpack.c.0.s8 %v1084
        %v1086 = vlaneseq
        %v1087 = vshrl.u32 %v1086, 7
        %v1088 = vsub.s32 %v1085, %v1087
        %v1089 = vrot.slane %v1075, %v1088
        %v1090 = vcombine.low %v1025, %v1041
        %v1091 = vcombine.high %v1025, %v1041
        %v1093 = vunpack.c.l.s4 1934713408
        %v1094 = vunpack.c.0.s8 %v1093
        %v1095 = vlaneseq
        %v1096 = vshrl.u32 %v1095, 7
        %v1097 = vsub.s32 %v1094, %v1096
        %v1098 = vrot.slane %v1090, %v1097
        %v1100 = vunpack.c.l.s4 1934713408
        %v1101 = vunpack.c.0.s8 %v1100
        %v1102 = vlaneseq
        %v1103 = vshrl.u32 %v1102, 7
        %v1104 = vsub.s32 %v1101, %v1103
        %v1105 = vrot.slane %v1091, %v1104
        %v1106 = vcombine.low %v1050, %v1082
        %v1107 = vcombine.high %v1050, %v1082
        %v1108 = vcombine.low %v1057, %v1089
        %v1109 = vcombine.high %v1057, %v1089
        %v1110 = vcombine.low %v1066, %v1098
        %v1111 = vcombine.high %v1066, %v1098
        %v1112 = vcombine.low %v1073, %v1105
        %v1113 = vcombine.high %v1073, %v1105
        %1114 = vmatprep.subr.mxu0 0.0
        %1115 = vmatpush1.msra.mxu0 0.0
        %1116 = vmatprep.subr.mxu0 0.0
        %1117 = vmatpush1.msra.mxu0 0.0
        %1118 = vmatprep.subr.mxu0 0.0
        %1119 = vmatpush1.msra.mxu0 0.0
        %1120 = vmatprep.subr.mxu0 0.0
        %1121 = vmatpush1.msra.mxu0 0.0
        %1122 = vmatprep.subr.mxu0 0.0
        %1123 = vmatpush1.msra.mxu0 0.0
        %1124 = vmatprep.subr.mxu0 0.0
        %1125 = vmatpush1.msra.mxu0 0.0
        %1126 = vmatprep.subr.mxu0 0.0
        %1127 = vmatpush1.msra.mxu0 0.0
        %1128 = vmatprep.subr.mxu0 0.0
        %1129 = vmatpush1.msra.mxu0 0.0
        %1130 = vmatprep.subr.mxu0 0.0
        %1131 = vmatpush1.msra.mxu0 0.0
        %1132 = vmatprep.subr.mxu0 0.0
        %1133 = vmatpush1.msra.mxu0 0.0
        %1134 = vmatprep.subr.mxu0 0.0
        %1135 = vmatpush1.msra.mxu0 0.0
        %1136 = vmatprep.subr.mxu0 0.0
        %1137 = vmatpush1.msra.mxu0 0.0
        %1138 = vmatprep.subr.mxu0 0.0
        %1139 = vmatpush1.msra.mxu0 0.0
        %1140 = vmatprep.subr.mxu0 0.0
        %1141 = vmatpush1.msra.mxu0 0.0
        %1142 = vmatprep.subr.mxu0 0.0
        %1143 = vmatpush1.msra.mxu0 %v362
        %1144 = vmatprep.subr.mxu0 0.0
        %1145 = vmatpush1.msra.mxu0 %v357
        %1146 = vmatprep.subr.mxu0 0.0
        %1147 = vmatpush2.msra.mxu0 0.0
        %1148 = vmatprep.subr.mxu0 0.0
        %1149 = vmatpush2.msra.mxu0 0.0
        %1150 = vmatprep.subr.mxu0 0.0
        %1151 = vmatpush2.msra.mxu0 0.0
        %1152 = vmatprep.subr.mxu0 0.0
        %1153 = vmatpush2.msra.mxu0 0.0
        %1154 = vmatprep.subr.mxu0 0.0
        %1155 = vmatpush2.msra.mxu0 0.0
        %1156 = vmatprep.subr.mxu0 0.0
        %1157 = vmatpush2.msra.mxu0 0.0
        %1158 = vmatprep.subr.mxu0 0.0
        %1159 = vmatpush2.msra.mxu0 0.0
        %1160 = vmatprep.subr.mxu0 0.0
        %1161 = vmatpush2.msra.mxu0 0.0
        %1162 = vmatprep.subr.mxu0 0.0
        %1163 = vmatpush2.msra.mxu0 0.0
        %1164 = vmatprep.subr.mxu0 0.0
        %1165 = vmatpush2.msra.mxu0 0.0
        %1166 = vmatprep.subr.mxu0 0.0
        %1167 = vmatpush2.msra.mxu0 0.0
        %1168 = vmatprep.subr.mxu0 0.0
        %1169 = vmatpush2.msra.mxu0 0.0
        %1170 = vmatprep.subr.mxu0 0.0
        %1171 = vmatpush2.msra.mxu0 0.0
        %1172 = vmatprep.subr.mxu0 0.0
        %1173 = vmatpush2.msra.mxu0 0.0
        %1174 = vmatprep.subr.mxu0 0.0
        %1175 = vmatpush2.msra.mxu0 0.0
        %1176 = vmatprep.subr.mxu0 0.0
        %1177 = vmatpush2.msra.mxu0 0.0
        %1178 = vmatprep.mubr.f32.mxu0 0.0
        %1179 = vmatmul.mubr.f32.gmra.mxu0 %v386
        %v1180 = vpop.f32.mrf.mxu0
        %v1181 = vadd.f32 0.0, %v1180
        %v1182 = vpop.f32.mrf.mxu0
        %1183 = vmatprep.mubr.f32.mxu0 0.0
        %1184 = vmatmul.mubr.f32.gmra.mxu0 %v389
        %v1185 = vpop.f32.mrf.mxu0
        %v1186 = vadd.f32 0.0, %v1185
        %v1187 = vpop.f32.mrf.mxu0
        %1188 = vmatprep.mubr.f32.mxu0 0.0
        %1189 = vmatmul.mubr.f32.gmra.mxu0 %v392
        %v1190 = vpop.f32.mrf.mxu0
        %v1191 = vadd.f32 0.0, %v1190
        %v1192 = vpop.f32.mrf.mxu0
        %1193 = vmatprep.mubr.f32.mxu0 0.0
        %1194 = vmatmul.mubr.f32.gmra.mxu0 %v395
        %v1195 = vpop.f32.mrf.mxu0
        %v1196 = vadd.f32 0.0, %v1195
        %v1197 = vpop.f32.mrf.mxu0
        %1198 = vdwg.mxu0
        %1203 = vrot.lane.b32.xlu0 %v1181, 124
        %v1204 = vpop.permute.xlu0 %1203
        %1205 = vrot.lane.b32.xlu0 %v1186, 124
        %v1206 = vpop.permute.xlu0 %1205
        %1207 = vrot.lane.b32.xlu0 %v1191, 124
        %v1208 = vpop.permute.xlu0 %1207
        %1209 = vrot.lane.b32.xlu0 %v1196, 124
        %v1210 = vpop.permute.xlu0 %1209
        %1215 = vrot.lane.b32.xlu0 %v1181, 120
        %v1216 = vpop.permute.xlu0 %1215
        %1217 = vrot.lane.b32.xlu0 %v1186, 120
        %v1218 = vpop.permute.xlu0 %1217
        %1219 = vrot.lane.b32.xlu0 %v1191, 120
        %v1220 = vpop.permute.xlu0 %1219
        %1221 = vrot.lane.b32.xlu0 %v1196, 120
        %v1222 = vpop.permute.xlu0 %1221
        %1227 = vrot.lane.b32.xlu0 %v1181, 116
        %v1228 = vpop.permute.xlu0 %1227
        %1229 = vrot.lane.b32.xlu0 %v1186, 116
        %v1230 = vpop.permute.xlu0 %1229
        %1231 = vrot.lane.b32.xlu0 %v1191, 116
        %v1232 = vpop.permute.xlu0 %1231
        %1233 = vrot.lane.b32.xlu0 %v1196, 116
        %v1234 = vpop.permute.xlu0 %1233
        %1239 = vrot.lane.b32.xlu0 %v1181, 112
        %v1240 = vpop.permute.xlu0 %1239
        %1241 = vrot.lane.b32.xlu0 %v1186, 112
        %v1242 = vpop.permute.xlu0 %1241
        %1243 = vrot.lane.b32.xlu0 %v1191, 112
        %v1244 = vpop.permute.xlu0 %1243
        %1245 = vrot.lane.b32.xlu0 %v1196, 112
        %v1246 = vpop.permute.xlu0 %1245
        %1251 = vrot.lane.b32.xlu0 %v1181, 108
        %v1252 = vpop.permute.xlu0 %1251
        %1253 = vrot.lane.b32.xlu0 %v1186, 108
        %v1254 = vpop.permute.xlu0 %1253
        %1255 = vrot.lane.b32.xlu0 %v1191, 108
        %v1256 = vpop.permute.xlu0 %1255
        %1257 = vrot.lane.b32.xlu0 %v1196, 108
        %v1258 = vpop.permute.xlu0 %1257
        %1263 = vrot.lane.b32.xlu0 %v1181, 104
        %v1264 = vpop.permute.xlu0 %1263
        %1265 = vrot.lane.b32.xlu0 %v1186, 104
        %v1266 = vpop.permute.xlu0 %1265
        %1267 = vrot.lane.b32.xlu0 %v1191, 104
        %v1268 = vpop.permute.xlu0 %1267
        %1269 = vrot.lane.b32.xlu0 %v1196, 104
        %v1270 = vpop.permute.xlu0 %1269
        %1275 = vrot.lane.b32.xlu0 %v1181, 100
        %v1276 = vpop.permute.xlu0 %1275
        %1277 = vrot.lane.b32.xlu0 %v1186, 100
        %v1278 = vpop.permute.xlu0 %1277
        %1279 = vrot.lane.b32.xlu0 %v1191, 100
        %v1280 = vpop.permute.xlu0 %1279
        %1281 = vrot.lane.b32.xlu0 %v1196, 100
        %v1282 = vpop.permute.xlu0 %1281
        %v1287 = vcombine.low %v1181, %v1216
        %v1288 = vcombine.high %v1181, %v1216
        %v1290 = vunpack.c.l.s4 1983009808
        %v1291 = vunpack.c.0.s8 %v1290
        %v1292 = vlaneseq
        %v1293 = vshrl.u32 %v1292, 7
        %v1294 = vsub.s32 %v1291, %v1293
        %v1295 = vrot.slane %v1287, %v1294
        %v1297 = vunpack.c.l.s4 1983009808
        %v1298 = vunpack.c.0.s8 %v1297
        %v1299 = vlaneseq
        %v1300 = vshrl.u32 %v1299, 7
        %v1301 = vsub.s32 %v1298, %v1300
        %v1302 = vrot.slane %v1288, %v1301
        %v1303 = vcombine.low %v1204, %v1228
        %v1304 = vcombine.high %v1204, %v1228
        %v1306 = vunpack.c.l.s4 1983009808
        %v1307 = vunpack.c.0.s8 %v1306
        %v1308 = vlaneseq
        %v1309 = vshrl.u32 %v1308, 7
        %v1310 = vsub.s32 %v1307, %v1309
        %v1311 = vrot.slane %v1303, %v1310
        %v1313 = vunpack.c.l.s4 1983009808
        %v1314 = vunpack.c.0.s8 %v1313
        %v1315 = vlaneseq
        %v1316 = vshrl.u32 %v1315, 7
        %v1317 = vsub.s32 %v1314, %v1316
        %v1318 = vrot.slane %v1304, %v1317
        %v1319 = vcombine.low %v1240, %v1264
        %v1320 = vcombine.high %v1240, %v1264
        %v1322 = vunpack.c.l.s4 1983009808
        %v1323 = vunpack.c.0.s8 %v1322
        %v1324 = vlaneseq
        %v1325 = vshrl.u32 %v1324, 7
        %v1326 = vsub.s32 %v1323, %v1325
        %v1327 = vrot.slane %v1319, %v1326
        %v1329 = vunpack.c.l.s4 1983009808
        %v1330 = vunpack.c.0.s8 %v1329
        %v1331 = vlaneseq
        %v1332 = vshrl.u32 %v1331, 7
        %v1333 = vsub.s32 %v1330, %v1332
        %v1334 = vrot.slane %v1320, %v1333
        %v1335 = vcombine.low %v1252, %v1276
        %v1336 = vcombine.high %v1252, %v1276
        %v1338 = vunpack.c.l.s4 1983009808
        %v1339 = vunpack.c.0.s8 %v1338
        %v1340 = vlaneseq
        %v1341 = vshrl.u32 %v1340, 7
        %v1342 = vsub.s32 %v1339, %v1341
        %v1343 = vrot.slane %v1335, %v1342
        %v1345 = vunpack.c.l.s4 1983009808
        %v1346 = vunpack.c.0.s8 %v1345
        %v1347 = vlaneseq
        %v1348 = vshrl.u32 %v1347, 7
        %v1349 = vsub.s32 %v1346, %v1348
        %v1350 = vrot.slane %v1336, %v1349
        %v1351 = vcombine.low %v1295, %v1311
        %v1352 = vcombine.high %v1295, %v1311
        %v1354 = vunpack.c.l.s4 1934713408
        %v1355 = vunpack.c.0.s8 %v1354
        %v1356 = vlaneseq
        %v1357 = vshrl.u32 %v1356, 7
        %v1358 = vsub.s32 %v1355, %v1357
        %v1359 = vrot.slane %v1351, %v1358
        %v1361 = vunpack.c.l.s4 1934713408
        %v1362 = vunpack.c.0.s8 %v1361
        %v1363 = vlaneseq
        %v1364 = vshrl.u32 %v1363, 7
        %v1365 = vsub.s32 %v1362, %v1364
        %v1366 = vrot.slane %v1352, %v1365
        %v1367 = vcombine.low %v1302, %v1318
        %v1368 = vcombine.high %v1302, %v1318
        %v1370 = vunpack.c.l.s4 1934713408
        %v1371 = vunpack.c.0.s8 %v1370
        %v1372 = vlaneseq
        %v1373 = vshrl.u32 %v1372, 7
        %v1374 = vsub.s32 %v1371, %v1373
        %v1375 = vrot.slane %v1367, %v1374
        %v1377 = vunpack.c.l.s4 1934713408
        %v1378 = vunpack.c.0.s8 %v1377
        %v1379 = vlaneseq
        %v1380 = vshrl.u32 %v1379, 7
        %v1381 = vsub.s32 %v1378, %v1380
        %v1382 = vrot.slane %v1368, %v1381
        %v1383 = vcombine.low %v1327, %v1343
        %v1384 = vcombine.high %v1327, %v1343
        %v1386 = vunpack.c.l.s4 1934713408
        %v1387 = vunpack.c.0.s8 %v1386
        %v1388 = vlaneseq
        %v1389 = vshrl.u32 %v1388, 7
        %v1390 = vsub.s32 %v1387, %v1389
        %v1391 = vrot.slane %v1383, %v1390
        %v1393 = vunpack.c.l.s4 1934713408
        %v1394 = vunpack.c.0.s8 %v1393
        %v1395 = vlaneseq
        %v1396 = vshrl.u32 %v1395, 7
        %v1397 = vsub.s32 %v1394, %v1396
        %v1398 = vrot.slane %v1384, %v1397
        %v1399 = vcombine.low %v1334, %v1350
        %v1400 = vcombine.high %v1334, %v1350
        %v1402 = vunpack.c.l.s4 1934713408
        %v1403 = vunpack.c.0.s8 %v1402
        %v1404 = vlaneseq
        %v1405 = vshrl.u32 %v1404, 7
        %v1406 = vsub.s32 %v1403, %v1405
        %v1407 = vrot.slane %v1399, %v1406
        %v1409 = vunpack.c.l.s4 1934713408
        %v1410 = vunpack.c.0.s8 %v1409
        %v1411 = vlaneseq
        %v1412 = vshrl.u32 %v1411, 7
        %v1413 = vsub.s32 %v1410, %v1412
        %v1414 = vrot.slane %v1400, %v1413
        %v1415 = vcombine.low %v1359, %v1391
        %v1416 = vcombine.high %v1359, %v1391
        %v1417 = vcombine.low %v1366, %v1398
        %v1418 = vcombine.high %v1366, %v1398
        %v1419 = vcombine.low %v1375, %v1407
        %v1420 = vcombine.high %v1375, %v1407
        %v1421 = vcombine.low %v1382, %v1414
        %v1422 = vcombine.high %v1382, %v1414
        %v1423 = vcombine.low %v1186, %v1218
        %v1424 = vcombine.high %v1186, %v1218
        %v1426 = vunpack.c.l.s4 1983009808
        %v1427 = vunpack.c.0.s8 %v1426
        %v1428 = vlaneseq
        %v1429 = vshrl.u32 %v1428, 7
        %v1430 = vsub.s32 %v1427, %v1429
        %v1431 = vrot.slane %v1423, %v1430
        %v1433 = vunpack.c.l.s4 1983009808
        %v1434 = vunpack.c.0.s8 %v1433
        %v1435 = vlaneseq
        %v1436 = vshrl.u32 %v1435, 7
        %v1437 = vsub.s32 %v1434, %v1436
        %v1438 = vrot.slane %v1424, %v1437
        %v1439 = vcombine.low %v1206, %v1230
        %v1440 = vcombine.high %v1206, %v1230
        %v1442 = vunpack.c.l.s4 1983009808
        %v1443 = vunpack.c.0.s8 %v1442
        %v1444 = vlaneseq
        %v1445 = vshrl.u32 %v1444, 7
        %v1446 = vsub.s32 %v1443, %v1445
        %v1447 = vrot.slane %v1439, %v1446
        %v1449 = vunpack.c.l.s4 1983009808
        %v1450 = vunpack.c.0.s8 %v1449
        %v1451 = vlaneseq
        %v1452 = vshrl.u32 %v1451, 7
        %v1453 = vsub.s32 %v1450, %v1452
        %v1454 = vrot.slane %v1440, %v1453
        %v1455 = vcombine.low %v1242, %v1266
        %v1456 = vcombine.high %v1242, %v1266
        %v1458 = vunpack.c.l.s4 1983009808
        %v1459 = vunpack.c.0.s8 %v1458
        %v1460 = vlaneseq
        %v1461 = vshrl.u32 %v1460, 7
        %v1462 = vsub.s32 %v1459, %v1461
        %v1463 = vrot.slane %v1455, %v1462
        %v1465 = vunpack.c.l.s4 1983009808
        %v1466 = vunpack.c.0.s8 %v1465
        %v1467 = vlaneseq
        %v1468 = vshrl.u32 %v1467, 7
        %v1469 = vsub.s32 %v1466, %v1468
        %v1470 = vrot.slane %v1456, %v1469
        %v1471 = vcombine.low %v1254, %v1278
        %v1472 = vcombine.high %v1254, %v1278
        %v1474 = vunpack.c.l.s4 1983009808
        %v1475 = vunpack.c.0.s8 %v1474
        %v1476 = vlaneseq
        %v1477 = vshrl.u32 %v1476, 7
        %v1478 = vsub.s32 %v1475, %v1477
        %v1479 = vrot.slane %v1471, %v1478
        %v1481 = vunpack.c.l.s4 1983009808
        %v1482 = vunpack.c.0.s8 %v1481
        %v1483 = vlaneseq
        %v1484 = vshrl.u32 %v1483, 7
        %v1485 = vsub.s32 %v1482, %v1484
        %v1486 = vrot.slane %v1472, %v1485
        %v1487 = vcombine.low %v1431, %v1447
        %v1488 = vcombine.high %v1431, %v1447
        %v1490 = vunpack.c.l.s4 1934713408
        %v1491 = vunpack.c.0.s8 %v1490
        %v1492 = vlaneseq
        %v1493 = vshrl.u32 %v1492, 7
        %v1494 = vsub.s32 %v1491, %v1493
        %v1495 = vrot.slane %v1487, %v1494
        %v1497 = vunpack.c.l.s4 1934713408
        %v1498 = vunpack.c.0.s8 %v1497
        %v1499 = vlaneseq
        %v1500 = vshrl.u32 %v1499, 7
        %v1501 = vsub.s32 %v1498, %v1500
        %v1502 = vrot.slane %v1488, %v1501
        %v1503 = vcombine.low %v1438, %v1454
        %v1504 = vcombine.high %v1438, %v1454
        %v1506 = vunpack.c.l.s4 1934713408
        %v1507 = vunpack.c.0.s8 %v1506
        %v1508 = vlaneseq
        %v1509 = vshrl.u32 %v1508, 7
        %v1510 = vsub.s32 %v1507, %v1509
        %v1511 = vrot.slane %v1503, %v1510
        %v1513 = vunpack.c.l.s4 1934713408
        %v1514 = vunpack.c.0.s8 %v1513
        %v1515 = vlaneseq
        %v1516 = vshrl.u32 %v1515, 7
        %v1517 = vsub.s32 %v1514, %v1516
        %v1518 = vrot.slane %v1504, %v1517
        %v1519 = vcombine.low %v1463, %v1479
        %v1520 = vcombine.high %v1463, %v1479
        %v1522 = vunpack.c.l.s4 1934713408
        %v1523 = vunpack.c.0.s8 %v1522
        %v1524 = vlaneseq
        %v1525 = vshrl.u32 %v1524, 7
        %v1526 = vsub.s32 %v1523, %v1525
        %v1527 = vrot.slane %v1519, %v1526
        %v1529 = vunpack.c.l.s4 1934713408
        %v1530 = vunpack.c.0.s8 %v1529
        %v1531 = vlaneseq
        %v1532 = vshrl.u32 %v1531, 7
        %v1533 = vsub.s32 %v1530, %v1532
        %v1534 = vrot.slane %v1520, %v1533
        %v1535 = vcombine.low %v1470, %v1486
        %v1536 = vcombine.high %v1470, %v1486
        %v1538 = vunpack.c.l.s4 1934713408
        %v1539 = vunpack.c.0.s8 %v1538
        %v1540 = vlaneseq
        %v1541 = vshrl.u32 %v1540, 7
        %v1542 = vsub.s32 %v1539, %v1541
        %v1543 = vrot.slane %v1535, %v1542
        %v1545 = vunpack.c.l.s4 1934713408
        %v1546 = vunpack.c.0.s8 %v1545
        %v1547 = vlaneseq
        %v1548 = vshrl.u32 %v1547, 7
        %v1549 = vsub.s32 %v1546, %v1548
        %v1550 = vrot.slane %v1536, %v1549
        %v1551 = vcombine.low %v1495, %v1527
        %v1552 = vcombine.high %v1495, %v1527
        %v1553 = vcombine.low %v1502, %v1534
        %v1554 = vcombine.high %v1502, %v1534
        %v1555 = vcombine.low %v1511, %v1543
        %v1556 = vcombine.high %v1511, %v1543
        %v1557 = vcombine.low %v1518, %v1550
        %v1558 = vcombine.high %v1518, %v1550
        %v1559 = vcombine.low %v1191, %v1220
        %v1560 = vcombine.high %v1191, %v1220
        %v1562 = vunpack.c.l.s4 1983009808
        %v1563 = vunpack.c.0.s8 %v1562
        %v1564 = vlaneseq
        %v1565 = vshrl.u32 %v1564, 7
        %v1566 = vsub.s32 %v1563, %v1565
        %v1567 = vrot.slane %v1559, %v1566
        %v1569 = vunpack.c.l.s4 1983009808
        %v1570 = vunpack.c.0.s8 %v1569
        %v1571 = vlaneseq
        %v1572 = vshrl.u32 %v1571, 7
        %v1573 = vsub.s32 %v1570, %v1572
        %v1574 = vrot.slane %v1560, %v1573
        %v1575 = vcombine.low %v1208, %v1232
        %v1576 = vcombine.high %v1208, %v1232
        %v1578 = vunpack.c.l.s4 1983009808
        %v1579 = vunpack.c.0.s8 %v1578
        %v1580 = vlaneseq
        %v1581 = vshrl.u32 %v1580, 7
        %v1582 = vsub.s32 %v1579, %v1581
        %v1583 = vrot.slane %v1575, %v1582
        %v1585 = vunpack.c.l.s4 1983009808
        %v1586 = vunpack.c.0.s8 %v1585
        %v1587 = vlaneseq
        %v1588 = vshrl.u32 %v1587, 7
        %v1589 = vsub.s32 %v1586, %v1588
        %v1590 = vrot.slane %v1576, %v1589
        %v1591 = vcombine.low %v1244, %v1268
        %v1592 = vcombine.high %v1244, %v1268
        %v1594 = vunpack.c.l.s4 1983009808
        %v1595 = vunpack.c.0.s8 %v1594
        %v1596 = vlaneseq
        %v1597 = vshrl.u32 %v1596, 7
        %v1598 = vsub.s32 %v1595, %v1597
        %v1599 = vrot.slane %v1591, %v1598
        %v1601 = vunpack.c.l.s4 1983009808
        %v1602 = vunpack.c.0.s8 %v1601
        %v1603 = vlaneseq
        %v1604 = vshrl.u32 %v1603, 7
        %v1605 = vsub.s32 %v1602, %v1604
        %v1606 = vrot.slane %v1592, %v1605
        %v1607 = vcombine.low %v1256, %v1280
        %v1608 = vcombine.high %v1256, %v1280
        %v1610 = vunpack.c.l.s4 1983009808
        %v1611 = vunpack.c.0.s8 %v1610
        %v1612 = vlaneseq
        %v1613 = vshrl.u32 %v1612, 7
        %v1614 = vsub.s32 %v1611, %v1613
        %v1615 = vrot.slane %v1607, %v1614
        %v1617 = vunpack.c.l.s4 1983009808
        %v1618 = vunpack.c.0.s8 %v1617
        %v1619 = vlaneseq
        %v1620 = vshrl.u32 %v1619, 7
        %v1621 = vsub.s32 %v1618, %v1620
        %v1622 = vrot.slane %v1608, %v1621
        %v1623 = vcombine.low %v1567, %v1583
        %v1624 = vcombine.high %v1567, %v1583
        %v1626 = vunpack.c.l.s4 1934713408
        %v1627 = vunpack.c.0.s8 %v1626
        %v1628 = vlaneseq
        %v1629 = vshrl.u32 %v1628, 7
        %v1630 = vsub.s32 %v1627, %v1629
        %v1631 = vrot.slane %v1623, %v1630
        %v1633 = vunpack.c.l.s4 1934713408
        %v1634 = vunpack.c.0.s8 %v1633
        %v1635 = vlaneseq
        %v1636 = vshrl.u32 %v1635, 7
        %v1637 = vsub.s32 %v1634, %v1636
        %v1638 = vrot.slane %v1624, %v1637
        %v1639 = vcombine.low %v1574, %v1590
        %v1640 = vcombine.high %v1574, %v1590
        %v1642 = vunpack.c.l.s4 1934713408
        %v1643 = vunpack.c.0.s8 %v1642
        %v1644 = vlaneseq
        %v1645 = vshrl.u32 %v1644, 7
        %v1646 = vsub.s32 %v1643, %v1645
        %v1647 = vrot.slane %v1639, %v1646
        %v1649 = vunpack.c.l.s4 1934713408
        %v1650 = vunpack.c.0.s8 %v1649
        %v1651 = vlaneseq
        %v1652 = vshrl.u32 %v1651, 7
        %v1653 = vsub.s32 %v1650, %v1652
        %v1654 = vrot.slane %v1640, %v1653
        %v1655 = vcombine.low %v1599, %v1615
        %v1656 = vcombine.high %v1599, %v1615
        %v1658 = vunpack.c.l.s4 1934713408
        %v1659 = vunpack.c.0.s8 %v1658
        %v1660 = vlaneseq
        %v1661 = vshrl.u32 %v1660, 7
        %v1662 = vsub.s32 %v1659, %v1661
        %v1663 = vrot.slane %v1655, %v1662
        %v1665 = vunpack.c.l.s4 1934713408
        %v1666 = vunpack.c.0.s8 %v1665
        %v1667 = vlaneseq
        %v1668 = vshrl.u32 %v1667, 7
        %v1669 = vsub.s32 %v1666, %v1668
        %v1670 = vrot.slane %v1656, %v1669
        %v1671 = vcombine.low %v1606, %v1622
        %v1672 = vcombine.high %v1606, %v1622
        %v1674 = vunpack.c.l.s4 1934713408
        %v1675 = vunpack.c.0.s8 %v1674
        %v1676 = vlaneseq
        %v1677 = vshrl.u32 %v1676, 7
        %v1678 = vsub.s32 %v1675, %v1677
        %v1679 = vrot.slane %v1671, %v1678
        %v1681 = vunpack.c.l.s4 1934713408
        %v1682 = vunpack.c.0.s8 %v1681
        %v1683 = vlaneseq
        %v1684 = vshrl.u32 %v1683, 7
        %v1685 = vsub.s32 %v1682, %v1684
        %v1686 = vrot.slane %v1672, %v1685
        %v1687 = vcombine.low %v1631, %v1663
        %v1688 = vcombine.high %v1631, %v1663
        %v1689 = vcombine.low %v1638, %v1670
        %v1690 = vcombine.high %v1638, %v1670
        %v1691 = vcombine.low %v1647, %v1679
        %v1692 = vcombine.high %v1647, %v1679
        %v1693 = vcombine.low %v1654, %v1686
        %v1694 = vcombine.high %v1654, %v1686
        %v1695 = vcombine.low %v1196, %v1222
        %v1696 = vcombine.high %v1196, %v1222
        %v1698 = vunpack.c.l.s4 1983009808
        %v1699 = vunpack.c.0.s8 %v1698
        %v1700 = vlaneseq
        %v1701 = vshrl.u32 %v1700, 7
        %v1702 = vsub.s32 %v1699, %v1701
        %v1703 = vrot.slane %v1695, %v1702
        %v1705 = vunpack.c.l.s4 1983009808
        %v1706 = vunpack.c.0.s8 %v1705
        %v1707 = vlaneseq
        %v1708 = vshrl.u32 %v1707, 7
        %v1709 = vsub.s32 %v1706, %v1708
        %v1710 = vrot.slane %v1696, %v1709
        %v1711 = vcombine.low %v1210, %v1234
        %v1712 = vcombine.high %v1210, %v1234
        %v1714 = vunpack.c.l.s4 1983009808
        %v1715 = vunpack.c.0.s8 %v1714
        %v1716 = vlaneseq
        %v1717 = vshrl.u32 %v1716, 7
        %v1718 = vsub.s32 %v1715, %v1717
        %v1719 = vrot.slane %v1711, %v1718
        %v1721 = vunpack.c.l.s4 1983009808
        %v1722 = vunpack.c.0.s8 %v1721
        %v1723 = vlaneseq
        %v1724 = vshrl.u32 %v1723, 7
        %v1725 = vsub.s32 %v1722, %v1724
        %v1726 = vrot.slane %v1712, %v1725
        %v1727 = vcombine.low %v1246, %v1270
        %v1728 = vcombine.high %v1246, %v1270
        %v1730 = vunpack.c.l.s4 1983009808
        %v1731 = vunpack.c.0.s8 %v1730
        %v1732 = vlaneseq
        %v1733 = vshrl.u32 %v1732, 7
        %v1734 = vsub.s32 %v1731, %v1733
        %v1735 = vrot.slane %v1727, %v1734
        %v1737 = vunpack.c.l.s4 1983009808
        %v1738 = vunpack.c.0.s8 %v1737
        %v1739 = vlaneseq
        %v1740 = vshrl.u32 %v1739, 7
        %v1741 = vsub.s32 %v1738, %v1740
        %v1742 = vrot.slane %v1728, %v1741
        %v1743 = vcombine.low %v1258, %v1282
        %v1744 = vcombine.high %v1258, %v1282
        %v1746 = vunpack.c.l.s4 1983009808
        %v1747 = vunpack.c.0.s8 %v1746
        %v1748 = vlaneseq
        %v1749 = vshrl.u32 %v1748, 7
        %v1750 = vsub.s32 %v1747, %v1749
        %v1751 = vrot.slane %v1743, %v1750
        %v1753 = vunpack.c.l.s4 1983009808
        %v1754 = vunpack.c.0.s8 %v1753
        %v1755 = vlaneseq
        %v1756 = vshrl.u32 %v1755, 7
        %v1757 = vsub.s32 %v1754, %v1756
        %v1758 = vrot.slane %v1744, %v1757
        %v1759 = vcombine.low %v1703, %v1719
        %v1760 = vcombine.high %v1703, %v1719
        %v1762 = vunpack.c.l.s4 1934713408
        %v1763 = vunpack.c.0.s8 %v1762
        %v1764 = vlaneseq
        %v1765 = vshrl.u32 %v1764, 7
        %v1766 = vsub.s32 %v1763, %v1765
        %v1767 = vrot.slane %v1759, %v1766
        %v1769 = vunpack.c.l.s4 1934713408
        %v1770 = vunpack.c.0.s8 %v1769
        %v1771 = vlaneseq
        %v1772 = vshrl.u32 %v1771, 7
        %v1773 = vsub.s32 %v1770, %v1772
        %v1774 = vrot.slane %v1760, %v1773
        %v1775 = vcombine.low %v1710, %v1726
        %v1776 = vcombine.high %v1710, %v1726
        %v1778 = vunpack.c.l.s4 1934713408
        %v1779 = vunpack.c.0.s8 %v1778
        %v1780 = vlaneseq
        %v1781 = vshrl.u32 %v1780, 7
        %v1782 = vsub.s32 %v1779, %v1781
        %v1783 = vrot.slane %v1775, %v1782
        %v1785 = vunpack.c.l.s4 1934713408
        %v1786 = vunpack.c.0.s8 %v1785
        %v1787 = vlaneseq
        %v1788 = vshrl.u32 %v1787, 7
        %v1789 = vsub.s32 %v1786, %v1788
        %v1790 = vrot.slane %v1776, %v1789
        %v1791 = vcombine.low %v1735, %v1751
        %v1792 = vcombine.high %v1735, %v1751
        %v1794 = vunpack.c.l.s4 1934713408
        %v1795 = vunpack.c.0.s8 %v1794
        %v1796 = vlaneseq
        %v1797 = vshrl.u32 %v1796, 7
        %v1798 = vsub.s32 %v1795, %v1797
        %v1799 = vrot.slane %v1791, %v1798
        %v1801 = vunpack.c.l.s4 1934713408
        %v1802 = vunpack.c.0.s8 %v1801
        %v1803 = vlaneseq
        %v1804 = vshrl.u32 %v1803, 7
        %v1805 = vsub.s32 %v1802, %v1804
        %v1806 = vrot.slane %v1792, %v1805
        %v1807 = vcombine.low %v1742, %v1758
        %v1808 = vcombine.high %v1742, %v1758
        %v1810 = vunpack.c.l.s4 1934713408
        %v1811 = vunpack.c.0.s8 %v1810
        %v1812 = vlaneseq
        %v1813 = vshrl.u32 %v1812, 7
        %v1814 = vsub.s32 %v1811, %v1813
        %v1815 = vrot.slane %v1807, %v1814
        %v1817 = vunpack.c.l.s4 1934713408
        %v1818 = vunpack.c.0.s8 %v1817
        %v1819 = vlaneseq
        %v1820 = vshrl.u32 %v1819, 7
        %v1821 = vsub.s32 %v1818, %v1820
        %v1822 = vrot.slane %v1808, %v1821
        %v1823 = vcombine.low %v1767, %v1799
        %v1824 = vcombine.high %v1767, %v1799
        %v1825 = vcombine.low %v1774, %v1806
        %v1826 = vcombine.high %v1774, %v1806
        %v1827 = vcombine.low %v1783, %v1815
        %v1828 = vcombine.high %v1783, %v1815
        %v1829 = vcombine.low %v1790, %v1822
        %v1830 = vcombine.high %v1790, %v1822
        %1831 = vmatprep.subr.mxu0 0.0
        %1832 = vmatpush1.msra.mxu0 0.0
        %1833 = vmatprep.subr.mxu0 0.0
        %1834 = vmatpush1.msra.mxu0 0.0
        %1835 = vmatprep.subr.mxu0 0.0
        %1836 = vmatpush1.msra.mxu0 0.0
        %1837 = vmatprep.subr.mxu0 0.0
        %1838 = vmatpush1.msra.mxu0 0.0
        %1839 = vmatprep.subr.mxu0 0.0
        %1840 = vmatpush1.msra.mxu0 0.0
        %1841 = vmatprep.subr.mxu0 0.0
        %1842 = vmatpush1.msra.mxu0 0.0
        %1843 = vmatprep.subr.mxu0 0.0
        %1844 = vmatpush1.msra.mxu0 0.0
        %1845 = vmatprep.subr.mxu0 0.0
        %1846 = vmatpush1.msra.mxu0 0.0
        %1847 = vmatprep.subr.mxu0 0.0
        %1848 = vmatpush1.msra.mxu0 0.0
        %1849 = vmatprep.subr.mxu0 0.0
        %1850 = vmatpush1.msra.mxu0 0.0
        %1851 = vmatprep.subr.mxu0 0.0
        %1852 = vmatpush1.msra.mxu0 0.0
        %1853 = vmatprep.subr.mxu0 0.0
        %1854 = vmatpush1.msra.mxu0 0.0
        %1855 = vmatprep.subr.mxu0 0.0
        %1856 = vmatpush1.msra.mxu0 0.0
        %1857 = vmatprep.subr.mxu0 0.0
        %1858 = vmatpush1.msra.mxu0 0.0
        %1859 = vmatprep.subr.mxu0 0.0
        %1860 = vmatpush1.msra.mxu0 %v372
        %1861 = vmatprep.subr.mxu0 0.0
        %1862 = vmatpush1.msra.mxu0 %v367
        %1863 = vmatprep.subr.mxu0 0.0
        %1864 = vmatpush2.msra.mxu0 0.0
        %1865 = vmatprep.subr.mxu0 0.0
        %1866 = vmatpush2.msra.mxu0 0.0
        %1867 = vmatprep.subr.mxu0 0.0
        %1868 = vmatpush2.msra.mxu0 0.0
        %1869 = vmatprep.subr.mxu0 0.0
        %1870 = vmatpush2.msra.mxu0 0.0
        %1871 = vmatprep.subr.mxu0 0.0
        %1872 = vmatpush2.msra.mxu0 0.0
        %1873 = vmatprep.subr.mxu0 0.0
        %1874 = vmatpush2.msra.mxu0 0.0
        %1875 = vmatprep.subr.mxu0 0.0
        %1876 = vmatpush2.msra.mxu0 0.0
        %1877 = vmatprep.subr.mxu0 0.0
        %1878 = vmatpush2.msra.mxu0 0.0
        %1879 = vmatprep.subr.mxu0 0.0
        %1880 = vmatpush2.msra.mxu0 0.0
        %1881 = vmatprep.subr.mxu0 0.0
        %1882 = vmatpush2.msra.mxu0 0.0
        %1883 = vmatprep.subr.mxu0 0.0
        %1884 = vmatpush2.msra.mxu0 0.0
        %1885 = vmatprep.subr.mxu0 0.0
        %1886 = vmatpush2.msra.mxu0 0.0
        %1887 = vmatprep.subr.mxu0 0.0
        %1888 = vmatpush2.msra.mxu0 0.0
        %1889 = vmatprep.subr.mxu0 0.0
        %1890 = vmatpush2.msra.mxu0 0.0
        %1891 = vmatprep.subr.mxu0 0.0
        %1892 = vmatpush2.msra.mxu0 0.0
        %1893 = vmatprep.subr.mxu0 0.0
        %1894 = vmatpush2.msra.mxu0 0.0
        %1895 = vmatprep.mubr.f32.mxu0 0.0
        %1896 = vmatmul.mubr.f32.gmra.mxu0 %v386
        %v1897 = vpop.f32.mrf.mxu0
        %v1898 = vadd.f32 0.0, %v1897
        %v1899 = vpop.f32.mrf.mxu0
        %1900 = vmatprep.mubr.f32.mxu0 0.0
        %1901 = vmatmul.mubr.f32.gmra.mxu0 %v389
        %v1902 = vpop.f32.mrf.mxu0
        %v1903 = vadd.f32 0.0, %v1902
        %v1904 = vpop.f32.mrf.mxu0
        %1905 = vmatprep.mubr.f32.mxu0 0.0
        %1906 = vmatmul.mubr.f32.gmra.mxu0 %v392
        %v1907 = vpop.f32.mrf.mxu0
        %v1908 = vadd.f32 0.0, %v1907
        %v1909 = vpop.f32.mrf.mxu0
        %1910 = vmatprep.mubr.f32.mxu0 0.0
        %1911 = vmatmul.mubr.f32.gmra.mxu0 %v395
        %v1912 = vpop.f32.mrf.mxu0
        %v1913 = vadd.f32 0.0, %v1912
        %v1914 = vpop.f32.mrf.mxu0
        %1915 = vdwg.mxu0
        %1920 = vrot.lane.b32.xlu0 %v1898, 124
        %v1921 = vpop.permute.xlu0 %1920
        %1922 = vrot.lane.b32.xlu0 %v1903, 124
        %v1923 = vpop.permute.xlu0 %1922
        %1924 = vrot.lane.b32.xlu0 %v1908, 124
        %v1925 = vpop.permute.xlu0 %1924
        %1926 = vrot.lane.b32.xlu0 %v1913, 124
        %v1927 = vpop.permute.xlu0 %1926
        %1932 = vrot.lane.b32.xlu0 %v1898, 120
        %v1933 = vpop.permute.xlu0 %1932
        %1934 = vrot.lane.b32.xlu0 %v1903, 120
        %v1935 = vpop.permute.xlu0 %1934
        %1936 = vrot.lane.b32.xlu0 %v1908, 120
        %v1937 = vpop.permute.xlu0 %1936
        %1938 = vrot.lane.b32.xlu0 %v1913, 120
        %v1939 = vpop.permute.xlu0 %1938
        %1944 = vrot.lane.b32.xlu0 %v1898, 116
        %v1945 = vpop.permute.xlu0 %1944
        %1946 = vrot.lane.b32.xlu0 %v1903, 116
        %v1947 = vpop.permute.xlu0 %1946
        %1948 = vrot.lane.b32.xlu0 %v1908, 116
        %v1949 = vpop.permute.xlu0 %1948
        %1950 = vrot.lane.b32.xlu0 %v1913, 116
        %v1951 = vpop.permute.xlu0 %1950
        %1956 = vrot.lane.b32.xlu0 %v1898, 112
        %v1957 = vpop.permute.xlu0 %1956
        %1958 = vrot.lane.b32.xlu0 %v1903, 112
        %v1959 = vpop.permute.xlu0 %1958
        %1960 = vrot.lane.b32.xlu0 %v1908, 112
        %v1961 = vpop.permute.xlu0 %1960
        %1962 = vrot.lane.b32.xlu0 %v1913, 112
        %v1963 = vpop.permute.xlu0 %1962
        %1968 = vrot.lane.b32.xlu0 %v1898, 108
        %v1969 = vpop.permute.xlu0 %1968
        %1970 = vrot.lane.b32.xlu0 %v1903, 108
        %v1971 = vpop.permute.xlu0 %1970
        %1972 = vrot.lane.b32.xlu0 %v1908, 108
        %v1973 = vpop.permute.xlu0 %1972
        %1974 = vrot.lane.b32.xlu0 %v1913, 108
        %v1975 = vpop.permute.xlu0 %1974
        %1980 = vrot.lane.b32.xlu0 %v1898, 104
        %v1981 = vpop.permute.xlu0 %1980
        %1982 = vrot.lane.b32.xlu0 %v1903, 104
        %v1983 = vpop.permute.xlu0 %1982
        %1984 = vrot.lane.b32.xlu0 %v1908, 104
        %v1985 = vpop.permute.xlu0 %1984
        %1986 = vrot.lane.b32.xlu0 %v1913, 104
        %v1987 = vpop.permute.xlu0 %1986
        %1992 = vrot.lane.b32.xlu0 %v1898, 100
        %v1993 = vpop.permute.xlu0 %1992
        %1994 = vrot.lane.b32.xlu0 %v1903, 100
        %v1995 = vpop.permute.xlu0 %1994
        %1996 = vrot.lane.b32.xlu0 %v1908, 100
        %v1997 = vpop.permute.xlu0 %1996
        %1998 = vrot.lane.b32.xlu0 %v1913, 100
        %v1999 = vpop.permute.xlu0 %1998
        %v2004 = vcombine.low %v1898, %v1933
        %v2005 = vcombine.high %v1898, %v1933
        %v2007 = vunpack.c.l.s4 1983009808
        %v2008 = vunpack.c.0.s8 %v2007
        %v2009 = vlaneseq
        %v2010 = vshrl.u32 %v2009, 7
        %v2011 = vsub.s32 %v2008, %v2010
        %v2012 = vrot.slane %v2004, %v2011
        %v2014 = vunpack.c.l.s4 1983009808
        %v2015 = vunpack.c.0.s8 %v2014
        %v2016 = vlaneseq
        %v2017 = vshrl.u32 %v2016, 7
        %v2018 = vsub.s32 %v2015, %v2017
        %v2019 = vrot.slane %v2005, %v2018
        %v2020 = vcombine.low %v1921, %v1945
        %v2021 = vcombine.high %v1921, %v1945
        %v2023 = vunpack.c.l.s4 1983009808
        %v2024 = vunpack.c.0.s8 %v2023
        %v2025 = vlaneseq
        %v2026 = vshrl.u32 %v2025, 7
        %v2027 = vsub.s32 %v2024, %v2026
        %v2028 = vrot.slane %v2020, %v2027
        %v2030 = vunpack.c.l.s4 1983009808
        %v2031 = vunpack.c.0.s8 %v2030
        %v2032 = vlaneseq
        %v2033 = vshrl.u32 %v2032, 7
        %v2034 = vsub.s32 %v2031, %v2033
        %v2035 = vrot.slane %v2021, %v2034
        %v2036 = vcombine.low %v1957, %v1981
        %v2037 = vcombine.high %v1957, %v1981
        %v2039 = vunpack.c.l.s4 1983009808
        %v2040 = vunpack.c.0.s8 %v2039
        %v2041 = vlaneseq
        %v2042 = vshrl.u32 %v2041, 7
        %v2043 = vsub.s32 %v2040, %v2042
        %v2044 = vrot.slane %v2036, %v2043
        %v2046 = vunpack.c.l.s4 1983009808
        %v2047 = vunpack.c.0.s8 %v2046
        %v2048 = vlaneseq
        %v2049 = vshrl.u32 %v2048, 7
        %v2050 = vsub.s32 %v2047, %v2049
        %v2051 = vrot.slane %v2037, %v2050
        %v2052 = vcombine.low %v1969, %v1993
        %v2053 = vcombine.high %v1969, %v1993
        %v2055 = vunpack.c.l.s4 1983009808
        %v2056 = vunpack.c.0.s8 %v2055
        %v2057 = vlaneseq
        %v2058 = vshrl.u32 %v2057, 7
        %v2059 = vsub.s32 %v2056, %v2058
        %v2060 = vrot.slane %v2052, %v2059
        %v2062 = vunpack.c.l.s4 1983009808
        %v2063 = vunpack.c.0.s8 %v2062
        %v2064 = vlaneseq
        %v2065 = vshrl.u32 %v2064, 7
        %v2066 = vsub.s32 %v2063, %v2065
        %v2067 = vrot.slane %v2053, %v2066
        %v2068 = vcombine.low %v2012, %v2028
        %v2069 = vcombine.high %v2012, %v2028
        %v2071 = vunpack.c.l.s4 1934713408
        %v2072 = vunpack.c.0.s8 %v2071
        %v2073 = vlaneseq
        %v2074 = vshrl.u32 %v2073, 7
        %v2075 = vsub.s32 %v2072, %v2074
        %v2076 = vrot.slane %v2068, %v2075
        %v2078 = vunpack.c.l.s4 1934713408
        %v2079 = vunpack.c.0.s8 %v2078
        %v2080 = vlaneseq
        %v2081 = vshrl.u32 %v2080, 7
        %v2082 = vsub.s32 %v2079, %v2081
        %v2083 = vrot.slane %v2069, %v2082
        %v2084 = vcombine.low %v2019, %v2035
        %v2085 = vcombine.high %v2019, %v2035
        %v2087 = vunpack.c.l.s4 1934713408
        %v2088 = vunpack.c.0.s8 %v2087
        %v2089 = vlaneseq
        %v2090 = vshrl.u32 %v2089, 7
        %v2091 = vsub.s32 %v2088, %v2090
        %v2092 = vrot.slane %v2084, %v2091
        %v2094 = vunpack.c.l.s4 1934713408
        %v2095 = vunpack.c.0.s8 %v2094
        %v2096 = vlaneseq
        %v2097 = vshrl.u32 %v2096, 7
        %v2098 = vsub.s32 %v2095, %v2097
        %v2099 = vrot.slane %v2085, %v2098
        %v2100 = vcombine.low %v2044, %v2060
        %v2101 = vcombine.high %v2044, %v2060
        %v2103 = vunpack.c.l.s4 1934713408
        %v2104 = vunpack.c.0.s8 %v2103
        %v2105 = vlaneseq
        %v2106 = vshrl.u32 %v2105, 7
        %v2107 = vsub.s32 %v2104, %v2106
        %v2108 = vrot.slane %v2100, %v2107
        %v2110 = vunpack.c.l.s4 1934713408
        %v2111 = vunpack.c.0.s8 %v2110
        %v2112 = vlaneseq
        %v2113 = vshrl.u32 %v2112, 7
        %v2114 = vsub.s32 %v2111, %v2113
        %v2115 = vrot.slane %v2101, %v2114
        %v2116 = vcombine.low %v2051, %v2067
        %v2117 = vcombine.high %v2051, %v2067
        %v2119 = vunpack.c.l.s4 1934713408
        %v2120 = vunpack.c.0.s8 %v2119
        %v2121 = vlaneseq
        %v2122 = vshrl.u32 %v2121, 7
        %v2123 = vsub.s32 %v2120, %v2122
        %v2124 = vrot.slane %v2116, %v2123
        %v2126 = vunpack.c.l.s4 1934713408
        %v2127 = vunpack.c.0.s8 %v2126
        %v2128 = vlaneseq
        %v2129 = vshrl.u32 %v2128, 7
        %v2130 = vsub.s32 %v2127, %v2129
        %v2131 = vrot.slane %v2117, %v2130
        %v2132 = vcombine.low %v2076, %v2108
        %v2133 = vcombine.high %v2076, %v2108
        %v2134 = vcombine.low %v2083, %v2115
        %v2135 = vcombine.high %v2083, %v2115
        %v2136 = vcombine.low %v2092, %v2124
        %v2137 = vcombine.high %v2092, %v2124
        %v2138 = vcombine.low %v2099, %v2131
        %v2139 = vcombine.high %v2099, %v2131
        %v2140 = vcombine.low %v1903, %v1935
        %v2141 = vcombine.high %v1903, %v1935
        %v2143 = vunpack.c.l.s4 1983009808
        %v2144 = vunpack.c.0.s8 %v2143
        %v2145 = vlaneseq
        %v2146 = vshrl.u32 %v2145, 7
        %v2147 = vsub.s32 %v2144, %v2146
        %v2148 = vrot.slane %v2140, %v2147
        %v2150 = vunpack.c.l.s4 1983009808
        %v2151 = vunpack.c.0.s8 %v2150
        %v2152 = vlaneseq
        %v2153 = vshrl.u32 %v2152, 7
        %v2154 = vsub.s32 %v2151, %v2153
        %v2155 = vrot.slane %v2141, %v2154
        %v2156 = vcombine.low %v1923, %v1947
        %v2157 = vcombine.high %v1923, %v1947
        %v2159 = vunpack.c.l.s4 1983009808
        %v2160 = vunpack.c.0.s8 %v2159
        %v2161 = vlaneseq
        %v2162 = vshrl.u32 %v2161, 7
        %v2163 = vsub.s32 %v2160, %v2162
        %v2164 = vrot.slane %v2156, %v2163
        %v2166 = vunpack.c.l.s4 1983009808
        %v2167 = vunpack.c.0.s8 %v2166
        %v2168 = vlaneseq
        %v2169 = vshrl.u32 %v2168, 7
        %v2170 = vsub.s32 %v2167, %v2169
        %v2171 = vrot.slane %v2157, %v2170
        %v2172 = vcombine.low %v1959, %v1983
        %v2173 = vcombine.high %v1959, %v1983
        %v2175 = vunpack.c.l.s4 1983009808
        %v2176 = vunpack.c.0.s8 %v2175
        %v2177 = vlaneseq
        %v2178 = vshrl.u32 %v2177, 7
        %v2179 = vsub.s32 %v2176, %v2178
        %v2180 = vrot.slane %v2172, %v2179
        %v2182 = vunpack.c.l.s4 1983009808
        %v2183 = vunpack.c.0.s8 %v2182
        %v2184 = vlaneseq
        %v2185 = vshrl.u32 %v2184, 7
        %v2186 = vsub.s32 %v2183, %v2185
        %v2187 = vrot.slane %v2173, %v2186
        %v2188 = vcombine.low %v1971, %v1995
        %v2189 = vcombine.high %v1971, %v1995
        %v2191 = vunpack.c.l.s4 1983009808
        %v2192 = vunpack.c.0.s8 %v2191
        %v2193 = vlaneseq
        %v2194 = vshrl.u32 %v2193, 7
        %v2195 = vsub.s32 %v2192, %v2194
        %v2196 = vrot.slane %v2188, %v2195
        %v2198 = vunpack.c.l.s4 1983009808
        %v2199 = vunpack.c.0.s8 %v2198
        %v2200 = vlaneseq
        %v2201 = vshrl.u32 %v2200, 7
        %v2202 = vsub.s32 %v2199, %v2201
        %v2203 = vrot.slane %v2189, %v2202
        %v2204 = vcombine.low %v2148, %v2164
        %v2205 = vcombine.high %v2148, %v2164
        %v2207 = vunpack.c.l.s4 1934713408
        %v2208 = vunpack.c.0.s8 %v2207
        %v2209 = vlaneseq
        %v2210 = vshrl.u32 %v2209, 7
        %v2211 = vsub.s32 %v2208, %v2210
        %v2212 = vrot.slane %v2204, %v2211
        %v2214 = vunpack.c.l.s4 1934713408
        %v2215 = vunpack.c.0.s8 %v2214
        %v2216 = vlaneseq
        %v2217 = vshrl.u32 %v2216, 7
        %v2218 = vsub.s32 %v2215, %v2217
        %v2219 = vrot.slane %v2205, %v2218
        %v2220 = vcombine.low %v2155, %v2171
        %v2221 = vcombine.high %v2155, %v2171
        %v2223 = vunpack.c.l.s4 1934713408
        %v2224 = vunpack.c.0.s8 %v2223
        %v2225 = vlaneseq
        %v2226 = vshrl.u32 %v2225, 7
        %v2227 = vsub.s32 %v2224, %v2226
        %v2228 = vrot.slane %v2220, %v2227
        %v2230 = vunpack.c.l.s4 1934713408
        %v2231 = vunpack.c.0.s8 %v2230
        %v2232 = vlaneseq
        %v2233 = vshrl.u32 %v2232, 7
        %v2234 = vsub.s32 %v2231, %v2233
        %v2235 = vrot.slane %v2221, %v2234
        %v2236 = vcombine.low %v2180, %v2196
        %v2237 = vcombine.high %v2180, %v2196
        %v2239 = vunpack.c.l.s4 1934713408
        %v2240 = vunpack.c.0.s8 %v2239
        %v2241 = vlaneseq
        %v2242 = vshrl.u32 %v2241, 7
        %v2243 = vsub.s32 %v2240, %v2242
        %v2244 = vrot.slane %v2236, %v2243
        %v2246 = vunpack.c.l.s4 1934713408
        %v2247 = vunpack.c.0.s8 %v2246
        %v2248 = vlaneseq
        %v2249 = vshrl.u32 %v2248, 7
        %v2250 = vsub.s32 %v2247, %v2249
        %v2251 = vrot.slane %v2237, %v2250
        %v2252 = vcombine.low %v2187, %v2203
        %v2253 = vcombine.high %v2187, %v2203
        %v2255 = vunpack.c.l.s4 1934713408
        %v2256 = vunpack.c.0.s8 %v2255
        %v2257 = vlaneseq
        %v2258 = vshrl.u32 %v2257, 7
        %v2259 = vsub.s32 %v2256, %v2258
        %v2260 = vrot.slane %v2252, %v2259
        %v2262 = vunpack.c.l.s4 1934713408
        %v2263 = vunpack.c.0.s8 %v2262
        %v2264 = vlaneseq
        %v2265 = vshrl.u32 %v2264, 7
        %v2266 = vsub.s32 %v2263, %v2265
        %v2267 = vrot.slane %v2253, %v2266
        %v2268 = vcombine.low %v2212, %v2244
        %v2269 = vcombine.high %v2212, %v2244
        %v2270 = vcombine.low %v2219, %v2251
        %v2271 = vcombine.high %v2219, %v2251
        %v2272 = vcombine.low %v2228, %v2260
        %v2273 = vcombine.high %v2228, %v2260
        %v2274 = vcombine.low %v2235, %v2267
        %v2275 = vcombine.high %v2235, %v2267
        %v2276 = vcombine.low %v1908, %v1937
        %v2277 = vcombine.high %v1908, %v1937
        %v2279 = vunpack.c.l.s4 1983009808
        %v2280 = vunpack.c.0.s8 %v2279
        %v2281 = vlaneseq
        %v2282 = vshrl.u32 %v2281, 7
        %v2283 = vsub.s32 %v2280, %v2282
        %v2284 = vrot.slane %v2276, %v2283
        %v2286 = vunpack.c.l.s4 1983009808
        %v2287 = vunpack.c.0.s8 %v2286
        %v2288 = vlaneseq
        %v2289 = vshrl.u32 %v2288, 7
        %v2290 = vsub.s32 %v2287, %v2289
        %v2291 = vrot.slane %v2277, %v2290
        %v2292 = vcombine.low %v1925, %v1949
        %v2293 = vcombine.high %v1925, %v1949
        %v2295 = vunpack.c.l.s4 1983009808
        %v2296 = vunpack.c.0.s8 %v2295
        %v2297 = vlaneseq
        %v2298 = vshrl.u32 %v2297, 7
        %v2299 = vsub.s32 %v2296, %v2298
        %v2300 = vrot.slane %v2292, %v2299
        %v2302 = vunpack.c.l.s4 1983009808
        %v2303 = vunpack.c.0.s8 %v2302
        %v2304 = vlaneseq
        %v2305 = vshrl.u32 %v2304, 7
        %v2306 = vsub.s32 %v2303, %v2305
        %v2307 = vrot.slane %v2293, %v2306
        %v2308 = vcombine.low %v1961, %v1985
        %v2309 = vcombine.high %v1961, %v1985
        %v2311 = vunpack.c.l.s4 1983009808
        %v2312 = vunpack.c.0.s8 %v2311
        %v2313 = vlaneseq
        %v2314 = vshrl.u32 %v2313, 7
        %v2315 = vsub.s32 %v2312, %v2314
        %v2316 = vrot.slane %v2308, %v2315
        %v2318 = vunpack.c.l.s4 1983009808
        %v2319 = vunpack.c.0.s8 %v2318
        %v2320 = vlaneseq
        %v2321 = vshrl.u32 %v2320, 7
        %v2322 = vsub.s32 %v2319, %v2321
        %v2323 = vrot.slane %v2309, %v2322
        %v2324 = vcombine.low %v1973, %v1997
        %v2325 = vcombine.high %v1973, %v1997
        %v2327 = vunpack.c.l.s4 1983009808
        %v2328 = vunpack.c.0.s8 %v2327
        %v2329 = vlaneseq
        %v2330 = vshrl.u32 %v2329, 7
        %v2331 = vsub.s32 %v2328, %v2330
        %v2332 = vrot.slane %v2324, %v2331
        %v2334 = vunpack.c.l.s4 1983009808
        %v2335 = vunpack.c.0.s8 %v2334
        %v2336 = vlaneseq
        %v2337 = vshrl.u32 %v2336, 7
        %v2338 = vsub.s32 %v2335, %v2337
        %v2339 = vrot.slane %v2325, %v2338
        %v2340 = vcombine.low %v2284, %v2300
        %v2341 = vcombine.high %v2284, %v2300
        %v2343 = vunpack.c.l.s4 1934713408
        %v2344 = vunpack.c.0.s8 %v2343
        %v2345 = vlaneseq
        %v2346 = vshrl.u32 %v2345, 7
        %v2347 = vsub.s32 %v2344, %v2346
        %v2348 = vrot.slane %v2340, %v2347
        %v2350 = vunpack.c.l.s4 1934713408
        %v2351 = vunpack.c.0.s8 %v2350
        %v2352 = vlaneseq
        %v2353 = vshrl.u32 %v2352, 7
        %v2354 = vsub.s32 %v2351, %v2353
        %v2355 = vrot.slane %v2341, %v2354
        %v2356 = vcombine.low %v2291, %v2307
        %v2357 = vcombine.high %v2291, %v2307
        %v2359 = vunpack.c.l.s4 1934713408
        %v2360 = vunpack.c.0.s8 %v2359
        %v2361 = vlaneseq
        %v2362 = vshrl.u32 %v2361, 7
        %v2363 = vsub.s32 %v2360, %v2362
        %v2364 = vrot.slane %v2356, %v2363
        %v2366 = vunpack.c.l.s4 1934713408
        %v2367 = vunpack.c.0.s8 %v2366
        %v2368 = vlaneseq
        %v2369 = vshrl.u32 %v2368, 7
        %v2370 = vsub.s32 %v2367, %v2369
        %v2371 = vrot.slane %v2357, %v2370
        %v2372 = vcombine.low %v2316, %v2332
        %v2373 = vcombine.high %v2316, %v2332
        %v2375 = vunpack.c.l.s4 1934713408
        %v2376 = vunpack.c.0.s8 %v2375
        %v2377 = vlaneseq
        %v2378 = vshrl.u32 %v2377, 7
        %v2379 = vsub.s32 %v2376, %v2378
        %v2380 = vrot.slane %v2372, %v2379
        %v2382 = vunpack.c.l.s4 1934713408
        %v2383 = vunpack.c.0.s8 %v2382
        %v2384 = vlaneseq
        %v2385 = vshrl.u32 %v2384, 7
        %v2386 = vsub.s32 %v2383, %v2385
        %v2387 = vrot.slane %v2373, %v2386
        %v2388 = vcombine.low %v2323, %v2339
        %v2389 = vcombine.high %v2323, %v2339
        %v2391 = vunpack.c.l.s4 1934713408
        %v2392 = vunpack.c.0.s8 %v2391
        %v2393 = vlaneseq
        %v2394 = vshrl.u32 %v2393, 7
        %v2395 = vsub.s32 %v2392, %v2394
        %v2396 = vrot.slane %v2388, %v2395
        %v2398 = vunpack.c.l.s4 1934713408
        %v2399 = vunpack.c.0.s8 %v2398
        %v2400 = vlaneseq
        %v2401 = vshrl.u32 %v2400, 7
        %v2402 = vsub.s32 %v2399, %v2401
        %v2403 = vrot.slane %v2389, %v2402
        %v2404 = vcombine.low %v2348, %v2380
        %v2405 = vcombine.high %v2348, %v2380
        %v2406 = vcombine.low %v2355, %v2387
        %v2407 = vcombine.high %v2355, %v2387
        %v2408 = vcombine.low %v2364, %v2396
        %v2409 = vcombine.high %v2364, %v2396
        %v2410 = vcombine.low %v2371, %v2403
        %v2411 = vcombine.high %v2371, %v2403
        %v2412 = vcombine.low %v1913, %v1939
        %v2413 = vcombine.high %v1913, %v1939
        %v2415 = vunpack.c.l.s4 1983009808
        %v2416 = vunpack.c.0.s8 %v2415
        %v2417 = vlaneseq
        %v2418 = vshrl.u32 %v2417, 7
        %v2419 = vsub.s32 %v2416, %v2418
        %v2420 = vrot.slane %v2412, %v2419
        %v2422 = vunpack.c.l.s4 1983009808
        %v2423 = vunpack.c.0.s8 %v2422
        %v2424 = vlaneseq
        %v2425 = vshrl.u32 %v2424, 7
        %v2426 = vsub.s32 %v2423, %v2425
        %v2427 = vrot.slane %v2413, %v2426
        %v2428 = vcombine.low %v1927, %v1951
        %v2429 = vcombine.high %v1927, %v1951
        %v2431 = vunpack.c.l.s4 1983009808
        %v2432 = vunpack.c.0.s8 %v2431
        %v2433 = vlaneseq
        %v2434 = vshrl.u32 %v2433, 7
        %v2435 = vsub.s32 %v2432, %v2434
        %v2436 = vrot.slane %v2428, %v2435
        %v2438 = vunpack.c.l.s4 1983009808
        %v2439 = vunpack.c.0.s8 %v2438
        %v2440 = vlaneseq
        %v2441 = vshrl.u32 %v2440, 7
        %v2442 = vsub.s32 %v2439, %v2441
        %v2443 = vrot.slane %v2429, %v2442
        %v2444 = vcombine.low %v1963, %v1987
        %v2445 = vcombine.high %v1963, %v1987
        %v2447 = vunpack.c.l.s4 1983009808
        %v2448 = vunpack.c.0.s8 %v2447
        %v2449 = vlaneseq
        %v2450 = vshrl.u32 %v2449, 7
        %v2451 = vsub.s32 %v2448, %v2450
        %v2452 = vrot.slane %v2444, %v2451
        %v2454 = vunpack.c.l.s4 1983009808
        %v2455 = vunpack.c.0.s8 %v2454
        %v2456 = vlaneseq
        %v2457 = vshrl.u32 %v2456, 7
        %v2458 = vsub.s32 %v2455, %v2457
        %v2459 = vrot.slane %v2445, %v2458
        %v2460 = vcombine.low %v1975, %v1999
        %v2461 = vcombine.high %v1975, %v1999
        %v2463 = vunpack.c.l.s4 1983009808
        %v2464 = vunpack.c.0.s8 %v2463
        %v2465 = vlaneseq
        %v2466 = vshrl.u32 %v2465, 7
        %v2467 = vsub.s32 %v2464, %v2466
        %v2468 = vrot.slane %v2460, %v2467
        %v2470 = vunpack.c.l.s4 1983009808
        %v2471 = vunpack.c.0.s8 %v2470
        %v2472 = vlaneseq
        %v2473 = vshrl.u32 %v2472, 7
        %v2474 = vsub.s32 %v2471, %v2473
        %v2475 = vrot.slane %v2461, %v2474
        %v2476 = vcombine.low %v2420, %v2436
        %v2477 = vcombine.high %v2420, %v2436
        %v2479 = vunpack.c.l.s4 1934713408
        %v2480 = vunpack.c.0.s8 %v2479
        %v2481 = vlaneseq
        %v2482 = vshrl.u32 %v2481, 7
        %v2483 = vsub.s32 %v2480, %v2482
        %v2484 = vrot.slane %v2476, %v2483
        %v2486 = vunpack.c.l.s4 1934713408
        %v2487 = vunpack.c.0.s8 %v2486
        %v2488 = vlaneseq
        %v2489 = vshrl.u32 %v2488, 7
        %v2490 = vsub.s32 %v2487, %v2489
        %v2491 = vrot.slane %v2477, %v2490
        %v2492 = vcombine.low %v2427, %v2443
        %v2493 = vcombine.high %v2427, %v2443
        %v2495 = vunpack.c.l.s4 1934713408
        %v2496 = vunpack.c.0.s8 %v2495
        %v2497 = vlaneseq
        %v2498 = vshrl.u32 %v2497, 7
        %v2499 = vsub.s32 %v2496, %v2498
        %v2500 = vrot.slane %v2492, %v2499
        %v2502 = vunpack.c.l.s4 1934713408
        %v2503 = vunpack.c.0.s8 %v2502
        %v2504 = vlaneseq
        %v2505 = vshrl.u32 %v2504, 7
        %v2506 = vsub.s32 %v2503, %v2505
        %v2507 = vrot.slane %v2493, %v2506
        %v2508 = vcombine.low %v2452, %v2468
        %v2509 = vcombine.high %v2452, %v2468
        %v2511 = vunpack.c.l.s4 1934713408
        %v2512 = vunpack.c.0.s8 %v2511
        %v2513 = vlaneseq
        %v2514 = vshrl.u32 %v2513, 7
        %v2515 = vsub.s32 %v2512, %v2514
        %v2516 = vrot.slane %v2508, %v2515
        %v2518 = vunpack.c.l.s4 1934713408
        %v2519 = vunpack.c.0.s8 %v2518
        %v2520 = vlaneseq
        %v2521 = vshrl.u32 %v2520, 7
        %v2522 = vsub.s32 %v2519, %v2521
        %v2523 = vrot.slane %v2509, %v2522
        %v2524 = vcombine.low %v2459, %v2475
        %v2525 = vcombine.high %v2459, %v2475
        %v2527 = vunpack.c.l.s4 1934713408
        %v2528 = vunpack.c.0.s8 %v2527
        %v2529 = vlaneseq
        %v2530 = vshrl.u32 %v2529, 7
        %v2531 = vsub.s32 %v2528, %v2530
        %v2532 = vrot.slane %v2524, %v2531
        %v2534 = vunpack.c.l.s4 1934713408
        %v2535 = vunpack.c.0.s8 %v2534
        %v2536 = vlaneseq
        %v2537 = vshrl.u32 %v2536, 7
        %v2538 = vsub.s32 %v2535, %v2537
        %v2539 = vrot.slane %v2525, %v2538
        %v2540 = vcombine.low %v2484, %v2516
        %v2541 = vcombine.high %v2484, %v2516
        %v2542 = vcombine.low %v2491, %v2523
        %v2543 = vcombine.high %v2491, %v2523
        %v2544 = vcombine.low %v2500, %v2532
        %v2545 = vcombine.high %v2500, %v2532
        %v2546 = vcombine.low %v2507, %v2539
        %v2547 = vcombine.high %v2507, %v2539
        %2548 = vmatprep.subr.mxu0 0.0
        %2549 = vmatpush1.msra.mxu0 0.0
        %2550 = vmatprep.subr.mxu0 0.0
        %2551 = vmatpush1.msra.mxu0 0.0
        %2552 = vmatprep.subr.mxu0 0.0
        %2553 = vmatpush1.msra.mxu0 0.0
        %2554 = vmatprep.subr.mxu0 0.0
        %2555 = vmatpush1.msra.mxu0 0.0
        %2556 = vmatprep.subr.mxu0 0.0
        %2557 = vmatpush1.msra.mxu0 0.0
        %2558 = vmatprep.subr.mxu0 0.0
        %2559 = vmatpush1.msra.mxu0 0.0
        %2560 = vmatprep.subr.mxu0 0.0
        %2561 = vmatpush1.msra.mxu0 0.0
        %2562 = vmatprep.subr.mxu0 0.0
        %2563 = vmatpush1.msra.mxu0 0.0
        %2564 = vmatprep.subr.mxu0 0.0
        %2565 = vmatpush1.msra.mxu0 0.0
        %2566 = vmatprep.subr.mxu0 0.0
        %2567 = vmatpush1.msra.mxu0 0.0
        %2568 = vmatprep.subr.mxu0 0.0
        %2569 = vmatpush1.msra.mxu0 0.0
        %2570 = vmatprep.subr.mxu0 0.0
        %2571 = vmatpush1.msra.mxu0 0.0
        %2572 = vmatprep.subr.mxu0 0.0
        %2573 = vmatpush1.msra.mxu0 0.0
        %2574 = vmatprep.subr.mxu0 0.0
        %2575 = vmatpush1.msra.mxu0 0.0
        %2576 = vmatprep.subr.mxu0 0.0
        %2577 = vmatpush1.msra.mxu0 %v382
        %2578 = vmatprep.subr.mxu0 0.0
        %2579 = vmatpush1.msra.mxu0 %v377
        %2580 = vmatprep.subr.mxu0 0.0
        %2581 = vmatpush2.msra.mxu0 0.0
        %2582 = vmatprep.subr.mxu0 0.0
        %2583 = vmatpush2.msra.mxu0 0.0
        %2584 = vmatprep.subr.mxu0 0.0
        %2585 = vmatpush2.msra.mxu0 0.0
        %2586 = vmatprep.subr.mxu0 0.0
        %2587 = vmatpush2.msra.mxu0 0.0
        %2588 = vmatprep.subr.mxu0 0.0
        %2589 = vmatpush2.msra.mxu0 0.0
        %2590 = vmatprep.subr.mxu0 0.0
        %2591 = vmatpush2.msra.mxu0 0.0
        %2592 = vmatprep.subr.mxu0 0.0
        %2593 = vmatpush2.msra.mxu0 0.0
        %2594 = vmatprep.subr.mxu0 0.0
        %2595 = vmatpush2.msra.mxu0 0.0
        %2596 = vmatprep.subr.mxu0 0.0
        %2597 = vmatpush2.msra.mxu0 0.0
        %2598 = vmatprep.subr.mxu0 0.0
        %2599 = vmatpush2.msra.mxu0 0.0
        %2600 = vmatprep.subr.mxu0 0.0
        %2601 = vmatpush2.msra.mxu0 0.0
        %2602 = vmatprep.subr.mxu0 0.0
        %2603 = vmatpush2.msra.mxu0 0.0
        %2604 = vmatprep.subr.mxu0 0.0
        %2605 = vmatpush2.msra.mxu0 0.0
        %2606 = vmatprep.subr.mxu0 0.0
        %2607 = vmatpush2.msra.mxu0 0.0
        %2608 = vmatprep.subr.mxu0 0.0
        %2609 = vmatpush2.msra.mxu0 0.0
        %2610 = vmatprep.subr.mxu0 0.0
        %2611 = vmatpush2.msra.mxu0 0.0
        %2612 = vmatprep.mubr.f32.mxu0 0.0
        %2613 = vmatmul.mubr.f32.gmra.mxu0 %v386
        %v2614 = vpop.f32.mrf.mxu0
        %v2615 = vadd.f32 0.0, %v2614
        %v2616 = vpop.f32.mrf.mxu0
        %2617 = vmatprep.mubr.f32.mxu0 0.0
        %2618 = vmatmul.mubr.f32.gmra.mxu0 %v389
        %v2619 = vpop.f32.mrf.mxu0
        %v2620 = vadd.f32 0.0, %v2619
        %v2621 = vpop.f32.mrf.mxu0
        %2622 = vmatprep.mubr.f32.mxu0 0.0
        %2623 = vmatmul.mubr.f32.gmra.mxu0 %v392
        %v2624 = vpop.f32.mrf.mxu0
        %v2625 = vadd.f32 0.0, %v2624
        %v2626 = vpop.f32.mrf.mxu0
        %2627 = vmatprep.mubr.f32.mxu0 0.0
        %2628 = vmatmul.mubr.f32.gmra.mxu0 %v395
        %v2629 = vpop.f32.mrf.mxu0
        %v2630 = vadd.f32 0.0, %v2629
        %v2631 = vpop.f32.mrf.mxu0
        %2632 = vdwg.mxu0
        %2637 = vrot.lane.b32.xlu0 %v2615, 124
        %v2638 = vpop.permute.xlu0 %2637
        %2639 = vrot.lane.b32.xlu0 %v2620, 124
        %v2640 = vpop.permute.xlu0 %2639
        %2641 = vrot.lane.b32.xlu0 %v2625, 124
        %v2642 = vpop.permute.xlu0 %2641
        %2643 = vrot.lane.b32.xlu0 %v2630, 124
        %v2644 = vpop.permute.xlu0 %2643
        %2649 = vrot.lane.b32.xlu0 %v2615, 120
        %v2650 = vpop.permute.xlu0 %2649
        %2651 = vrot.lane.b32.xlu0 %v2620, 120
        %v2652 = vpop.permute.xlu0 %2651
        %2653 = vrot.lane.b32.xlu0 %v2625, 120
        %v2654 = vpop.permute.xlu0 %2653
        %2655 = vrot.lane.b32.xlu0 %v2630, 120
        %v2656 = vpop.permute.xlu0 %2655
        %2661 = vrot.lane.b32.xlu0 %v2615, 116
        %v2662 = vpop.permute.xlu0 %2661
        %2663 = vrot.lane.b32.xlu0 %v2620, 116
        %v2664 = vpop.permute.xlu0 %2663
        %2665 = vrot.lane.b32.xlu0 %v2625, 116
        %v2666 = vpop.permute.xlu0 %2665
        %2667 = vrot.lane.b32.xlu0 %v2630, 116
        %v2668 = vpop.permute.xlu0 %2667
        %2673 = vrot.lane.b32.xlu0 %v2615, 112
        %v2674 = vpop.permute.xlu0 %2673
        %2675 = vrot.lane.b32.xlu0 %v2620, 112
        %v2676 = vpop.permute.xlu0 %2675
        %2677 = vrot.lane.b32.xlu0 %v2625, 112
        %v2678 = vpop.permute.xlu0 %2677
        %2679 = vrot.lane.b32.xlu0 %v2630, 112
        %v2680 = vpop.permute.xlu0 %2679
        %2685 = vrot.lane.b32.xlu0 %v2615, 108
        %v2686 = vpop.permute.xlu0 %2685
        %2687 = vrot.lane.b32.xlu0 %v2620, 108
        %v2688 = vpop.permute.xlu0 %2687
        %2689 = vrot.lane.b32.xlu0 %v2625, 108
        %v2690 = vpop.permute.xlu0 %2689
        %2691 = vrot.lane.b32.xlu0 %v2630, 108
        %v2692 = vpop.permute.xlu0 %2691
        %2697 = vrot.lane.b32.xlu0 %v2615, 104
        %v2698 = vpop.permute.xlu0 %2697
        %2699 = vrot.lane.b32.xlu0 %v2620, 104
        %v2700 = vpop.permute.xlu0 %2699
        %2701 = vrot.lane.b32.xlu0 %v2625, 104
        %v2702 = vpop.permute.xlu0 %2701
        %2703 = vrot.lane.b32.xlu0 %v2630, 104
        %v2704 = vpop.permute.xlu0 %2703
        %2709 = vrot.lane.b32.xlu0 %v2615, 100
        %v2710 = vpop.permute.xlu0 %2709
        %2711 = vrot.lane.b32.xlu0 %v2620, 100
        %v2712 = vpop.permute.xlu0 %2711
        %2713 = vrot.lane.b32.xlu0 %v2625, 100
        %v2714 = vpop.permute.xlu0 %2713
        %2715 = vrot.lane.b32.xlu0 %v2630, 100
        %v2716 = vpop.permute.xlu0 %2715
        %v2721 = vcombine.low %v2615, %v2650
        %v2722 = vcombine.high %v2615, %v2650
        %v2724 = vunpack.c.l.s4 1983009808
        %v2725 = vunpack.c.0.s8 %v2724
        %v2726 = vlaneseq
        %v2727 = vshrl.u32 %v2726, 7
        %v2728 = vsub.s32 %v2725, %v2727
        %v2729 = vrot.slane %v2721, %v2728
        %v2731 = vunpack.c.l.s4 1983009808
        %v2732 = vunpack.c.0.s8 %v2731
        %v2733 = vlaneseq
        %v2734 = vshrl.u32 %v2733, 7
        %v2735 = vsub.s32 %v2732, %v2734
        %v2736 = vrot.slane %v2722, %v2735
        %v2737 = vcombine.low %v2638, %v2662
        %v2738 = vcombine.high %v2638, %v2662
        %v2740 = vunpack.c.l.s4 1983009808
        %v2741 = vunpack.c.0.s8 %v2740
        %v2742 = vlaneseq
        %v2743 = vshrl.u32 %v2742, 7
        %v2744 = vsub.s32 %v2741, %v2743
        %v2745 = vrot.slane %v2737, %v2744
        %v2747 = vunpack.c.l.s4 1983009808
        %v2748 = vunpack.c.0.s8 %v2747
        %v2749 = vlaneseq
        %v2750 = vshrl.u32 %v2749, 7
        %v2751 = vsub.s32 %v2748, %v2750
        %v2752 = vrot.slane %v2738, %v2751
        %v2753 = vcombine.low %v2674, %v2698
        %v2754 = vcombine.high %v2674, %v2698
        %v2756 = vunpack.c.l.s4 1983009808
        %v2757 = vunpack.c.0.s8 %v2756
        %v2758 = vlaneseq
        %v2759 = vshrl.u32 %v2758, 7
        %v2760 = vsub.s32 %v2757, %v2759
        %v2761 = vrot.slane %v2753, %v2760
        %v2763 = vunpack.c.l.s4 1983009808
        %v2764 = vunpack.c.0.s8 %v2763
        %v2765 = vlaneseq
        %v2766 = vshrl.u32 %v2765, 7
        %v2767 = vsub.s32 %v2764, %v2766
        %v2768 = vrot.slane %v2754, %v2767
        %v2769 = vcombine.low %v2686, %v2710
        %v2770 = vcombine.high %v2686, %v2710
        %v2772 = vunpack.c.l.s4 1983009808
        %v2773 = vunpack.c.0.s8 %v2772
        %v2774 = vlaneseq
        %v2775 = vshrl.u32 %v2774, 7
        %v2776 = vsub.s32 %v2773, %v2775
        %v2777 = vrot.slane %v2769, %v2776
        %v2779 = vunpack.c.l.s4 1983009808
        %v2780 = vunpack.c.0.s8 %v2779
        %v2781 = vlaneseq
        %v2782 = vshrl.u32 %v2781, 7
        %v2783 = vsub.s32 %v2780, %v2782
        %v2784 = vrot.slane %v2770, %v2783
        %v2785 = vcombine.low %v2729, %v2745
        %v2786 = vcombine.high %v2729, %v2745
        %v2788 = vunpack.c.l.s4 1934713408
        %v2789 = vunpack.c.0.s8 %v2788
        %v2790 = vlaneseq
        %v2791 = vshrl.u32 %v2790, 7
        %v2792 = vsub.s32 %v2789, %v2791
        %v2793 = vrot.slane %v2785, %v2792
        %v2795 = vunpack.c.l.s4 1934713408
        %v2796 = vunpack.c.0.s8 %v2795
        %v2797 = vlaneseq
        %v2798 = vshrl.u32 %v2797, 7
        %v2799 = vsub.s32 %v2796, %v2798
        %v2800 = vrot.slane %v2786, %v2799
        %v2801 = vcombine.low %v2736, %v2752
        %v2802 = vcombine.high %v2736, %v2752
        %v2804 = vunpack.c.l.s4 1934713408
        %v2805 = vunpack.c.0.s8 %v2804
        %v2806 = vlaneseq
        %v2807 = vshrl.u32 %v2806, 7
        %v2808 = vsub.s32 %v2805, %v2807
        %v2809 = vrot.slane %v2801, %v2808
        %v2811 = vunpack.c.l.s4 1934713408
        %v2812 = vunpack.c.0.s8 %v2811
        %v2813 = vlaneseq
        %v2814 = vshrl.u32 %v2813, 7
        %v2815 = vsub.s32 %v2812, %v2814
        %v2816 = vrot.slane %v2802, %v2815
        %v2817 = vcombine.low %v2761, %v2777
        %v2818 = vcombine.high %v2761, %v2777
        %v2820 = vunpack.c.l.s4 1934713408
        %v2821 = vunpack.c.0.s8 %v2820
        %v2822 = vlaneseq
        %v2823 = vshrl.u32 %v2822, 7
        %v2824 = vsub.s32 %v2821, %v2823
        %v2825 = vrot.slane %v2817, %v2824
        %v2827 = vunpack.c.l.s4 1934713408
        %v2828 = vunpack.c.0.s8 %v2827
        %v2829 = vlaneseq
        %v2830 = vshrl.u32 %v2829, 7
        %v2831 = vsub.s32 %v2828, %v2830
        %v2832 = vrot.slane %v2818, %v2831
        %v2833 = vcombine.low %v2768, %v2784
        %v2834 = vcombine.high %v2768, %v2784
        %v2836 = vunpack.c.l.s4 1934713408
        %v2837 = vunpack.c.0.s8 %v2836
        %v2838 = vlaneseq
        %v2839 = vshrl.u32 %v2838, 7
        %v2840 = vsub.s32 %v2837, %v2839
        %v2841 = vrot.slane %v2833, %v2840
        %v2843 = vunpack.c.l.s4 1934713408
        %v2844 = vunpack.c.0.s8 %v2843
        %v2845 = vlaneseq
        %v2846 = vshrl.u32 %v2845, 7
        %v2847 = vsub.s32 %v2844, %v2846
        %v2848 = vrot.slane %v2834, %v2847
        %v2849 = vcombine.low %v2793, %v2825
        %v2850 = vcombine.high %v2793, %v2825
        %v2851 = vcombine.low %v2800, %v2832
        %v2852 = vcombine.high %v2800, %v2832
        %v2853 = vcombine.low %v2809, %v2841
        %v2854 = vcombine.high %v2809, %v2841
        %v2855 = vcombine.low %v2816, %v2848
        %v2856 = vcombine.high %v2816, %v2848
        %v2857 = vcombine.low %v2620, %v2652
        %v2858 = vcombine.high %v2620, %v2652
        %v2860 = vunpack.c.l.s4 1983009808
        %v2861 = vunpack.c.0.s8 %v2860
        %v2862 = vlaneseq
        %v2863 = vshrl.u32 %v2862, 7
        %v2864 = vsub.s32 %v2861, %v2863
        %v2865 = vrot.slane %v2857, %v2864
        %v2867 = vunpack.c.l.s4 1983009808
        %v2868 = vunpack.c.0.s8 %v2867
        %v2869 = vlaneseq
        %v2870 = vshrl.u32 %v2869, 7
        %v2871 = vsub.s32 %v2868, %v2870
        %v2872 = vrot.slane %v2858, %v2871
        %v2873 = vcombine.low %v2640, %v2664
        %v2874 = vcombine.high %v2640, %v2664
        %v2876 = vunpack.c.l.s4 1983009808
        %v2877 = vunpack.c.0.s8 %v2876
        %v2878 = vlaneseq
        %v2879 = vshrl.u32 %v2878, 7
        %v2880 = vsub.s32 %v2877, %v2879
        %v2881 = vrot.slane %v2873, %v2880
        %v2883 = vunpack.c.l.s4 1983009808
        %v2884 = vunpack.c.0.s8 %v2883
        %v2885 = vlaneseq
        %v2886 = vshrl.u32 %v2885, 7
        %v2887 = vsub.s32 %v2884, %v2886
        %v2888 = vrot.slane %v2874, %v2887
        %v2889 = vcombine.low %v2676, %v2700
        %v2890 = vcombine.high %v2676, %v2700
        %v2892 = vunpack.c.l.s4 1983009808
        %v2893 = vunpack.c.0.s8 %v2892
        %v2894 = vlaneseq
        %v2895 = vshrl.u32 %v2894, 7
        %v2896 = vsub.s32 %v2893, %v2895
        %v2897 = vrot.slane %v2889, %v2896
        %v2899 = vunpack.c.l.s4 1983009808
        %v2900 = vunpack.c.0.s8 %v2899
        %v2901 = vlaneseq
        %v2902 = vshrl.u32 %v2901, 7
        %v2903 = vsub.s32 %v2900, %v2902
        %v2904 = vrot.slane %v2890, %v2903
        %v2905 = vcombine.low %v2688, %v2712
        %v2906 = vcombine.high %v2688, %v2712
        %v2908 = vunpack.c.l.s4 1983009808
        %v2909 = vunpack.c.0.s8 %v2908
        %v2910 = vlaneseq
        %v2911 = vshrl.u32 %v2910, 7
        %v2912 = vsub.s32 %v2909, %v2911
        %v2913 = vrot.slane %v2905, %v2912
        %v2915 = vunpack.c.l.s4 1983009808
        %v2916 = vunpack.c.0.s8 %v2915
        %v2917 = vlaneseq
        %v2918 = vshrl.u32 %v2917, 7
        %v2919 = vsub.s32 %v2916, %v2918
        %v2920 = vrot.slane %v2906, %v2919
        %v2921 = vcombine.low %v2865, %v2881
        %v2922 = vcombine.high %v2865, %v2881
        %v2924 = vunpack.c.l.s4 1934713408
        %v2925 = vunpack.c.0.s8 %v2924
        %v2926 = vlaneseq
        %v2927 = vshrl.u32 %v2926, 7
        %v2928 = vsub.s32 %v2925, %v2927
        %v2929 = vrot.slane %v2921, %v2928
        %v2931 = vunpack.c.l.s4 1934713408
        %v2932 = vunpack.c.0.s8 %v2931
        %v2933 = vlaneseq
        %v2934 = vshrl.u32 %v2933, 7
        %v2935 = vsub.s32 %v2932, %v2934
        %v2936 = vrot.slane %v2922, %v2935
        %v2937 = vcombine.low %v2872, %v2888
        %v2938 = vcombine.high %v2872, %v2888
        %v2940 = vunpack.c.l.s4 1934713408
        %v2941 = vunpack.c.0.s8 %v2940
        %v2942 = vlaneseq
        %v2943 = vshrl.u32 %v2942, 7
        %v2944 = vsub.s32 %v2941, %v2943
        %v2945 = vrot.slane %v2937, %v2944
        %v2947 = vunpack.c.l.s4 1934713408
        %v2948 = vunpack.c.0.s8 %v2947
        %v2949 = vlaneseq
        %v2950 = vshrl.u32 %v2949, 7
        %v2951 = vsub.s32 %v2948, %v2950
        %v2952 = vrot.slane %v2938, %v2951
        %v2953 = vcombine.low %v2897, %v2913
        %v2954 = vcombine.high %v2897, %v2913
        %v2956 = vunpack.c.l.s4 1934713408
        %v2957 = vunpack.c.0.s8 %v2956
        %v2958 = vlaneseq
        %v2959 = vshrl.u32 %v2958, 7
        %v2960 = vsub.s32 %v2957, %v2959
        %v2961 = vrot.slane %v2953, %v2960
        %v2963 = vunpack.c.l.s4 1934713408
        %v2964 = vunpack.c.0.s8 %v2963
        %v2965 = vlaneseq
        %v2966 = vshrl.u32 %v2965, 7
        %v2967 = vsub.s32 %v2964, %v2966
        %v2968 = vrot.slane %v2954, %v2967
        %v2969 = vcombine.low %v2904, %v2920
        %v2970 = vcombine.high %v2904, %v2920
        %v2972 = vunpack.c.l.s4 1934713408
        %v2973 = vunpack.c.0.s8 %v2972
        %v2974 = vlaneseq
        %v2975 = vshrl.u32 %v2974, 7
        %v2976 = vsub.s32 %v2973, %v2975
        %v2977 = vrot.slane %v2969, %v2976
        %v2979 = vunpack.c.l.s4 1934713408
        %v2980 = vunpack.c.0.s8 %v2979
        %v2981 = vlaneseq
        %v2982 = vshrl.u32 %v2981, 7
        %v2983 = vsub.s32 %v2980, %v2982
        %v2984 = vrot.slane %v2970, %v2983
        %v2985 = vcombine.low %v2929, %v2961
        %v2986 = vcombine.high %v2929, %v2961
        %v2987 = vcombine.low %v2936, %v2968
        %v2988 = vcombine.high %v2936, %v2968
        %v2989 = vcombine.low %v2945, %v2977
        %v2990 = vcombine.high %v2945, %v2977
        %v2991 = vcombine.low %v2952, %v2984
        %v2992 = vcombine.high %v2952, %v2984
        %v2993 = vcombine.low %v2625, %v2654
        %v2994 = vcombine.high %v2625, %v2654
        %v2996 = vunpack.c.l.s4 1983009808
        %v2997 = vunpack.c.0.s8 %v2996
        %v2998 = vlaneseq
        %v2999 = vshrl.u32 %v2998, 7
        %v3000 = vsub.s32 %v2997, %v2999
        %v3001 = vrot.slane %v2993, %v3000
        %v3003 = vunpack.c.l.s4 1983009808
        %v3004 = vunpack.c.0.s8 %v3003
        %v3005 = vlaneseq
        %v3006 = vshrl.u32 %v3005, 7
        %v3007 = vsub.s32 %v3004, %v3006
        %v3008 = vrot.slane %v2994, %v3007
        %v3009 = vcombine.low %v2642, %v2666
        %v3010 = vcombine.high %v2642, %v2666
        %v3012 = vunpack.c.l.s4 1983009808
        %v3013 = vunpack.c.0.s8 %v3012
        %v3014 = vlaneseq
        %v3015 = vshrl.u32 %v3014, 7
        %v3016 = vsub.s32 %v3013, %v3015
        %v3017 = vrot.slane %v3009, %v3016
        %v3019 = vunpack.c.l.s4 1983009808
        %v3020 = vunpack.c.0.s8 %v3019
        %v3021 = vlaneseq
        %v3022 = vshrl.u32 %v3021, 7
        %v3023 = vsub.s32 %v3020, %v3022
        %v3024 = vrot.slane %v3010, %v3023
        %v3025 = vcombine.low %v2678, %v2702
        %v3026 = vcombine.high %v2678, %v2702
        %v3028 = vunpack.c.l.s4 1983009808
        %v3029 = vunpack.c.0.s8 %v3028
        %v3030 = vlaneseq
        %v3031 = vshrl.u32 %v3030, 7
        %v3032 = vsub.s32 %v3029, %v3031
        %v3033 = vrot.slane %v3025, %v3032
        %v3035 = vunpack.c.l.s4 1983009808
        %v3036 = vunpack.c.0.s8 %v3035
        %v3037 = vlaneseq
        %v3038 = vshrl.u32 %v3037, 7
        %v3039 = vsub.s32 %v3036, %v3038
        %v3040 = vrot.slane %v3026, %v3039
        %v3041 = vcombine.low %v2690, %v2714
        %v3042 = vcombine.high %v2690, %v2714
        %v3044 = vunpack.c.l.s4 1983009808
        %v3045 = vunpack.c.0.s8 %v3044
        %v3046 = vlaneseq
        %v3047 = vshrl.u32 %v3046, 7
        %v3048 = vsub.s32 %v3045, %v3047
        %v3049 = vrot.slane %v3041, %v3048
        %v3051 = vunpack.c.l.s4 1983009808
        %v3052 = vunpack.c.0.s8 %v3051
        %v3053 = vlaneseq
        %v3054 = vshrl.u32 %v3053, 7
        %v3055 = vsub.s32 %v3052, %v3054
        %v3056 = vrot.slane %v3042, %v3055
        %v3057 = vcombine.low %v3001, %v3017
        %v3058 = vcombine.high %v3001, %v3017
        %v3060 = vunpack.c.l.s4 1934713408
        %v3061 = vunpack.c.0.s8 %v3060
        %v3062 = vlaneseq
        %v3063 = vshrl.u32 %v3062, 7
        %v3064 = vsub.s32 %v3061, %v3063
        %v3065 = vrot.slane %v3057, %v3064
        %v3067 = vunpack.c.l.s4 1934713408
        %v3068 = vunpack.c.0.s8 %v3067
        %v3069 = vlaneseq
        %v3070 = vshrl.u32 %v3069, 7
        %v3071 = vsub.s32 %v3068, %v3070
        %v3072 = vrot.slane %v3058, %v3071
        %v3073 = vcombine.low %v3008, %v3024
        %v3074 = vcombine.high %v3008, %v3024
        %v3076 = vunpack.c.l.s4 1934713408
        %v3077 = vunpack.c.0.s8 %v3076
        %v3078 = vlaneseq
        %v3079 = vshrl.u32 %v3078, 7
        %v3080 = vsub.s32 %v3077, %v3079
        %v3081 = vrot.slane %v3073, %v3080
        %v3083 = vunpack.c.l.s4 1934713408
        %v3084 = vunpack.c.0.s8 %v3083
        %v3085 = vlaneseq
        %v3086 = vshrl.u32 %v3085, 7
        %v3087 = vsub.s32 %v3084, %v3086
        %v3088 = vrot.slane %v3074, %v3087
        %v3089 = vcombine.low %v3033, %v3049
        %v3090 = vcombine.high %v3033, %v3049
        %v3092 = vunpack.c.l.s4 1934713408
        %v3093 = vunpack.c.0.s8 %v3092
        %v3094 = vlaneseq
        %v3095 = vshrl.u32 %v3094, 7
        %v3096 = vsub.s32 %v3093, %v3095
        %v3097 = vrot.slane %v3089, %v3096
        %v3099 = vunpack.c.l.s4 1934713408
        %v3100 = vunpack.c.0.s8 %v3099
        %v3101 = vlaneseq
        %v3102 = vshrl.u32 %v3101, 7
        %v3103 = vsub.s32 %v3100, %v3102
        %v3104 = vrot.slane %v3090, %v3103
        %v3105 = vcombine.low %v3040, %v3056
        %v3106 = vcombine.high %v3040, %v3056
        %v3108 = vunpack.c.l.s4 1934713408
        %v3109 = vunpack.c.0.s8 %v3108
        %v3110 = vlaneseq
        %v3111 = vshrl.u32 %v3110, 7
        %v3112 = vsub.s32 %v3109, %v3111
        %v3113 = vrot.slane %v3105, %v3112
        %v3115 = vunpack.c.l.s4 1934713408
        %v3116 = vunpack.c.0.s8 %v3115
        %v3117 = vlaneseq
        %v3118 = vshrl.u32 %v3117, 7
        %v3119 = vsub.s32 %v3116, %v3118
        %v3120 = vrot.slane %v3106, %v3119
        %v3121 = vcombine.low %v3065, %v3097
        %v3122 = vcombine.high %v3065, %v3097
        %v3123 = vcombine.low %v3072, %v3104
        %v3124 = vcombine.high %v3072, %v3104
        %v3125 = vcombine.low %v3081, %v3113
        %v3126 = vcombine.high %v3081, %v3113
        %v3127 = vcombine.low %v3088, %v3120
        %v3128 = vcombine.high %v3088, %v3120
        %v3129 = vcombine.low %v2630, %v2656
        %v3130 = vcombine.high %v2630, %v2656
        %v3132 = vunpack.c.l.s4 1983009808
        %v3133 = vunpack.c.0.s8 %v3132
        %v3134 = vlaneseq
        %v3135 = vshrl.u32 %v3134, 7
        %v3136 = vsub.s32 %v3133, %v3135
        %v3137 = vrot.slane %v3129, %v3136
        %v3139 = vunpack.c.l.s4 1983009808
        %v3140 = vunpack.c.0.s8 %v3139
        %v3141 = vlaneseq
        %v3142 = vshrl.u32 %v3141, 7
        %v3143 = vsub.s32 %v3140, %v3142
        %v3144 = vrot.slane %v3130, %v3143
        %v3145 = vcombine.low %v2644, %v2668
        %v3146 = vcombine.high %v2644, %v2668
        %v3148 = vunpack.c.l.s4 1983009808
        %v3149 = vunpack.c.0.s8 %v3148
        %v3150 = vlaneseq
        %v3151 = vshrl.u32 %v3150, 7
        %v3152 = vsub.s32 %v3149, %v3151
        %v3153 = vrot.slane %v3145, %v3152
        %v3155 = vunpack.c.l.s4 1983009808
        %v3156 = vunpack.c.0.s8 %v3155
        %v3157 = vlaneseq
        %v3158 = vshrl.u32 %v3157, 7
        %v3159 = vsub.s32 %v3156, %v3158
        %v3160 = vrot.slane %v3146, %v3159
        %v3161 = vcombine.low %v2680, %v2704
        %v3162 = vcombine.high %v2680, %v2704
        %v3164 = vunpack.c.l.s4 1983009808
        %v3165 = vunpack.c.0.s8 %v3164
        %v3166 = vlaneseq
        %v3167 = vshrl.u32 %v3166, 7
        %v3168 = vsub.s32 %v3165, %v3167
        %v3169 = vrot.slane %v3161, %v3168
        %v3171 = vunpack.c.l.s4 1983009808
        %v3172 = vunpack.c.0.s8 %v3171
        %v3173 = vlaneseq
        %v3174 = vshrl.u32 %v3173, 7
        %v3175 = vsub.s32 %v3172, %v3174
        %v3176 = vrot.slane %v3162, %v3175
        %v3177 = vcombine.low %v2692, %v2716
        %v3178 = vcombine.high %v2692, %v2716
        %v3180 = vunpack.c.l.s4 1983009808
        %v3181 = vunpack.c.0.s8 %v3180
        %v3182 = vlaneseq
        %v3183 = vshrl.u32 %v3182, 7
        %v3184 = vsub.s32 %v3181, %v3183
        %v3185 = vrot.slane %v3177, %v3184
        %v3187 = vunpack.c.l.s4 1983009808
        %v3188 = vunpack.c.0.s8 %v3187
        %v3189 = vlaneseq
        %v3190 = vshrl.u32 %v3189, 7
        %v3191 = vsub.s32 %v3188, %v3190
        %v3192 = vrot.slane %v3178, %v3191
        %v3193 = vcombine.low %v3137, %v3153
        %v3194 = vcombine.high %v3137, %v3153
        %v3196 = vunpack.c.l.s4 1934713408
        %v3197 = vunpack.c.0.s8 %v3196
        %v3198 = vlaneseq
        %v3199 = vshrl.u32 %v3198, 7
        %v3200 = vsub.s32 %v3197, %v3199
        %v3201 = vrot.slane %v3193, %v3200
        %v3203 = vunpack.c.l.s4 1934713408
        %v3204 = vunpack.c.0.s8 %v3203
        %v3205 = vlaneseq
        %v3206 = vshrl.u32 %v3205, 7
        %v3207 = vsub.s32 %v3204, %v3206
        %v3208 = vrot.slane %v3194, %v3207
        %v3209 = vcombine.low %v3144, %v3160
        %v3210 = vcombine.high %v3144, %v3160
        %v3212 = vunpack.c.l.s4 1934713408
        %v3213 = vunpack.c.0.s8 %v3212
        %v3214 = vlaneseq
        %v3215 = vshrl.u32 %v3214, 7
        %v3216 = vsub.s32 %v3213, %v3215
        %v3217 = vrot.slane %v3209, %v3216
        %v3219 = vunpack.c.l.s4 1934713408
        %v3220 = vunpack.c.0.s8 %v3219
        %v3221 = vlaneseq
        %v3222 = vshrl.u32 %v3221, 7
        %v3223 = vsub.s32 %v3220, %v3222
        %v3224 = vrot.slane %v3210, %v3223
        %v3225 = vcombine.low %v3169, %v3185
        %v3226 = vcombine.high %v3169, %v3185
        %v3228 = vunpack.c.l.s4 1934713408
        %v3229 = vunpack.c.0.s8 %v3228
        %v3230 = vlaneseq
        %v3231 = vshrl.u32 %v3230, 7
        %v3232 = vsub.s32 %v3229, %v3231
        %v3233 = vrot.slane %v3225, %v3232
        %v3235 = vunpack.c.l.s4 1934713408
        %v3236 = vunpack.c.0.s8 %v3235
        %v3237 = vlaneseq
        %v3238 = vshrl.u32 %v3237, 7
        %v3239 = vsub.s32 %v3236, %v3238
        %v3240 = vrot.slane %v3226, %v3239
        %v3241 = vcombine.low %v3176, %v3192
        %v3242 = vcombine.high %v3176, %v3192
        %v3244 = vunpack.c.l.s4 1934713408
        %v3245 = vunpack.c.0.s8 %v3244
        %v3246 = vlaneseq
        %v3247 = vshrl.u32 %v3246, 7
        %v3248 = vsub.s32 %v3245, %v3247
        %v3249 = vrot.slane %v3241, %v3248
        %v3251 = vunpack.c.l.s4 1934713408
        %v3252 = vunpack.c.0.s8 %v3251
        %v3253 = vlaneseq
        %v3254 = vshrl.u32 %v3253, 7
        %v3255 = vsub.s32 %v3252, %v3254
        %v3256 = vrot.slane %v3242, %v3255
        %v3257 = vcombine.low %v3201, %v3233
        %v3258 = vcombine.high %v3201, %v3233
        %v3259 = vcombine.low %v3208, %v3240
        %v3260 = vcombine.high %v3208, %v3240
        %v3261 = vcombine.low %v3217, %v3249
        %v3262 = vcombine.high %v3217, %v3249
        %v3263 = vcombine.low %v3224, %v3256
        %v3264 = vcombine.high %v3224, %v3256
        %3273 = vrot.lane.b32.xlu0 %v834, 4
        %v3274 = vpop.permute.xlu0 %3273
        %3275 = vrot.lane.b32.xlu0 %v835, 4
        %v3276 = vpop.permute.xlu0 %3275
        %3277 = vrot.lane.b32.xlu0 %v836, 4
        %v3278 = vpop.permute.xlu0 %3277
        %3279 = vrot.lane.b32.xlu0 %v837, 4
        %v3280 = vpop.permute.xlu0 %3279
        %3281 = vrot.lane.b32.xlu0 %v838, 4
        %v3282 = vpop.permute.xlu0 %3281
        %3283 = vrot.lane.b32.xlu0 %v839, 4
        %v3284 = vpop.permute.xlu0 %3283
        %3285 = vrot.lane.b32.xlu0 %v840, 4
        %v3286 = vpop.permute.xlu0 %3285
        %3287 = vrot.lane.b32.xlu0 %v841, 4
        %v3288 = vpop.permute.xlu0 %3287
        %3305 = vrot.lane.b32.xlu0 %v970, 8
        %v3306 = vpop.permute.xlu0 %3305
        %3307 = vrot.lane.b32.xlu0 %v971, 8
        %v3308 = vpop.permute.xlu0 %3307
        %3309 = vrot.lane.b32.xlu0 %v972, 8
        %v3310 = vpop.permute.xlu0 %3309
        %3311 = vrot.lane.b32.xlu0 %v973, 8
        %v3312 = vpop.permute.xlu0 %3311
        %3313 = vrot.lane.b32.xlu0 %v974, 8
        %v3314 = vpop.permute.xlu0 %3313
        %3315 = vrot.lane.b32.xlu0 %v975, 8
        %v3316 = vpop.permute.xlu0 %3315
        %3317 = vrot.lane.b32.xlu0 %v976, 8
        %v3318 = vpop.permute.xlu0 %3317
        %3319 = vrot.lane.b32.xlu0 %v977, 8
        %v3320 = vpop.permute.xlu0 %3319
        %3337 = vrot.lane.b32.xlu0 %v1106, 12
        %v3338 = vpop.permute.xlu0 %3337
        %3339 = vrot.lane.b32.xlu0 %v1107, 12
        %v3340 = vpop.permute.xlu0 %3339
        %3341 = vrot.lane.b32.xlu0 %v1108, 12
        %v3342 = vpop.permute.xlu0 %3341
        %3343 = vrot.lane.b32.xlu0 %v1109, 12
        %v3344 = vpop.permute.xlu0 %3343
        %3345 = vrot.lane.b32.xlu0 %v1110, 12
        %v3346 = vpop.permute.xlu0 %3345
        %3347 = vrot.lane.b32.xlu0 %v1111, 12
        %v3348 = vpop.permute.xlu0 %3347
        %3349 = vrot.lane.b32.xlu0 %v1112, 12
        %v3350 = vpop.permute.xlu0 %3349
        %3351 = vrot.lane.b32.xlu0 %v1113, 12
        %v3352 = vpop.permute.xlu0 %3351
        %3369 = vrot.lane.b32.xlu0 %v1415, 16
        %v3370 = vpop.permute.xlu0 %3369
        %3371 = vrot.lane.b32.xlu0 %v1416, 16
        %v3372 = vpop.permute.xlu0 %3371
        %3373 = vrot.lane.b32.xlu0 %v1417, 16
        %v3374 = vpop.permute.xlu0 %3373
        %3375 = vrot.lane.b32.xlu0 %v1418, 16
        %v3376 = vpop.permute.xlu0 %3375
        %3377 = vrot.lane.b32.xlu0 %v1419, 16
        %v3378 = vpop.permute.xlu0 %3377
        %3379 = vrot.lane.b32.xlu0 %v1420, 16
        %v3380 = vpop.permute.xlu0 %3379
        %3381 = vrot.lane.b32.xlu0 %v1421, 16
        %v3382 = vpop.permute.xlu0 %3381
        %3383 = vrot.lane.b32.xlu0 %v1422, 16
        %v3384 = vpop.permute.xlu0 %3383
        %3401 = vrot.lane.b32.xlu0 %v1551, 20
        %v3402 = vpop.permute.xlu0 %3401
        %3403 = vrot.lane.b32.xlu0 %v1552, 20
        %v3404 = vpop.permute.xlu0 %3403
        %3405 = vrot.lane.b32.xlu0 %v1553, 20
        %v3406 = vpop.permute.xlu0 %3405
        %3407 = vrot.lane.b32.xlu0 %v1554, 20
        %v3408 = vpop.permute.xlu0 %3407
        %3409 = vrot.lane.b32.xlu0 %v1555, 20
        %v3410 = vpop.permute.xlu0 %3409
        %3411 = vrot.lane.b32.xlu0 %v1556, 20
        %v3412 = vpop.permute.xlu0 %3411
        %3413 = vrot.lane.b32.xlu0 %v1557, 20
        %v3414 = vpop.permute.xlu0 %3413
        %3415 = vrot.lane.b32.xlu0 %v1558, 20
        %v3416 = vpop.permute.xlu0 %3415
        %3433 = vrot.lane.b32.xlu0 %v1687, 24
        %v3434 = vpop.permute.xlu0 %3433
        %3435 = vrot.lane.b32.xlu0 %v1688, 24
        %v3436 = vpop.permute.xlu0 %3435
        %3437 = vrot.lane.b32.xlu0 %v1689, 24
        %v3438 = vpop.permute.xlu0 %3437
        %3439 = vrot.lane.b32.xlu0 %v1690, 24
        %v3440 = vpop.permute.xlu0 %3439
        %3441 = vrot.lane.b32.xlu0 %v1691, 24
        %v3442 = vpop.permute.xlu0 %3441
        %3443 = vrot.lane.b32.xlu0 %v1692, 24
        %v3444 = vpop.permute.xlu0 %3443
        %3445 = vrot.lane.b32.xlu0 %v1693, 24
        %v3446 = vpop.permute.xlu0 %3445
        %3447 = vrot.lane.b32.xlu0 %v1694, 24
        %v3448 = vpop.permute.xlu0 %3447
        %3465 = vrot.lane.b32.xlu0 %v1823, 28
        %v3466 = vpop.permute.xlu0 %3465
        %3467 = vrot.lane.b32.xlu0 %v1824, 28
        %v3468 = vpop.permute.xlu0 %3467
        %3469 = vrot.lane.b32.xlu0 %v1825, 28
        %v3470 = vpop.permute.xlu0 %3469
        %3471 = vrot.lane.b32.xlu0 %v1826, 28
        %v3472 = vpop.permute.xlu0 %3471
        %3473 = vrot.lane.b32.xlu0 %v1827, 28
        %v3474 = vpop.permute.xlu0 %3473
        %3475 = vrot.lane.b32.xlu0 %v1828, 28
        %v3476 = vpop.permute.xlu0 %3475
        %3477 = vrot.lane.b32.xlu0 %v1829, 28
        %v3478 = vpop.permute.xlu0 %3477
        %3479 = vrot.lane.b32.xlu0 %v1830, 28
        %v3480 = vpop.permute.xlu0 %3479
        %3497 = vrot.lane.b32.xlu0 %v2132, 32
        %v3498 = vpop.permute.xlu0 %3497
        %3499 = vrot.lane.b32.xlu0 %v2133, 32
        %v3500 = vpop.permute.xlu0 %3499
        %3501 = vrot.lane.b32.xlu0 %v2134, 32
        %v3502 = vpop.permute.xlu0 %3501
        %3503 = vrot.lane.b32.xlu0 %v2135, 32
        %v3504 = vpop.permute.xlu0 %3503
        %3505 = vrot.lane.b32.xlu0 %v2136, 32
        %v3506 = vpop.permute.xlu0 %3505
        %3507 = vrot.lane.b32.xlu0 %v2137, 32
        %v3508 = vpop.permute.xlu0 %3507
        %3509 = vrot.lane.b32.xlu0 %v2138, 32
        %v3510 = vpop.permute.xlu0 %3509
        %3511 = vrot.lane.b32.xlu0 %v2139, 32
        %v3512 = vpop.permute.xlu0 %3511
        %3529 = vrot.lane.b32.xlu0 %v2268, 36
        %v3530 = vpop.permute.xlu0 %3529
        %3531 = vrot.lane.b32.xlu0 %v2269, 36
        %v3532 = vpop.permute.xlu0 %3531
        %3533 = vrot.lane.b32.xlu0 %v2270, 36
        %v3534 = vpop.permute.xlu0 %3533
        %3535 = vrot.lane.b32.xlu0 %v2271, 36
        %v3536 = vpop.permute.xlu0 %3535
        %3537 = vrot.lane.b32.xlu0 %v2272, 36
        %v3538 = vpop.permute.xlu0 %3537
        %3539 = vrot.lane.b32.xlu0 %v2273, 36
        %v3540 = vpop.permute.xlu0 %3539
        %3541 = vrot.lane.b32.xlu0 %v2274, 36
        %v3542 = vpop.permute.xlu0 %3541
        %3543 = vrot.lane.b32.xlu0 %v2275, 36
        %v3544 = vpop.permute.xlu0 %3543
        %3561 = vrot.lane.b32.xlu0 %v2404, 40
        %v3562 = vpop.permute.xlu0 %3561
        %3563 = vrot.lane.b32.xlu0 %v2405, 40
        %v3564 = vpop.permute.xlu0 %3563
        %3565 = vrot.lane.b32.xlu0 %v2406, 40
        %v3566 = vpop.permute.xlu0 %3565
        %3567 = vrot.lane.b32.xlu0 %v2407, 40
        %v3568 = vpop.permute.xlu0 %3567
        %3569 = vrot.lane.b32.xlu0 %v2408, 40
        %v3570 = vpop.permute.xlu0 %3569
        %3571 = vrot.lane.b32.xlu0 %v2409, 40
        %v3572 = vpop.permute.xlu0 %3571
        %3573 = vrot.lane.b32.xlu0 %v2410, 40
        %v3574 = vpop.permute.xlu0 %3573
        %3575 = vrot.lane.b32.xlu0 %v2411, 40
        %v3576 = vpop.permute.xlu0 %3575
        %3593 = vrot.lane.b32.xlu0 %v2540, 44
        %v3594 = vpop.permute.xlu0 %3593
        %3595 = vrot.lane.b32.xlu0 %v2541, 44
        %v3596 = vpop.permute.xlu0 %3595
        %3597 = vrot.lane.b32.xlu0 %v2542, 44
        %v3598 = vpop.permute.xlu0 %3597
        %3599 = vrot.lane.b32.xlu0 %v2543, 44
        %v3600 = vpop.permute.xlu0 %3599
        %3601 = vrot.lane.b32.xlu0 %v2544, 44
        %v3602 = vpop.permute.xlu0 %3601
        %3603 = vrot.lane.b32.xlu0 %v2545, 44
        %v3604 = vpop.permute.xlu0 %3603
        %3605 = vrot.lane.b32.xlu0 %v2546, 44
        %v3606 = vpop.permute.xlu0 %3605
        %3607 = vrot.lane.b32.xlu0 %v2547, 44
        %v3608 = vpop.permute.xlu0 %3607
        %3625 = vrot.lane.b32.xlu0 %v2849, 48
        %v3626 = vpop.permute.xlu0 %3625
        %3627 = vrot.lane.b32.xlu0 %v2850, 48
        %v3628 = vpop.permute.xlu0 %3627
        %3629 = vrot.lane.b32.xlu0 %v2851, 48
        %v3630 = vpop.permute.xlu0 %3629
        %3631 = vrot.lane.b32.xlu0 %v2852, 48
        %v3632 = vpop.permute.xlu0 %3631
        %3633 = vrot.lane.b32.xlu0 %v2853, 48
        %v3634 = vpop.permute.xlu0 %3633
        %3635 = vrot.lane.b32.xlu0 %v2854, 48
        %v3636 = vpop.permute.xlu0 %3635
        %3637 = vrot.lane.b32.xlu0 %v2855, 48
        %v3638 = vpop.permute.xlu0 %3637
        %3639 = vrot.lane.b32.xlu0 %v2856, 48
        %v3640 = vpop.permute.xlu0 %3639
        %3657 = vrot.lane.b32.xlu0 %v2985, 52
        %v3658 = vpop.permute.xlu0 %3657
        %3659 = vrot.lane.b32.xlu0 %v2986, 52
        %v3660 = vpop.permute.xlu0 %3659
        %3661 = vrot.lane.b32.xlu0 %v2987, 52
        %v3662 = vpop.permute.xlu0 %3661
        %3663 = vrot.lane.b32.xlu0 %v2988, 52
        %v3664 = vpop.permute.xlu0 %3663
        %3665 = vrot.lane.b32.xlu0 %v2989, 52
        %v3666 = vpop.permute.xlu0 %3665
        %3667 = vrot.lane.b32.xlu0 %v2990, 52
        %v3668 = vpop.permute.xlu0 %3667
        %3669 = vrot.lane.b32.xlu0 %v2991, 52
        %v3670 = vpop.permute.xlu0 %3669
        %3671 = vrot.lane.b32.xlu0 %v2992, 52
        %v3672 = vpop.permute.xlu0 %3671
        %3689 = vrot.lane.b32.xlu0 %v3121, 56
        %v3690 = vpop.permute.xlu0 %3689
        %3691 = vrot.lane.b32.xlu0 %v3122, 56
        %v3692 = vpop.permute.xlu0 %3691
        %3693 = vrot.lane.b32.xlu0 %v3123, 56
        %v3694 = vpop.permute.xlu0 %3693
        %3695 = vrot.lane.b32.xlu0 %v3124, 56
        %v3696 = vpop.permute.xlu0 %3695
        %3697 = vrot.lane.b32.xlu0 %v3125, 56
        %v3698 = vpop.permute.xlu0 %3697
        %3699 = vrot.lane.b32.xlu0 %v3126, 56
        %v3700 = vpop.permute.xlu0 %3699
        %3701 = vrot.lane.b32.xlu0 %v3127, 56
        %v3702 = vpop.permute.xlu0 %3701
        %3703 = vrot.lane.b32.xlu0 %v3128, 56
        %v3704 = vpop.permute.xlu0 %3703
        %3721 = vrot.lane.b32.xlu0 %v3257, 60
        %v3722 = vpop.permute.xlu0 %3721
        %3723 = vrot.lane.b32.xlu0 %v3258, 60
        %v3724 = vpop.permute.xlu0 %3723
        %3725 = vrot.lane.b32.xlu0 %v3259, 60
        %v3726 = vpop.permute.xlu0 %3725
        %3727 = vrot.lane.b32.xlu0 %v3260, 60
        %v3728 = vpop.permute.xlu0 %3727
        %3729 = vrot.lane.b32.xlu0 %v3261, 60
        %v3730 = vpop.permute.xlu0 %3729
        %3731 = vrot.lane.b32.xlu0 %v3262, 60
        %v3732 = vpop.permute.xlu0 %3731
        %3733 = vrot.lane.b32.xlu0 %v3263, 60
        %v3734 = vpop.permute.xlu0 %3733
        %3735 = vrot.lane.b32.xlu0 %v3264, 60
        %v3736 = vpop.permute.xlu0 %3735
        %vm3745 = vcmask 31744
        %v3746 = vsel %vm3745, %v698, %v3274
        %v3747 = vsel %vm3745, %v699, %v3276
        %v3748 = vsel %vm3745, %v700, %v3278
        %v3749 = vsel %vm3745, %v701, %v3280
        %v3750 = vsel %vm3745, %v702, %v3282
        %v3751 = vsel %vm3745, %v703, %v3284
        %v3752 = vsel %vm3745, %v704, %v3286
        %v3753 = vsel %vm3745, %v705, %v3288
        %vm3754 = vcmask 64512
        %v3755 = vsel %vm3754, %v3746, %v3306
        %v3756 = vsel %vm3754, %v3747, %v3308
        %v3757 = vsel %vm3754, %v3748, %v3310
        %v3758 = vsel %vm3754, %v3749, %v3312
        %v3759 = vsel %vm3754, %v3750, %v3314
        %v3760 = vsel %vm3754, %v3751, %v3316
        %v3761 = vsel %vm3754, %v3752, %v3318
        %v3762 = vsel %vm3754, %v3753, %v3320
        %vm3763 = vcmask 97280
        %v3764 = vsel %vm3763, %v3755, %v3338
        %v3765 = vsel %vm3763, %v3756, %v3340
        %v3766 = vsel %vm3763, %v3757, %v3342
        %v3767 = vsel %vm3763, %v3758, %v3344
        %v3768 = vsel %vm3763, %v3759, %v3346
        %v3769 = vsel %vm3763, %v3760, %v3348
        %v3770 = vsel %vm3763, %v3761, %v3350
        %v3771 = vsel %vm3763, %v3762, %v3352
        %v3772 = vsel %vm255, %v3764, %v3370
        %v3773 = vsel %vm255, %v3765, %v3372
        %v3774 = vsel %vm255, %v3766, %v3374
        %v3775 = vsel %vm255, %v3767, %v3376
        %v3776 = vsel %vm255, %v3768, %v3378
        %v3777 = vsel %vm255, %v3769, %v3380
        %v3778 = vsel %vm255, %v3770, %v3382
        %v3779 = vsel %vm255, %v3771, %v3384
        %vm3780 = vcmask 162816
        %v3781 = vsel %vm3780, %v3772, %v3402
        %v3782 = vsel %vm3780, %v3773, %v3404
        %v3783 = vsel %vm3780, %v3774, %v3406
        %v3784 = vsel %vm3780, %v3775, %v3408
        %v3785 = vsel %vm3780, %v3776, %v3410
        %v3786 = vsel %vm3780, %v3777, %v3412
        %v3787 = vsel %vm3780, %v3778, %v3414
        %v3788 = vsel %vm3780, %v3779, %v3416
        %vm3789 = vcmask 195584
        %v3790 = vsel %vm3789, %v3781, %v3434
        %v3791 = vsel %vm3789, %v3782, %v3436
        %v3792 = vsel %vm3789, %v3783, %v3438
        %v3793 = vsel %vm3789, %v3784, %v3440
        %v3794 = vsel %vm3789, %v3785, %v3442
        %v3795 = vsel %vm3789, %v3786, %v3444
        %v3796 = vsel %vm3789, %v3787, %v3446
        %v3797 = vsel %vm3789, %v3788, %v3448
        %vm3798 = vcmask 228352
        %v3799 = vsel %vm3798, %v3790, %v3466
        %v3800 = vsel %vm3798, %v3791, %v3468
        %v3801 = vsel %vm3798, %v3792, %v3470
        %v3802 = vsel %vm3798, %v3793, %v3472
        %v3803 = vsel %vm3798, %v3794, %v3474
        %v3804 = vsel %vm3798, %v3795, %v3476
        %v3805 = vsel %vm3798, %v3796, %v3478
        %v3806 = vsel %vm3798, %v3797, %v3480
        %vm3807 = vcmask 261120
        %v3808 = vsel %vm3807, %v3799, %v3498
        %v3809 = vsel %vm3807, %v3800, %v3500
        %v3810 = vsel %vm3807, %v3801, %v3502
        %v3811 = vsel %vm3807, %v3802, %v3504
        %v3812 = vsel %vm3807, %v3803, %v3506
        %v3813 = vsel %vm3807, %v3804, %v3508
        %v3814 = vsel %vm3807, %v3805, %v3510
        %v3815 = vsel %vm3807, %v3806, %v3512
        %vm3816 = vcmask 293888
        %v3817 = vsel %vm3816, %v3808, %v3530
        %v3818 = vsel %vm3816, %v3809, %v3532
        %v3819 = vsel %vm3816, %v3810, %v3534
        %v3820 = vsel %vm3816, %v3811, %v3536
        %v3821 = vsel %vm3816, %v3812, %v3538
        %v3822 = vsel %vm3816, %v3813, %v3540
        %v3823 = vsel %vm3816, %v3814, %v3542
        %v3824 = vsel %vm3816, %v3815, %v3544
        %vm3825 = vcmask 326656
        %v3826 = vsel %vm3825, %v3817, %v3562
        %v3827 = vsel %vm3825, %v3818, %v3564
        %v3828 = vsel %vm3825, %v3819, %v3566
        %v3829 = vsel %vm3825, %v3820, %v3568
        %v3830 = vsel %vm3825, %v3821, %v3570
        %v3831 = vsel %vm3825, %v3822, %v3572
        %v3832 = vsel %vm3825, %v3823, %v3574
        %v3833 = vsel %vm3825, %v3824, %v3576
        %vm3834 = vcmask 359424
        %v3835 = vsel %vm3834, %v3826, %v3594
        %v3836 = vsel %vm3834, %v3827, %v3596
        %v3837 = vsel %vm3834, %v3828, %v3598
        %v3838 = vsel %vm3834, %v3829, %v3600
        %v3839 = vsel %vm3834, %v3830, %v3602
        %v3840 = vsel %vm3834, %v3831, %v3604
        %v3841 = vsel %vm3834, %v3832, %v3606
        %v3842 = vsel %vm3834, %v3833, %v3608
        %vm3843 = vcmask 392192
        %v3844 = vsel %vm3843, %v3835, %v3626
        %v3845 = vsel %vm3843, %v3836, %v3628
        %v3846 = vsel %vm3843, %v3837, %v3630
        %v3847 = vsel %vm3843, %v3838, %v3632
        %v3848 = vsel %vm3843, %v3839, %v3634
        %v3849 = vsel %vm3843, %v3840, %v3636
        %v3850 = vsel %vm3843, %v3841, %v3638
        %v3851 = vsel %vm3843, %v3842, %v3640
        %vm3852 = vcmask 424960
        %v3853 = vsel %vm3852, %v3844, %v3658
        %v3854 = vsel %vm3852, %v3845, %v3660
        %v3855 = vsel %vm3852, %v3846, %v3662
        %v3856 = vsel %vm3852, %v3847, %v3664
        %v3857 = vsel %vm3852, %v3848, %v3666
        %v3858 = vsel %vm3852, %v3849, %v3668
        %v3859 = vsel %vm3852, %v3850, %v3670
        %v3860 = vsel %vm3852, %v3851, %v3672
        %vm3861 = vcmask 457728
        %v3862 = vsel %vm3861, %v3853, %v3690
        %v3863 = vsel %vm3861, %v3854, %v3692
        %v3864 = vsel %vm3861, %v3855, %v3694
        %v3865 = vsel %vm3861, %v3856, %v3696
        %v3866 = vsel %vm3861, %v3857, %v3698
        %v3867 = vsel %vm3861, %v3858, %v3700
        %v3868 = vsel %vm3861, %v3859, %v3702
        %v3869 = vsel %vm3861, %v3860, %v3704
        %vm3870 = vcmask 490496
        %v3871 = vsel %vm3870, %v3862, %v3722
        %v3872 = vsel %vm3870, %v3863, %v3724
        %v3873 = vsel %vm3870, %v3864, %v3726
        %v3874 = vsel %vm3870, %v3865, %v3728
        %v3875 = vsel %vm3870, %v3866, %v3730
        %v3876 = vsel %vm3870, %v3867, %v3732
        %v3877 = vsel %vm3870, %v3868, %v3734
        %v3878 = vsel %vm3870, %v3869, %v3736
        %vm3879 = vcmask 523264
        %3880 = vst.msk [vmem:[%s239] sm:$0xff] %vm3879, %v3871
        %3881 = vst.msk [vmem:[%s239 + $0x8] sm:$0xff] %vm3879, %v3872
        %3882 = vst.msk [vmem:[%s239 + $0x10] sm:$0xff] %vm3879, %v3873
        %3883 = vst.msk [vmem:[%s239 + $0x18] sm:$0xff] %vm3879, %v3874
        %3884 = vst.msk [vmem:[%s239 + $0x20] sm:$0xff] %vm3879, %v3875
        %3885 = vst.msk [vmem:[%s239 + $0x28] sm:$0xff] %vm3879, %v3876
        %3886 = vst.msk [vmem:[%s239 + $0x30] sm:$0xff] %vm3879, %v3877
        %3887 = vst.msk [vmem:[%s239 + $0x38] sm:$0xff] %vm3879, %v3878
        %s3888 = sand.u32 %s116, 1
        %s3889 = scalar_lea.sflag [#allocation4], %s3888
        %s3890 = sand.u32 %s116, 1
        %s3891 = smul.addr %s3890, 64
        %s3892 = scalar_lea.vmem [#allocation8], %s3891
        // Predicated region
        $region45: #{split_with_overlapping.1} parent=31 // pred_check
          %p3893 = pneg %p126
        $region46: #{split_with_overlapping.1} parent=31 // pred_check_branch
          %3895 = sbr.rel (%p3893) target = $region48
        $region47: #{split_with_overlapping.1} parent=31 // pred_region
          %s3896 = smul.u32 8, %s26
          %s3898 = ssub.s32 1024, 1024
          %3899 = vsyncadd %s3889, %s3898
          %s3900 = smul.addr %s25, 8
          %s3901 = sadd.s32 %s3896, %s3900
          %s3902 = smul.addr %s3901, 128
          %s3903 = scalar_lea.hbm %s3, %s3902
          %s3904 = sshll.u32 %s3892, 4
          %s3905 = int_to_ptr.vmem [resolvable:$true] %s3904
          %3910 = dma.vmem_to_hbm [thread:$0]  %s3905, 1024, %s3903, %s3889, 128, 128, 8
        $region48: #{split_with_overlapping.1} parent=31 // pred_fallthru
          _
      $region32: #{split_with_overlapping.1} parent=5 // pred_fallthru
        _
      %p3911 = scmp.le.s32.totalorder 2, %s16
      // Predicated region
      $region49: #{split_with_overlapping.1} parent=5 // pred_check
        %p3912 = pneg %p3911
      $region50: #{split_with_overlapping.1} parent=5 // pred_check_branch
        %3914 = sbr.rel (%p3912) target = $region52
      $region51: #{split_with_overlapping.1} parent=5 // pred_region
        %s3915 = ssub.s32 %s16, 2
        // Predicated region
        $region53: #{split_with_overlapping.1} parent=51 // pred_check
          %p3916 = pneg %p132
        $region54: #{split_with_overlapping.1} parent=51 // pred_check_branch
          %3918 = sbr.rel (%p3916) target = $region56
        $region55: #{split_with_overlapping.1} parent=51 // pred_region
          %s3919 = sand.u32 %s117, 1
          %s3920 = scalar_lea.sflag [#allocation4], %s3919
          %s3921 = sand.u32 %s117, 1
          %s3922 = smul.addr %s3921, 64
          %s3923 = scalar_lea.vmem [#allocation8], %s3922
          %3924 = dma.done %s3920, 1024
        $region56: #{split_with_overlapping.1} parent=51 // pred_fallthru
          _
      $region52: #{split_with_overlapping.1} parent=5 // pred_fallthru
        _
    $region6: #{split_with_overlapping.1} parent=1 // loop_footer
      %s20 = sadd.s32 1, %s16
    $region7: #{split_with_overlapping.1} parent=1 // loop_footer_branch
      %15 = sbr.rel target = $region3
    $region8: #{split_with_overlapping.1} parent=1 // loop_exit
      _
    %3925 = vsyncpa [#allocation3], 1
    %s3926 = scalar_lea.sflag [#allocation3], 1
    %3927 = vsyncpa %s3926, 1
    %3928 = vsyncpa [#allocation6], 1
    %3929 = vsyncpa [#allocation4], 1
    %s3930 = scalar_lea.sflag [#allocation4], 1
    %3931 = vsyncpa %s3930, 1

</llo_original>
